<compile_context>
chip_gen: v7x
topology: tpu7x:2x2x1
jax: 0.10.0
libtpu: 0.0.40
codegen_flags: <defaults>
</compile_context>

<pallas_src>
import functools

import numpy as np
import jax
import jax.numpy as jnp
from jax import lax
from jax.experimental import pallas as pl
from jax.experimental.pallas import tpu as pltpu

# ---- module hyperparameters (from DriveNeuralNetworkWithMemory.__init__) ----
DIM_ACC_LAYER_1 = 16
DIM_ACC_LAYER_2 = 16
DIM_STEER_LAYER_1_HEAD = 32
DIM_STEER_LAYER_1_TAIL = 16
DIM_STEER_LAYER_2 = 8
HIDDEN_LAYER_SIZES = (32, 16)
HIDDEN_LAYER_LSTM = 64

# stand-ins for drive_functions.* constants (deterministic, defined in-script)
ACC_QUEUE_SIZE = 15
STEER_QUEUE_SIZE = 15
STEER_QUEUE_SIZE_CORE = 15
ACC_NORMALIZE = 0.1
STEER_NORMALIZE = 2.0
VEL_NORMALIZE = 0.1

ACC_INPUT_INDEX = np.concatenate(([1], np.arange(ACC_QUEUE_SIZE) + 3))
STEER_INPUT_INDEX = np.concatenate(
    ([2], np.arange(STEER_QUEUE_SIZE_CORE) + ACC_QUEUE_SIZE + 3))
STEER_INPUT_INDEX_FULL = np.arange(STEER_QUEUE_SIZE) + ACC_QUEUE_SIZE + 3
INPUT_DIM = 3 + ACC_QUEUE_SIZE + STEER_QUEUE_SIZE          # 33
LSTM_IN = 1 + DIM_ACC_LAYER_2 + DIM_STEER_LAYER_2          # 25

LAYER1_DIM = DIM_ACC_LAYER_1 + DIM_STEER_LAYER_1_HEAD + DIM_STEER_LAYER_1_TAIL  # 64
AS2_DIM = DIM_ACC_LAYER_2 + DIM_STEER_LAYER_2              # 24 = [acc2|steer2]
HIDDEN_PAD = 128            # LSTM hidden (64) padded to one full vreg lane width
GATE_ORDER = (0, 1, 3, 2)   # PyTorch [i, f, g, o] -> kernel [i, f, o, g]


def _drive_nn_kernel(
    x_ref,
    w1_ref, b1_ref, w2_ref, b2_ref,
    w_velg_ref, w_asg_ref, w_hh_ref, b_g_ref,
    w_vell1_ref, w_asl1_ref, b_l1_ref,
    w_l2lstm_ref, w_l2stk_ref, b_l2_ref,
    w_finpre_ref, w_finas_ref, b_fin_ref,
    out_ref,
    xflat_scr, as2_scr, gates_scr, lstm_scr,
    *, batch, seq_len, bp):
  f32 = jnp.float32
  dot = lambda a, w: jnp.dot(a, w, preferred_element_type=f32)
  relu = lambda v: jnp.maximum(v, 0.0)
  HP = HIDDEN_PAD
  B, T, Bp = batch, seq_len, bp

  # ---- batch-major (B*T, 33) -> time-major padded (T*Bp, 33) VMEM slab ----
  # One-time single-row copies; replaces the wrapper-side transpose/pad/reshape
  # XLA fusions around the kernel.
  xflat_scr[...] = jnp.zeros(xflat_scr.shape, xflat_scr.dtype)  # padded rows = 0
  for b in range(B):
    for t in range(T):
      src = b * T + t
      dst = t * Bp + b
      xflat_scr[dst:dst + 1, :] = x_ref[src:src + 1, :]

  x = xflat_scr[...]                                   # (T*Bp, 33)
  vel = VEL_NORMALIZE * x[:, 0:1]                      # (T*Bp, 1)

  # ---- fused feed-forward (gathers / normalization folded into weights) ----
  layer1 = relu(dot(x, w1_ref[...]) + b1_ref[...])     # (T*Bp, 64) = [acc1|sh1|st1]
  as2 = relu(dot(layer1, w2_ref[...]) + b2_ref[...])   # (T*Bp, 24) = [acc2|steer2]
  as2_scr[...] = as2        # parked in VMEM; reloaded after the recurrence

  # LSTM input projection hoisted out of the recurrence.  Gate order is
  # [i, f, o, g], each gate padded to 128 lanes.  vel contribution is rank-1
  # -> broadcast-multiply on the VPU instead of a (33, 512) matmul.
  gates_scr[...] = (dot(as2, w_asg_ref[...]) + vel * w_velg_ref[...]
                    + b_g_ref[...])                    # (T*Bp, 512)

  # ---- LSTM recurrence (batch_first, zero initial state) -------------------
  # Padded-lane invariant: lanes >= 64 of h/c stay exactly 0 because padded
  # gate weights/biases are 0 => i=f=o=sigmoid(0)=0.5, g=tanh(0)=0
  # => c_pad = 0.5*c_pad + 0.5*0 = 0, h_pad = 0.5*tanh(0) = 0.
  # Keep the padded lanes of the LSTM weights/biases at exactly zero.
  #
  # t = 0 peeled: h0 = c0 = 0, so the h @ W_hh matmul is dead at the first step.
  g0 = gates_scr[0:Bp, :]
  sig0 = jax.nn.sigmoid(g0[:, :3 * HP])                # [i | f | o] in one call
  c = sig0[:, 0:HP] * jnp.tanh(g0[:, 3 * HP:])         # i * g
  h = sig0[:, 2 * HP:3 * HP] * jnp.tanh(c)             # o * tanh(c)
  lstm_scr[0:Bp, :] = h

  # TODO(synk): if T ever grows past ~16, switch this static unroll to
  # lax.fori_loop with pl.ds(pl.multiple_of(t*Bp, 8), Bp) indexing so vreg
  # pressure stays flat.
  for t in range(1, T):
    # w_hh_ref is read inside the dot each step: streamed from VMEM rather
    # than held in 64 vregs across the unrolled loop.
    g = gates_scr[t * Bp:(t + 1) * Bp, :] + dot(h, w_hh_ref[...])
    sig = jax.nn.sigmoid(g[:, :3 * HP])                # [i | f | o] in one call
    gg = jnp.tanh(g[:, 3 * HP:])
    c = sig[:, HP:2 * HP] * c + sig[:, 0:HP] * gg
    h = sig[:, 2 * HP:3 * HP] * jnp.tanh(c)
    lstm_scr[t * Bp:(t + 1) * Bp, :] = h

  # ---- head (all concats replaced by split / fused weights) ---------------
  as2 = as2_scr[...]
  vel = VEL_NORMALIZE * xflat_scr[:, 0:1]
  stack1 = relu(dot(as2, w_asl1_ref[...]) + vel * w_vell1_ref[...]
                + b_l1_ref[...])                                   # (T*Bp, 32)
  pre2 = relu(dot(lstm_scr[...], w_l2lstm_ref[...])
              + dot(stack1, w_l2stk_ref[...]) + b_l2_ref[...])     # (T*Bp, 16)
  out_tm = (dot(pre2, w_finpre_ref[...]) + dot(as2, w_finas_ref[...])
            + b_fin_ref[...])                                      # (T*Bp, 6)

  # ---- scatter time-major rows back into the batch-major (B*T, 6) output --
  for b in range(B):
    for t in range(T):
      dst = b * T + t
      src = t * Bp + b
      out_ref[dst:dst + 1, :] = out_tm[src:src + 1, :]


def prepare_kernel_params(params):
  """One-time offline weight prep: fold gathers/normalization into zero-padded
  weights, fuse the small layers into block weights, lane-pad + reorder the
  LSTM gates to [i, f, o, g], and split every concat-consumer by operand."""
  (w_acc1, b_acc1, w_sh1, b_sh1, w_st1, b_st1, w_acc2, b_acc2, w_st2, b_st2,
   w_ih, w_hh, b_lstm, w_l1, b_l1, w_l2, b_l2, w_fin, b_fin) = params
  f32 = jnp.float32
  H, HP = HIDDEN_LAYER_LSTM, HIDDEN_PAD
  d1a, d1h, d1t = DIM_ACC_LAYER_1, DIM_STEER_LAYER_1_HEAD, DIM_STEER_LAYER_1_TAIL
  d2a = DIM_ACC_LAYER_2

  def pad_gates(w):   # (rows, 4H) -> (rows, 4*HP), reorder [i,f,g,o]->[i,f,o,g]
    wp = jnp.zeros((w.shape[0], 4 * HP), f32)
    for newg, oldg in enumerate(GATE_ORDER):
      wp = wp.at[:, newg * HP:newg * HP + H].set(w[:, oldg * H:(oldg + 1) * H])
    return wp

  # fused layer 1: x(33) -> [acc1|sh1|st1] (64); gathers + normalization folded
  w1_acc = jnp.zeros((INPUT_DIM, d1a), f32).at[ACC_INPUT_INDEX].set(
      ACC_NORMALIZE * w_acc1)
  w1_sh = jnp.zeros((INPUT_DIM, d1h), f32).at[STEER_INPUT_INDEX].set(
      STEER_NORMALIZE * w_sh1)
  w1_st = jnp.zeros((INPUT_DIM, d1t), f32).at[STEER_INPUT_INDEX_FULL].set(
      STEER_NORMALIZE * w_st1)
  w1 = jnp.concatenate([w1_acc, w1_sh, w1_st], axis=1)           # (33, 64)
  b1 = jnp.concatenate([b_acc1, b_sh1, b_st1], axis=1)           # (1, 64)

  # fused block-diagonal layer 2: [acc1|sh1|st1](64) -> [acc2|steer2](24)
  w2 = jnp.zeros((LAYER1_DIM, AS2_DIM), f32)
  w2 = w2.at[:d1a, :d2a].set(w_acc2)
  w2 = w2.at[d1a:, d2a:].set(w_st2)
  b2 = jnp.concatenate([b_acc2, b_st2], axis=1)                  # (1, 24)

  # LSTM: gates lane-padded & reordered; h1 = [vel | acc2 | steer2] split
  w_ih_p = pad_gates(w_ih)                                       # (25, 512)
  w_vel_g = w_ih_p[0:1]                                          # (1, 512)
  w_as_g = w_ih_p[1:]                                            # (24, 512)
  w_hh_p = jnp.zeros((HP, 4 * HP), f32).at[:H].set(pad_gates(w_hh))  # (128, 512)
  b_g = pad_gates(b_lstm)                                        # (1, 512)

  # linear_relu_stack_1: same h1 split
  w_vel_l1 = w_l1[0:1]                                           # (1, 32)
  w_as_l1 = w_l1[1:]                                             # (24, 32)

  # linear_relu_stack_2: split [lstm_out | stack1]; lstm rows padded 64 -> 128
  w_l2lstm = jnp.zeros((HP, HIDDEN_LAYER_SIZES[1]), f32).at[:H].set(w_l2[:H])
  w_l2stk = w_l2[H:]                                             # (32, 16)

  # finalize: split [pre2 | acc2|steer2]
  s0 = HIDDEN_LAYER_SIZES[1]
  w_finpre = w_fin[:s0]                                          # (16, 6)
  w_finas = w_fin[s0:]                                           # (24, 6)

  return (w1, b1, w2, b2,
          w_vel_g, w_as_g, w_hh_p, b_g,
          w_vel_l1, w_as_l1, b_l1,
          w_l2lstm, w_l2stk, b_l2,
          w_finpre, w_finas, b_fin)


def drive_nn_forward(x, kparams):
  """x: (B, T, INPUT_DIM) float32, batch-first (matches the PyTorch module).
  kparams: output of prepare_kernel_params (prepared once, offline)."""
  B, T, D = x.shape
  assert D == INPUT_DIM
  Bp = ((B + 7) // 8) * 8          # batch padded to a sublane multiple
  kernel = functools.partial(_drive_nn_kernel, batch=B, seq_len=T, bp=Bp)

  # TODO(synk): if B grows, add a leading "parallel" batch grid axis so the
  # recurrence shards across v7x's 2 TensorCores; if T*B grows large, tile the
  # feed-forward / gate precompute over T (gates_scr, ~2 KiB per row, is the
  # VMEM scaling term; today's footprint is ~0.2 MiB on every generation).
  out = pl.pallas_call(
      kernel,
      out_shape=jax.ShapeDtypeStruct((B * T, 6), jnp.float32),
      in_specs=[pl.BlockSpec(memory_space=pltpu.MemorySpace.VMEM)]
               * (1 + len(kparams)),
      out_specs=pl.BlockSpec(memory_space=pltpu.MemorySpace.VMEM),
      scratch_shapes=[
          pltpu.VMEM((T * Bp, INPUT_DIM), jnp.float32),        # time-major x
          pltpu.VMEM((T * Bp, AS2_DIM), jnp.float32),          # [acc2|steer2]
          pltpu.VMEM((T * Bp, 4 * HIDDEN_PAD), jnp.float32),   # hoisted gates
          pltpu.VMEM((T * Bp, HIDDEN_PAD), jnp.float32),       # per-step h
      ],
  )(x.reshape(B * T, D), *kparams)
  return out.reshape(B, T, 6)


def init_params(key, randomize=0.01):
  """Deterministic uniform(-randomize, randomize) init (mirrors nn.init.uniform_).
  Linear weights are stored already transposed to (in_features, out_features)."""
  ks = iter(jax.random.split(key, 32))

  def uni(shape):
    return jax.random.uniform(next(ks), shape, jnp.float32,
                              -randomize, randomize)

  H = HIDDEN_LAYER_LSTM
  return [
      uni((len(ACC_INPUT_INDEX), DIM_ACC_LAYER_1)), uni((1, DIM_ACC_LAYER_1)),
      uni((len(STEER_INPUT_INDEX), DIM_STEER_LAYER_1_HEAD)),
      uni((1, DIM_STEER_LAYER_1_HEAD)),
      uni((len(STEER_INPUT_INDEX_FULL), DIM_STEER_LAYER_1_TAIL)),
      uni((1, DIM_STEER_LAYER_1_TAIL)),
      uni((DIM_ACC_LAYER_1, DIM_ACC_LAYER_2)), uni((1, DIM_ACC_LAYER_2)),
      uni((DIM_STEER_LAYER_1_HEAD + DIM_STEER_LAYER_1_TAIL, DIM_STEER_LAYER_2)),
      uni((1, DIM_STEER_LAYER_2)),
      uni((LSTM_IN, 4 * H)),                 # lstm weight_ih (transposed)
      uni((H, 4 * H)),                       # lstm weight_hh (transposed)
      uni((1, 4 * H)) + uni((1, 4 * H)),     # bias_ih + bias_hh combined
      uni((LSTM_IN, HIDDEN_LAYER_SIZES[0])), uni((1, HIDDEN_LAYER_SIZES[0])),
      uni((H + HIDDEN_LAYER_SIZES[0], HIDDEN_LAYER_SIZES[1])),
      uni((1, HIDDEN_LAYER_SIZES[1])),
      uni((HIDDEN_LAYER_SIZES[1] + DIM_ACC_LAYER_2 + DIM_STEER_LAYER_2, 6)),
      uni((1, 6)),
  ]


def reference_forward(x, params):
  """Pure-JAX reference (mirrors the PyTorch forward) for self-checking."""
  (w_acc1, b_acc1, w_sh1, b_sh1, w_st1, b_st1, w_acc2, b_acc2, w_st2, b_st2,
   w_ih, w_hh, b_lstm, w_l1, b_l1, w_l2, b_l2, w_fin, b_fin) = params
  relu = jax.nn.relu
  acc1 = relu(ACC_NORMALIZE * x[:, :, ACC_INPUT_INDEX] @ w_acc1 + b_acc1)
  sh1 = relu(STEER_NORMALIZE * x[:, :, STEER_INPUT_INDEX] @ w_sh1 + b_sh1)
  st1 = relu(STEER_NORMALIZE * x[:, :, STEER_INPUT_INDEX_FULL] @ w_st1 + b_st1)
  steer1 = jnp.concatenate([sh1, st1], axis=2)
  acc2 = relu(acc1 @ w_acc2 + b_acc2)
  steer2 = relu(steer1 @ w_st2 + b_st2)
  h1 = jnp.concatenate([VEL_NORMALIZE * x[:, :, 0:1], acc2, steer2], axis=2)
  H = HIDDEN_LAYER_LSTM
  B = x.shape[0]

  def step(carry, x_t):
    h, c = carry
    gates = x_t @ w_ih + h @ w_hh + b_lstm
    i = jax.nn.sigmoid(gates[:, :H])
    f = jax.nn.sigmoid(gates[:, H:2 * H])
    g = jnp.tanh(gates[:, 2 * H:3 * H])
    o = jax.nn.sigmoid(gates[:, 3 * H:])
    c = f * c + i * g
    h = o * jnp.tanh(c)
    return (h, c), h

  h0 = jnp.zeros((B, H), jnp.float32)
  c0 = jnp.zeros((B, H), jnp.float32)
  _, lstm_seq = lax.scan(step, (h0, c0), jnp.transpose(h1, (1, 0, 2)))
  lstm_out = jnp.transpose(lstm_seq, (1, 0, 2))
  stack1 = relu(h1 @ w_l1 + b_l1)
  pre = jnp.concatenate([lstm_out, stack1], axis=2)
  pre2 = relu(pre @ w_l2 + b_l2)
  return jnp.concatenate([pre2, acc2, steer2], axis=2) @ w_fin + b_fin


if __name__ == "__main__":
  key = jax.random.PRNGKey(0)
  k_x, k_p = jax.random.split(key)
  B, T = 2, 8
  x = jax.random.normal(k_x, (B, T, INPUT_DIM), jnp.float32)
  params = init_params(k_p)
  kparams = prepare_kernel_params(params)   # one-time offline weight prep

  fwd = jax.jit(drive_nn_forward)
  pred = jax.block_until_ready(fwd(x, kparams))
  ref = reference_forward(x, params)
  assert pred.shape == (B, T, 6), pred.shape
  assert jnp.allclose(pred, ref, rtol=1e-3, atol=1e-4), \
      "Pallas kernel output mismatch vs JAX reference"
  print("KERNEL_OK")
</pallas_src>

<mosaic_0001>
module attributes {stable_mosaic.version = 11 : i64} {
  func.func @_drive_nn_kernel(%arg0: memref<16x33xf32, #tpu.memory_space<vmem>>, %arg1: memref<33x64xf32, #tpu.memory_space<vmem>>, %arg2: memref<1x64xf32, #tpu.memory_space<vmem>>, %arg3: memref<64x24xf32, #tpu.memory_space<vmem>>, %arg4: memref<1x24xf32, #tpu.memory_space<vmem>>, %arg5: memref<1x512xf32, #tpu.memory_space<vmem>>, %arg6: memref<24x512xf32, #tpu.memory_space<vmem>>, %arg7: memref<128x512xf32, #tpu.memory_space<vmem>>, %arg8: memref<1x512xf32, #tpu.memory_space<vmem>>, %arg9: memref<1x32xf32, #tpu.memory_space<vmem>>, %arg10: memref<24x32xf32, #tpu.memory_space<vmem>>, %arg11: memref<1x32xf32, #tpu.memory_space<vmem>>, %arg12: memref<128x16xf32, #tpu.memory_space<vmem>>, %arg13: memref<32x16xf32, #tpu.memory_space<vmem>>, %arg14: memref<1x16xf32, #tpu.memory_space<vmem>>, %arg15: memref<16x6xf32, #tpu.memory_space<vmem>>, %arg16: memref<24x6xf32, #tpu.memory_space<vmem>>, %arg17: memref<1x6xf32, #tpu.memory_space<vmem>>, %arg18: memref<16x6xf32, #tpu.memory_space<vmem>>, %arg19: memref<64x33xf32, #tpu.memory_space<vmem>>, %arg20: memref<64x24xf32, #tpu.memory_space<vmem>>, %arg21: memref<64x512xf32, #tpu.memory_space<vmem>>, %arg22: memref<64x128xf32, #tpu.memory_space<vmem>>) attributes {dimension_semantics = [], scalar_prefetch = 0 : i64, scratch_operands = 4 : i64, tpu.core_type = #tpu.core_type<tc>} {
    %cst = arith.constant 0.000000e+00 : f32
    %0 = vector.broadcast %cst : f32 to vector<64x33xf32>
    %c0 = arith.constant 0 : index
    %c0_0 = arith.constant 0 : index
    %1 = vector.load %arg19[%c0, %c0_0] : memref<64x33xf32, #tpu.memory_space<vmem>>, vector<64x33xf32>
    tpu.vector_store %arg19[%c0, %c0_0], %0 {strides = array<i32>} : memref<64x33xf32, #tpu.memory_space<vmem>>, vector<64x33xf32>,
    %c0_1 = arith.constant 0 : index
    %c0_2 = arith.constant 0 : index
    %2 = vector.load %arg0[%c0_1, %c0_2] : memref<16x33xf32, #tpu.memory_space<vmem>>, vector<1x33xf32>
    %c0_3 = arith.constant 0 : index
    %c0_4 = arith.constant 0 : index
    %3 = vector.load %arg19[%c0_3, %c0_4] : memref<64x33xf32, #tpu.memory_space<vmem>>, vector<1x33xf32>
    tpu.vector_store %arg19[%c0_3, %c0_4], %2 {strides = array<i32>} : memref<64x33xf32, #tpu.memory_space<vmem>>, vector<1x33xf32>,
    %c1 = arith.constant 1 : index
    %c0_5 = arith.constant 0 : index
    %4 = vector.load %arg0[%c1, %c0_5] : memref<16x33xf32, #tpu.memory_space<vmem>>, vector<1x33xf32>
    %c8 = arith.constant 8 : index
    %c0_6 = arith.constant 0 : index
    %5 = vector.load %arg19[%c8, %c0_6] : memref<64x33xf32, #tpu.memory_space<vmem>>, vector<1x33xf32>
    tpu.vector_store %arg19[%c8, %c0_6], %4 {strides = array<i32>} : memref<64x33xf32, #tpu.memory_space<vmem>>, vector<1x33xf32>,
    %c2 = arith.constant 2 : index
    %c0_7 = arith.constant 0 : index
    %6 = vector.load %arg0[%c2, %c0_7] : memref<16x33xf32, #tpu.memory_space<vmem>>, vector<1x33xf32>
    %c16 = arith.constant 16 : index
    %c0_8 = arith.constant 0 : index
    %7 = vector.load %arg19[%c16, %c0_8] : memref<64x33xf32, #tpu.memory_space<vmem>>, vector<1x33xf32>
    tpu.vector_store %arg19[%c16, %c0_8], %6 {strides = array<i32>} : memref<64x33xf32, #tpu.memory_space<vmem>>, vector<1x33xf32>,
    %c3 = arith.constant 3 : index
    %c0_9 = arith.constant 0 : index
    %8 = vector.load %arg0[%c3, %c0_9] : memref<16x33xf32, #tpu.memory_space<vmem>>, vector<1x33xf32>
    %c24 = arith.constant 24 : index
    %c0_10 = arith.constant 0 : index
    %9 = vector.load %arg19[%c24, %c0_10] : memref<64x33xf32, #tpu.memory_space<vmem>>, vector<1x33xf32>
    tpu.vector_store %arg19[%c24, %c0_10], %8 {strides = array<i32>} : memref<64x33xf32, #tpu.memory_space<vmem>>, vector<1x33xf32>,
    %c4 = arith.constant 4 : index
    %c0_11 = arith.constant 0 : index
    %10 = vector.load %arg0[%c4, %c0_11] : memref<16x33xf32, #tpu.memory_space<vmem>>, vector<1x33xf32>
    %c32 = arith.constant 32 : index
    %c0_12 = arith.constant 0 : index
    %11 = vector.load %arg19[%c32, %c0_12] : memref<64x33xf32, #tpu.memory_space<vmem>>, vector<1x33xf32>
    tpu.vector_store %arg19[%c32, %c0_12], %10 {strides = array<i32>} : memref<64x33xf32, #tpu.memory_space<vmem>>, vector<1x33xf32>,
    %c5 = arith.constant 5 : index
    %c0_13 = arith.constant 0 : index
    %12 = vector.load %arg0[%c5, %c0_13] : memref<16x33xf32, #tpu.memory_space<vmem>>, vector<1x33xf32>
    %c40 = arith.constant 40 : index
    %c0_14 = arith.constant 0 : index
    %13 = vector.load %arg19[%c40, %c0_14] : memref<64x33xf32, #tpu.memory_space<vmem>>, vector<1x33xf32>
    tpu.vector_store %arg19[%c40, %c0_14], %12 {strides = array<i32>} : memref<64x33xf32, #tpu.memory_space<vmem>>, vector<1x33xf32>,
    %c6 = arith.constant 6 : index
    %c0_15 = arith.constant 0 : index
    %14 = vector.load %arg0[%c6, %c0_15] : memref<16x33xf32, #tpu.memory_space<vmem>>, vector<1x33xf32>
    %c48 = arith.constant 48 : index
    %c0_16 = arith.constant 0 : index
    %15 = vector.load %arg19[%c48, %c0_16] : memref<64x33xf32, #tpu.memory_space<vmem>>, vector<1x33xf32>
    tpu.vector_store %arg19[%c48, %c0_16], %14 {strides = array<i32>} : memref<64x33xf32, #tpu.memory_space<vmem>>, vector<1x33xf32>,
    %c7 = arith.constant 7 : index
    %c0_17 = arith.constant 0 : index
    %16 = vector.load %arg0[%c7, %c0_17] : memref<16x33xf32, #tpu.memory_space<vmem>>, vector<1x33xf32>
    %c56 = arith.constant 56 : index
    %c0_18 = arith.constant 0 : index
    %17 = vector.load %arg19[%c56, %c0_18] : memref<64x33xf32, #tpu.memory_space<vmem>>, vector<1x33xf32>
    tpu.vector_store %arg19[%c56, %c0_18], %16 {strides = array<i32>} : memref<64x33xf32, #tpu.memory_space<vmem>>, vector<1x33xf32>,
    %c8_19 = arith.constant 8 : index
    %c0_20 = arith.constant 0 : index
    %18 = vector.load %arg0[%c8_19, %c0_20] : memref<16x33xf32, #tpu.memory_space<vmem>>, vector<1x33xf32>
    %c1_21 = arith.constant 1 : index
    %c0_22 = arith.constant 0 : index
    %19 = vector.load %arg19[%c1_21, %c0_22] : memref<64x33xf32, #tpu.memory_space<vmem>>, vector<1x33xf32>
    tpu.vector_store %arg19[%c1_21, %c0_22], %18 {strides = array<i32>} : memref<64x33xf32, #tpu.memory_space<vmem>>, vector<1x33xf32>,
    %c9 = arith.constant 9 : index
    %c0_23 = arith.constant 0 : index
    %20 = vector.load %arg0[%c9, %c0_23] : memref<16x33xf32, #tpu.memory_space<vmem>>, vector<1x33xf32>
    %c9_24 = arith.constant 9 : index
    %c0_25 = arith.constant 0 : index
    %21 = vector.load %arg19[%c9_24, %c0_25] : memref<64x33xf32, #tpu.memory_space<vmem>>, vector<1x33xf32>
    tpu.vector_store %arg19[%c9_24, %c0_25], %20 {strides = array<i32>} : memref<64x33xf32, #tpu.memory_space<vmem>>, vector<1x33xf32>,
    %c10 = arith.constant 10 : index
    %c0_26 = arith.constant 0 : index
    %22 = vector.load %arg0[%c10, %c0_26] : memref<16x33xf32, #tpu.memory_space<vmem>>, vector<1x33xf32>
    %c17 = arith.constant 17 : index
    %c0_27 = arith.constant 0 : index
    %23 = vector.load %arg19[%c17, %c0_27] : memref<64x33xf32, #tpu.memory_space<vmem>>, vector<1x33xf32>
    tpu.vector_store %arg19[%c17, %c0_27], %22 {strides = array<i32>} : memref<64x33xf32, #tpu.memory_space<vmem>>, vector<1x33xf32>,
    %c11 = arith.constant 11 : index
    %c0_28 = arith.constant 0 : index
    %24 = vector.load %arg0[%c11, %c0_28] : memref<16x33xf32, #tpu.memory_space<vmem>>, vector<1x33xf32>
    %c25 = arith.constant 25 : index
    %c0_29 = arith.constant 0 : index
    %25 = vector.load %arg19[%c25, %c0_29] : memref<64x33xf32, #tpu.memory_space<vmem>>, vector<1x33xf32>
    tpu.vector_store %arg19[%c25, %c0_29], %24 {strides = array<i32>} : memref<64x33xf32, #tpu.memory_space<vmem>>, vector<1x33xf32>,
    %c12 = arith.constant 12 : index
    %c0_30 = arith.constant 0 : index
    %26 = vector.load %arg0[%c12, %c0_30] : memref<16x33xf32, #tpu.memory_space<vmem>>, vector<1x33xf32>
    %c33 = arith.constant 33 : index
    %c0_31 = arith.constant 0 : index
    %27 = vector.load %arg19[%c33, %c0_31] : memref<64x33xf32, #tpu.memory_space<vmem>>, vector<1x33xf32>
    tpu.vector_store %arg19[%c33, %c0_31], %26 {strides = array<i32>} : memref<64x33xf32, #tpu.memory_space<vmem>>, vector<1x33xf32>,
    %c13 = arith.constant 13 : index
    %c0_32 = arith.constant 0 : index
    %28 = vector.load %arg0[%c13, %c0_32] : memref<16x33xf32, #tpu.memory_space<vmem>>, vector<1x33xf32>
    %c41 = arith.constant 41 : index
    %c0_33 = arith.constant 0 : index
    %29 = vector.load %arg19[%c41, %c0_33] : memref<64x33xf32, #tpu.memory_space<vmem>>, vector<1x33xf32>
    tpu.vector_store %arg19[%c41, %c0_33], %28 {strides = array<i32>} : memref<64x33xf32, #tpu.memory_space<vmem>>, vector<1x33xf32>,
    %c14 = arith.constant 14 : index
    %c0_34 = arith.constant 0 : index
    %30 = vector.load %arg0[%c14, %c0_34] : memref<16x33xf32, #tpu.memory_space<vmem>>, vector<1x33xf32>
    %c49 = arith.constant 49 : index
    %c0_35 = arith.constant 0 : index
    %31 = vector.load %arg19[%c49, %c0_35] : memref<64x33xf32, #tpu.memory_space<vmem>>, vector<1x33xf32>
    tpu.vector_store %arg19[%c49, %c0_35], %30 {strides = array<i32>} : memref<64x33xf32, #tpu.memory_space<vmem>>, vector<1x33xf32>,
    %c15 = arith.constant 15 : index
    %c0_36 = arith.constant 0 : index
    %32 = vector.load %arg0[%c15, %c0_36] : memref<16x33xf32, #tpu.memory_space<vmem>>, vector<1x33xf32>
    %c57 = arith.constant 57 : index
    %c0_37 = arith.constant 0 : index
    %33 = vector.load %arg19[%c57, %c0_37] : memref<64x33xf32, #tpu.memory_space<vmem>>, vector<1x33xf32>
    tpu.vector_store %arg19[%c57, %c0_37], %32 {strides = array<i32>} : memref<64x33xf32, #tpu.memory_space<vmem>>, vector<1x33xf32>,
    %c0_38 = arith.constant 0 : index
    %c0_39 = arith.constant 0 : index
    %34 = vector.load %arg19[%c0_38, %c0_39] : memref<64x33xf32, #tpu.memory_space<vmem>>, vector<64x33xf32>
    %35 = vector.extract_strided_slice %34 {offsets = [0, 0], sizes = [64, 1], strides = [1, 1]} : vector<64x33xf32> to vector<64x1xf32>
    %cst_40 = arith.constant 1.000000e-01 : f32
    %36 = vector.broadcast %cst_40 : f32 to vector<64x1xf32>
    %37 = arith.mulf %36, %35 : vector<64x1xf32>
    %c0_41 = arith.constant 0 : index
    %c0_42 = arith.constant 0 : index
    %38 = vector.load %arg1[%c0_41, %c0_42] : memref<33x64xf32, #tpu.memory_space<vmem>>, vector<33x64xf32>
    %cst_43 = arith.constant dense<0.000000e+00> : vector<64x64xf32>
    %39 = tpu.matmul %34, %38, %cst_43 {dimension_numbers = #tpu.dot_dimension_numbers<[1], [0], [0], [1], [0, 0, 1, 1], [], []>} : vector<64x33xf32>, vector<33x64xf32>, vector<64x64xf32> -> vector<64x64xf32>
    %c0_44 = arith.constant 0 : index
    %c0_45 = arith.constant 0 : index
    %40 = vector.load %arg2[%c0_44, %c0_45] : memref<1x64xf32, #tpu.memory_space<vmem>>, vector<1x64xf32>
    %41 = vector.broadcast %40 : vector<1x64xf32> to vector<64x64xf32>
    %42 = arith.addf %39, %41 : vector<64x64xf32>
    %cst_46 = arith.constant 0.000000e+00 : f32
    %43 = vector.broadcast %cst_46 : f32 to vector<64x64xf32>
    %44 = arith.maximumf %42, %43 : vector<64x64xf32>
    %c0_47 = arith.constant 0 : index
    %c0_48 = arith.constant 0 : index
    %45 = vector.load %arg3[%c0_47, %c0_48] : memref<64x24xf32, #tpu.memory_space<vmem>>, vector<64x24xf32>
    %cst_49 = arith.constant dense<0.000000e+00> : vector<64x24xf32>
    %46 = tpu.matmul %44, %45, %cst_49 {dimension_numbers = #tpu.dot_dimension_numbers<[1], [0], [0], [1], [0, 0, 1, 1], [], []>} : vector<64x64xf32>, vector<64x24xf32>, vector<64x24xf32> -> vector<64x24xf32>
    %c0_50 = arith.constant 0 : index
    %c0_51 = arith.constant 0 : index
    %47 = vector.load %arg4[%c0_50, %c0_51] : memref<1x24xf32, #tpu.memory_space<vmem>>, vector<1x24xf32>
    %48 = vector.broadcast %47 : vector<1x24xf32> to vector<64x24xf32>
    %49 = arith.addf %46, %48 : vector<64x24xf32>
    %cst_52 = arith.constant 0.000000e+00 : f32
    %50 = vector.broadcast %cst_52 : f32 to vector<64x24xf32>
    %51 = arith.maximumf %49, %50 : vector<64x24xf32>
    %c0_53 = arith.constant 0 : index
    %c0_54 = arith.constant 0 : index
    %52 = vector.load %arg20[%c0_53, %c0_54] : memref<64x24xf32, #tpu.memory_space<vmem>>, vector<64x24xf32>
    tpu.vector_store %arg20[%c0_53, %c0_54], %51 {strides = array<i32>} : memref<64x24xf32, #tpu.memory_space<vmem>>, vector<64x24xf32>,
    %c0_55 = arith.constant 0 : index
    %c0_56 = arith.constant 0 : index
    %53 = vector.load %arg6[%c0_55, %c0_56] : memref<24x512xf32, #tpu.memory_space<vmem>>, vector<24x512xf32>
    %cst_57 = arith.constant dense<0.000000e+00> : vector<64x512xf32>
    %54 = tpu.matmul %51, %53, %cst_57 {dimension_numbers = #tpu.dot_dimension_numbers<[1], [0], [0], [1], [0, 0, 1, 1], [], []>} : vector<64x24xf32>, vector<24x512xf32>, vector<64x512xf32> -> vector<64x512xf32>
    %c0_58 = arith.constant 0 : index
    %c0_59 = arith.constant 0 : index
    %55 = vector.load %arg5[%c0_58, %c0_59] : memref<1x512xf32, #tpu.memory_space<vmem>>, vector<1x512xf32>
    %56 = vector.broadcast %37 : vector<64x1xf32> to vector<64x512xf32>
    %57 = vector.broadcast %55 : vector<1x512xf32> to vector<64x512xf32>
    %58 = arith.mulf %56, %57 : vector<64x512xf32>
    %59 = arith.addf %54, %58 : vector<64x512xf32>
    %c0_60 = arith.constant 0 : index
    %c0_61 = arith.constant 0 : index
    %60 = vector.load %arg8[%c0_60, %c0_61] : memref<1x512xf32, #tpu.memory_space<vmem>>, vector<1x512xf32>
    %61 = vector.broadcast %60 : vector<1x512xf32> to vector<64x512xf32>
    %62 = arith.addf %59, %61 : vector<64x512xf32>
    %c0_62 = arith.constant 0 : index
    %c0_63 = arith.constant 0 : index
    %63 = vector.load %arg21[%c0_62, %c0_63] : memref<64x512xf32, #tpu.memory_space<vmem>>, vector<64x512xf32>
    tpu.vector_store %arg21[%c0_62, %c0_63], %62 {strides = array<i32>} : memref<64x512xf32, #tpu.memory_space<vmem>>, vector<64x512xf32>,
    %c0_64 = arith.constant 0 : index
    %c0_65 = arith.constant 0 : index
    %64 = vector.load %arg21[%c0_64, %c0_65] : memref<64x512xf32, #tpu.memory_space<vmem>>, vector<8x512xf32>
    %65 = vector.extract_strided_slice %64 {offsets = [0, 0], sizes = [8, 384], strides = [1, 1]} : vector<8x512xf32> to vector<8x384xf32>
    %66 = arith.negf %65 : vector<8x384xf32>
    %67 = math.exp %66 : vector<8x384xf32>
    %cst_66 = arith.constant 1.000000e+00 : f32
    %68 = vector.broadcast %cst_66 : f32 to vector<8x384xf32>
    %69 = arith.addf %68, %67 : vector<8x384xf32>
    %70 = arith.divf %68, %69 : vector<8x384xf32>
    %71 = vector.extract_strided_slice %70 {offsets = [0, 0], sizes = [8, 128], strides = [1, 1]} : vector<8x384xf32> to vector<8x128xf32>
    %72 = vector.extract_strided_slice %64 {offsets = [0, 384], sizes = [8, 128], strides = [1, 1]} : vector<8x512xf32> to vector<8x128xf32>
    %73 = math.tanh %72 : vector<8x128xf32>
    %74 = arith.mulf %71, %73 : vector<8x128xf32>
    %75 = vector.extract_strided_slice %70 {offsets = [0, 256], sizes = [8, 128], strides = [1, 1]} : vector<8x384xf32> to vector<8x128xf32>
    %76 = math.tanh %74 : vector<8x128xf32>
    %77 = arith.mulf %75, %76 : vector<8x128xf32>
    %c0_67 = arith.constant 0 : index
    %c0_68 = arith.constant 0 : index
    %78 = vector.load %arg22[%c0_67, %c0_68] : memref<64x128xf32, #tpu.memory_space<vmem>>, vector<8x128xf32>
    tpu.vector_store %arg22[%c0_67, %c0_68], %77 {strides = array<i32>} : memref<64x128xf32, #tpu.memory_space<vmem>>, vector<8x128xf32>,
    %c8_69 = arith.constant 8 : index
    %c0_70 = arith.constant 0 : index
    %79 = vector.load %arg21[%c8_69, %c0_70] : memref<64x512xf32, #tpu.memory_space<vmem>>, vector<8x512xf32>
    %c0_71 = arith.constant 0 : index
    %c0_72 = arith.constant 0 : index
    %80 = vector.load %arg7[%c0_71, %c0_72] : memref<128x512xf32, #tpu.memory_space<vmem>>, vector<128x512xf32>
    %cst_73 = arith.constant dense<0.000000e+00> : vector<8x512xf32>
    %81 = tpu.matmul %77, %80, %cst_73 {dimension_numbers = #tpu.dot_dimension_numbers<[1], [0], [0], [1], [0, 0, 1, 1], [], []>} : vector<8x128xf32>, vector<128x512xf32>, vector<8x512xf32> -> vector<8x512xf32>
    %82 = arith.addf %79, %81 : vector<8x512xf32>
    %83 = vector.extract_strided_slice %82 {offsets = [0, 0], sizes = [8, 384], strides = [1, 1]} : vector<8x512xf32> to vector<8x384xf32>
    %84 = arith.negf %83 : vector<8x384xf32>
    %85 = math.exp %84 : vector<8x384xf32>
    %cst_74 = arith.constant 1.000000e+00 : f32
    %86 = vector.broadcast %cst_74 : f32 to vector<8x384xf32>
    %87 = arith.addf %86, %85 : vector<8x384xf32>
    %88 = arith.divf %86, %87 : vector<8x384xf32>
    %89 = vector.extract_strided_slice %82 {offsets = [0, 384], sizes = [8, 128], strides = [1, 1]} : vector<8x512xf32> to vector<8x128xf32>
    %90 = math.tanh %89 : vector<8x128xf32>
    %91 = vector.extract_strided_slice %88 {offsets = [0, 128], sizes = [8, 128], strides = [1, 1]} : vector<8x384xf32> to vector<8x128xf32>
    %92 = arith.mulf %91, %74 : vector<8x128xf32>
    %93 = vector.extract_strided_slice %88 {offsets = [0, 0], sizes = [8, 128], strides = [1, 1]} : vector<8x384xf32> to vector<8x128xf32>
    %94 = arith.mulf %93, %90 : vector<8x128xf32>
    %95 = arith.addf %92, %94 : vector<8x128xf32>
    %96 = vector.extract_strided_slice %88 {offsets = [0, 256], sizes = [8, 128], strides = [1, 1]} : vector<8x384xf32> to vector<8x128xf32>
    %97 = math.tanh %95 : vector<8x128xf32>
    %98 = arith.mulf %96, %97 : vector<8x128xf32>
    %c8_75 = arith.constant 8 : index
    %c0_76 = arith.constant 0 : index
    %99 = vector.load %arg22[%c8_75, %c0_76] : memref<64x128xf32, #tpu.memory_space<vmem>>, vector<8x128xf32>
    tpu.vector_store %arg22[%c8_75, %c0_76], %98 {strides = array<i32>} : memref<64x128xf32, #tpu.memory_space<vmem>>, vector<8x128xf32>,
    %c16_77 = arith.constant 16 : index
    %c0_78 = arith.constant 0 : index
    %100 = vector.load %arg21[%c16_77, %c0_78] : memref<64x512xf32, #tpu.memory_space<vmem>>, vector<8x512xf32>
    %c0_79 = arith.constant 0 : index
    %c0_80 = arith.constant 0 : index
    %101 = vector.load %arg7[%c0_79, %c0_80] : memref<128x512xf32, #tpu.memory_space<vmem>>, vector<128x512xf32>
    %cst_81 = arith.constant dense<0.000000e+00> : vector<8x512xf32>
    %102 = tpu.matmul %98, %101, %cst_81 {dimension_numbers = #tpu.dot_dimension_numbers<[1], [0], [0], [1], [0, 0, 1, 1], [], []>} : vector<8x128xf32>, vector<128x512xf32>, vector<8x512xf32> -> vector<8x512xf32>
    %103 = arith.addf %100, %102 : vector<8x512xf32>
    %104 = vector.extract_strided_slice %103 {offsets = [0, 0], sizes = [8, 384], strides = [1, 1]} : vector<8x512xf32> to vector<8x384xf32>
    %105 = arith.negf %104 : vector<8x384xf32>
    %106 = math.exp %105 : vector<8x384xf32>
    %cst_82 = arith.constant 1.000000e+00 : f32
    %107 = vector.broadcast %cst_82 : f32 to vector<8x384xf32>
    %108 = arith.addf %107, %106 : vector<8x384xf32>
    %109 = arith.divf %107, %108 : vector<8x384xf32>
    %110 = vector.extract_strided_slice %103 {offsets = [0, 384], sizes = [8, 128], strides = [1, 1]} : vector<8x512xf32> to vector<8x128xf32>
    %111 = math.tanh %110 : vector<8x128xf32>
    %112 = vector.extract_strided_slice %109 {offsets = [0, 128], sizes = [8, 128], strides = [1, 1]} : vector<8x384xf32> to vector<8x128xf32>
    %113 = arith.mulf %112, %95 : vector<8x128xf32>
    %114 = vector.extract_strided_slice %109 {offsets = [0, 0], sizes = [8, 128], strides = [1, 1]} : vector<8x384xf32> to vector<8x128xf32>
    %115 = arith.mulf %114, %111 : vector<8x128xf32>
    %116 = arith.addf %113, %115 : vector<8x128xf32>
    %117 = vector.extract_strided_slice %109 {offsets = [0, 256], sizes = [8, 128], strides = [1, 1]} : vector<8x384xf32> to vector<8x128xf32>
    %118 = math.tanh %116 : vector<8x128xf32>
    %119 = arith.mulf %117, %118 : vector<8x128xf32>
    %c16_83 = arith.constant 16 : index
    %c0_84 = arith.constant 0 : index
    %120 = vector.load %arg22[%c16_83, %c0_84] : memref<64x128xf32, #tpu.memory_space<vmem>>, vector<8x128xf32>
    tpu.vector_store %arg22[%c16_83, %c0_84], %119 {strides = array<i32>} : memref<64x128xf32, #tpu.memory_space<vmem>>, vector<8x128xf32>,
    %c24_85 = arith.constant 24 : index
    %c0_86 = arith.constant 0 : index
    %121 = vector.load %arg21[%c24_85, %c0_86] : memref<64x512xf32, #tpu.memory_space<vmem>>, vector<8x512xf32>
    %c0_87 = arith.constant 0 : index
    %c0_88 = arith.constant 0 : index
    %122 = vector.load %arg7[%c0_87, %c0_88] : memref<128x512xf32, #tpu.memory_space<vmem>>, vector<128x512xf32>
    %cst_89 = arith.constant dense<0.000000e+00> : vector<8x512xf32>
    %123 = tpu.matmul %119, %122, %cst_89 {dimension_numbers = #tpu.dot_dimension_numbers<[1], [0], [0], [1], [0, 0, 1, 1], [], []>} : vector<8x128xf32>, vector<128x512xf32>, vector<8x512xf32> -> vector<8x512xf32>
    %124 = arith.addf %121, %123 : vector<8x512xf32>
    %125 = vector.extract_strided_slice %124 {offsets = [0, 0], sizes = [8, 384], strides = [1, 1]} : vector<8x512xf32> to vector<8x384xf32>
    %126 = arith.negf %125 : vector<8x384xf32>
    %127 = math.exp %126 : vector<8x384xf32>
    %cst_90 = arith.constant 1.000000e+00 : f32
    %128 = vector.broadcast %cst_90 : f32 to vector<8x384xf32>
    %129 = arith.addf %128, %127 : vector<8x384xf32>
    %130 = arith.divf %128, %129 : vector<8x384xf32>
    %131 = vector.extract_strided_slice %124 {offsets = [0, 384], sizes = [8, 128], strides = [1, 1]} : vector<8x512xf32> to vector<8x128xf32>
    %132 = math.tanh %131 : vector<8x128xf32>
    %133 = vector.extract_strided_slice %130 {offsets = [0, 128], sizes = [8, 128], strides = [1, 1]} : vector<8x384xf32> to vector<8x128xf32>
    %134 = arith.mulf %133, %116 : vector<8x128xf32>
    %135 = vector.extract_strided_slice %130 {offsets = [0, 0], sizes = [8, 128], strides = [1, 1]} : vector<8x384xf32> to vector<8x128xf32>
    %136 = arith.mulf %135, %132 : vector<8x128xf32>
    %137 = arith.addf %134, %136 : vector<8x128xf32>
    %138 = vector.extract_strided_slice %130 {offsets = [0, 256], sizes = [8, 128], strides = [1, 1]} : vector<8x384xf32> to vector<8x128xf32>
    %139 = math.tanh %137 : vector<8x128xf32>
    %140 = arith.mulf %138, %139 : vector<8x128xf32>
    %c24_91 = arith.constant 24 : index
    %c0_92 = arith.constant 0 : index
    %141 = vector.load %arg22[%c24_91, %c0_92] : memref<64x128xf32, #tpu.memory_space<vmem>>, vector<8x128xf32>
    tpu.vector_store %arg22[%c24_91, %c0_92], %140 {strides = array<i32>} : memref<64x128xf32, #tpu.memory_space<vmem>>, vector<8x128xf32>,
    %c32_93 = arith.constant 32 : index
    %c0_94 = arith.constant 0 : index
    %142 = vector.load %arg21[%c32_93, %c0_94] : memref<64x512xf32, #tpu.memory_space<vmem>>, vector<8x512xf32>
    %c0_95 = arith.constant 0 : index
    %c0_96 = arith.constant 0 : index
    %143 = vector.load %arg7[%c0_95, %c0_96] : memref<128x512xf32, #tpu.memory_space<vmem>>, vector<128x512xf32>
    %cst_97 = arith.constant dense<0.000000e+00> : vector<8x512xf32>
    %144 = tpu.matmul %140, %143, %cst_97 {dimension_numbers = #tpu.dot_dimension_numbers<[1], [0], [0], [1], [0, 0, 1, 1], [], []>} : vector<8x128xf32>, vector<128x512xf32>, vector<8x512xf32> -> vector<8x512xf32>
    %145 = arith.addf %142, %144 : vector<8x512xf32>
    %146 = vector.extract_strided_slice %145 {offsets = [0, 0], sizes = [8, 384], strides = [1, 1]} : vector<8x512xf32> to vector<8x384xf32>
    %147 = arith.negf %146 : vector<8x384xf32>
    %148 = math.exp %147 : vector<8x384xf32>
    %cst_98 = arith.constant 1.000000e+00 : f32
    %149 = vector.broadcast %cst_98 : f32 to vector<8x384xf32>
    %150 = arith.addf %149, %148 : vector<8x384xf32>
    %151 = arith.divf %149, %150 : vector<8x384xf32>
    %152 = vector.extract_strided_slice %145 {offsets = [0, 384], sizes = [8, 128], strides = [1, 1]} : vector<8x512xf32> to vector<8x128xf32>
    %153 = math.tanh %152 : vector<8x128xf32>
    %154 = vector.extract_strided_slice %151 {offsets = [0, 128], sizes = [8, 128], strides = [1, 1]} : vector<8x384xf32> to vector<8x128xf32>
    %155 = arith.mulf %154, %137 : vector<8x128xf32>
    %156 = vector.extract_strided_slice %151 {offsets = [0, 0], sizes = [8, 128], strides = [1, 1]} : vector<8x384xf32> to vector<8x128xf32>
    %157 = arith.mulf %156, %153 : vector<8x128xf32>
    %158 = arith.addf %155, %157 : vector<8x128xf32>
    %159 = vector.extract_strided_slice %151 {offsets = [0, 256], sizes = [8, 128], strides = [1, 1]} : vector<8x384xf32> to vector<8x128xf32>
    %160 = math.tanh %158 : vector<8x128xf32>
    %161 = arith.mulf %159, %160 : vector<8x128xf32>
    %c32_99 = arith.constant 32 : index
    %c0_100 = arith.constant 0 : index
    %162 = vector.load %arg22[%c32_99, %c0_100] : memref<64x128xf32, #tpu.memory_space<vmem>>, vector<8x128xf32>
    tpu.vector_store %arg22[%c32_99, %c0_100], %161 {strides = array<i32>} : memref<64x128xf32, #tpu.memory_space<vmem>>, vector<8x128xf32>,
    %c40_101 = arith.constant 40 : index
    %c0_102 = arith.constant 0 : index
    %163 = vector.load %arg21[%c40_101, %c0_102] : memref<64x512xf32, #tpu.memory_space<vmem>>, vector<8x512xf32>
    %c0_103 = arith.constant 0 : index
    %c0_104 = arith.constant 0 : index
    %164 = vector.load %arg7[%c0_103, %c0_104] : memref<128x512xf32, #tpu.memory_space<vmem>>, vector<128x512xf32>
    %cst_105 = arith.constant dense<0.000000e+00> : vector<8x512xf32>
    %165 = tpu.matmul %161, %164, %cst_105 {dimension_numbers = #tpu.dot_dimension_numbers<[1], [0], [0], [1], [0, 0, 1, 1], [], []>} : vector<8x128xf32>, vector<128x512xf32>, vector<8x512xf32> -> vector<8x512xf32>
    %166 = arith.addf %163, %165 : vector<8x512xf32>
    %167 = vector.extract_strided_slice %166 {offsets = [0, 0], sizes = [8, 384], strides = [1, 1]} : vector<8x512xf32> to vector<8x384xf32>
    %168 = arith.negf %167 : vector<8x384xf32>
    %169 = math.exp %168 : vector<8x384xf32>
    %cst_106 = arith.constant 1.000000e+00 : f32
    %170 = vector.broadcast %cst_106 : f32 to vector<8x384xf32>
    %171 = arith.addf %170, %169 : vector<8x384xf32>
    %172 = arith.divf %170, %171 : vector<8x384xf32>
    %173 = vector.extract_strided_slice %166 {offsets = [0, 384], sizes = [8, 128], strides = [1, 1]} : vector<8x512xf32> to vector<8x128xf32>
    %174 = math.tanh %173 : vector<8x128xf32>
    %175 = vector.extract_strided_slice %172 {offsets = [0, 128], sizes = [8, 128], strides = [1, 1]} : vector<8x384xf32> to vector<8x128xf32>
    %176 = arith.mulf %175, %158 : vector<8x128xf32>
    %177 = vector.extract_strided_slice %172 {offsets = [0, 0], sizes = [8, 128], strides = [1, 1]} : vector<8x384xf32> to vector<8x128xf32>
    %178 = arith.mulf %177, %174 : vector<8x128xf32>
    %179 = arith.addf %176, %178 : vector<8x128xf32>
    %180 = vector.extract_strided_slice %172 {offsets = [0, 256], sizes = [8, 128], strides = [1, 1]} : vector<8x384xf32> to vector<8x128xf32>
    %181 = math.tanh %179 : vector<8x128xf32>
    %182 = arith.mulf %180, %181 : vector<8x128xf32>
    %c40_107 = arith.constant 40 : index
    %c0_108 = arith.constant 0 : index
    %183 = vector.load %arg22[%c40_107, %c0_108] : memref<64x128xf32, #tpu.memory_space<vmem>>, vector<8x128xf32>
    tpu.vector_store %arg22[%c40_107, %c0_108], %182 {strides = array<i32>} : memref<64x128xf32, #tpu.memory_space<vmem>>, vector<8x128xf32>,
    %c48_109 = arith.constant 48 : index
    %c0_110 = arith.constant 0 : index
    %184 = vector.load %arg21[%c48_109, %c0_110] : memref<64x512xf32, #tpu.memory_space<vmem>>, vector<8x512xf32>
    %c0_111 = arith.constant 0 : index
    %c0_112 = arith.constant 0 : index
    %185 = vector.load %arg7[%c0_111, %c0_112] : memref<128x512xf32, #tpu.memory_space<vmem>>, vector<128x512xf32>
    %cst_113 = arith.constant dense<0.000000e+00> : vector<8x512xf32>
    %186 = tpu.matmul %182, %185, %cst_113 {dimension_numbers = #tpu.dot_dimension_numbers<[1], [0], [0], [1], [0, 0, 1, 1], [], []>} : vector<8x128xf32>, vector<128x512xf32>, vector<8x512xf32> -> vector<8x512xf32>
    %187 = arith.addf %184, %186 : vector<8x512xf32>
    %188 = vector.extract_strided_slice %187 {offsets = [0, 0], sizes = [8, 384], strides = [1, 1]} : vector<8x512xf32> to vector<8x384xf32>
    %189 = arith.negf %188 : vector<8x384xf32>
    %190 = math.exp %189 : vector<8x384xf32>
    %cst_114 = arith.constant 1.000000e+00 : f32
    %191 = vector.broadcast %cst_114 : f32 to vector<8x384xf32>
    %192 = arith.addf %191, %190 : vector<8x384xf32>
    %193 = arith.divf %191, %192 : vector<8x384xf32>
    %194 = vector.extract_strided_slice %187 {offsets = [0, 384], sizes = [8, 128], strides = [1, 1]} : vector<8x512xf32> to vector<8x128xf32>
    %195 = math.tanh %194 : vector<8x128xf32>
    %196 = vector.extract_strided_slice %193 {offsets = [0, 128], sizes = [8, 128], strides = [1, 1]} : vector<8x384xf32> to vector<8x128xf32>
    %197 = arith.mulf %196, %179 : vector<8x128xf32>
    %198 = vector.extract_strided_slice %193 {offsets = [0, 0], sizes = [8, 128], strides = [1, 1]} : vector<8x384xf32> to vector<8x128xf32>
    %199 = arith.mulf %198, %195 : vector<8x128xf32>
    %200 = arith.addf %197, %199 : vector<8x128xf32>
    %201 = vector.extract_strided_slice %193 {offsets = [0, 256], sizes = [8, 128], strides = [1, 1]} : vector<8x384xf32> to vector<8x128xf32>
    %202 = math.tanh %200 : vector<8x128xf32>
    %203 = arith.mulf %201, %202 : vector<8x128xf32>
    %c48_115 = arith.constant 48 : index
    %c0_116 = arith.constant 0 : index
    %204 = vector.load %arg22[%c48_115, %c0_116] : memref<64x128xf32, #tpu.memory_space<vmem>>, vector<8x128xf32>
    tpu.vector_store %arg22[%c48_115, %c0_116], %203 {strides = array<i32>} : memref<64x128xf32, #tpu.memory_space<vmem>>, vector<8x128xf32>,
    %c56_117 = arith.constant 56 : index
    %c0_118 = arith.constant 0 : index
    %205 = vector.load %arg21[%c56_117, %c0_118] : memref<64x512xf32, #tpu.memory_space<vmem>>, vector<8x512xf32>
    %c0_119 = arith.constant 0 : index
    %c0_120 = arith.constant 0 : index
    %206 = vector.load %arg7[%c0_119, %c0_120] : memref<128x512xf32, #tpu.memory_space<vmem>>, vector<128x512xf32>
    %cst_121 = arith.constant dense<0.000000e+00> : vector<8x512xf32>
    %207 = tpu.matmul %203, %206, %cst_121 {dimension_numbers = #tpu.dot_dimension_numbers<[1], [0], [0], [1], [0, 0, 1, 1], [], []>} : vector<8x128xf32>, vector<128x512xf32>, vector<8x512xf32> -> vector<8x512xf32>
    %208 = arith.addf %205, %207 : vector<8x512xf32>
    %209 = vector.extract_strided_slice %208 {offsets = [0, 0], sizes = [8, 384], strides = [1, 1]} : vector<8x512xf32> to vector<8x384xf32>
    %210 = arith.negf %209 : vector<8x384xf32>
    %211 = math.exp %210 : vector<8x384xf32>
    %cst_122 = arith.constant 1.000000e+00 : f32
    %212 = vector.broadcast %cst_122 : f32 to vector<8x384xf32>
    %213 = arith.addf %212, %211 : vector<8x384xf32>
    %214 = arith.divf %212, %213 : vector<8x384xf32>
    %215 = vector.extract_strided_slice %208 {offsets = [0, 384], sizes = [8, 128], strides = [1, 1]} : vector<8x512xf32> to vector<8x128xf32>
    %216 = math.tanh %215 : vector<8x128xf32>
    %217 = vector.extract_strided_slice %214 {offsets = [0, 128], sizes = [8, 128], strides = [1, 1]} : vector<8x384xf32> to vector<8x128xf32>
    %218 = arith.mulf %217, %200 : vector<8x128xf32>
    %219 = vector.extract_strided_slice %214 {offsets = [0, 0], sizes = [8, 128], strides = [1, 1]} : vector<8x384xf32> to vector<8x128xf32>
    %220 = arith.mulf %219, %216 : vector<8x128xf32>
    %221 = arith.addf %218, %220 : vector<8x128xf32>
    %222 = vector.extract_strided_slice %214 {offsets = [0, 256], sizes = [8, 128], strides = [1, 1]} : vector<8x384xf32> to vector<8x128xf32>
    %223 = math.tanh %221 : vector<8x128xf32>
    %224 = arith.mulf %222, %223 : vector<8x128xf32>
    %c56_123 = arith.constant 56 : index
    %c0_124 = arith.constant 0 : index
    %225 = vector.load %arg22[%c56_123, %c0_124] : memref<64x128xf32, #tpu.memory_space<vmem>>, vector<8x128xf32>
    tpu.vector_store %arg22[%c56_123, %c0_124], %224 {strides = array<i32>} : memref<64x128xf32, #tpu.memory_space<vmem>>, vector<8x128xf32>,
    %c0_125 = arith.constant 0 : index
    %c0_126 = arith.constant 0 : index
    %226 = vector.load %arg20[%c0_125, %c0_126] : memref<64x24xf32, #tpu.memory_space<vmem>>, vector<64x24xf32>
    %c0_127 = arith.constant 0 : index
    %c0_128 = arith.constant 0 : index
    %227 = vector.load %arg19[%c0_127, %c0_128] : memref<64x33xf32, #tpu.memory_space<vmem>>, vector<64x1xf32>
    %cst_129 = arith.constant 1.000000e-01 : f32
    %228 = vector.broadcast %cst_129 : f32 to vector<64x1xf32>
    %229 = arith.mulf %228, %227 : vector<64x1xf32>
    %c0_130 = arith.constant 0 : index
    %c0_131 = arith.constant 0 : index
    %230 = vector.load %arg10[%c0_130, %c0_131] : memref<24x32xf32, #tpu.memory_space<vmem>>, vector<24x32xf32>
    %cst_132 = arith.constant dense<0.000000e+00> : vector<64x32xf32>
    %231 = tpu.matmul %226, %230, %cst_132 {dimension_numbers = #tpu.dot_dimension_numbers<[1], [0], [0], [1], [0, 0, 1, 1], [], []>} : vector<64x24xf32>, vector<24x32xf32>, vector<64x32xf32> -> vector<64x32xf32>
    %c0_133 = arith.constant 0 : index
    %c0_134 = arith.constant 0 : index
    %232 = vector.load %arg9[%c0_133, %c0_134] : memref<1x32xf32, #tpu.memory_space<vmem>>, vector<1x32xf32>
    %233 = vector.broadcast %229 : vector<64x1xf32> to vector<64x32xf32>
    %234 = vector.broadcast %232 : vector<1x32xf32> to vector<64x32xf32>
    %235 = arith.mulf %233, %234 : vector<64x32xf32>
    %236 = arith.addf %231, %235 : vector<64x32xf32>
    %c0_135 = arith.constant 0 : index
    %c0_136 = arith.constant 0 : index
    %237 = vector.load %arg11[%c0_135, %c0_136] : memref<1x32xf32, #tpu.memory_space<vmem>>, vector<1x32xf32>
    %238 = vector.broadcast %237 : vector<1x32xf32> to vector<64x32xf32>
    %239 = arith.addf %236, %238 : vector<64x32xf32>
    %cst_137 = arith.constant 0.000000e+00 : f32
    %240 = vector.broadcast %cst_137 : f32 to vector<64x32xf32>
    %241 = arith.maximumf %239, %240 : vector<64x32xf32>
    %c0_138 = arith.constant 0 : index
    %c0_139 = arith.constant 0 : index
    %242 = vector.load %arg22[%c0_138, %c0_139] : memref<64x128xf32, #tpu.memory_space<vmem>>, vector<64x128xf32>
    %c0_140 = arith.constant 0 : index
    %c0_141 = arith.constant 0 : index
    %243 = vector.load %arg12[%c0_140, %c0_141] : memref<128x16xf32, #tpu.memory_space<vmem>>, vector<128x16xf32>
    %cst_142 = arith.constant dense<0.000000e+00> : vector<64x16xf32>
    %244 = tpu.matmul %242, %243, %cst_142 {dimension_numbers = #tpu.dot_dimension_numbers<[1], [0], [0], [1], [0, 0, 1, 1], [], []>} : vector<64x128xf32>, vector<128x16xf32>, vector<64x16xf32> -> vector<64x16xf32>
    %c0_143 = arith.constant 0 : index
    %c0_144 = arith.constant 0 : index
    %245 = vector.load %arg13[%c0_143, %c0_144] : memref<32x16xf32, #tpu.memory_space<vmem>>, vector<32x16xf32>
    %cst_145 = arith.constant dense<0.000000e+00> : vector<64x16xf32>
    %246 = tpu.matmul %241, %245, %cst_145 {dimension_numbers = #tpu.dot_dimension_numbers<[1], [0], [0], [1], [0, 0, 1, 1], [], []>} : vector<64x32xf32>, vector<32x16xf32>, vector<64x16xf32> -> vector<64x16xf32>
    %247 = arith.addf %244, %246 : vector<64x16xf32>
    %c0_146 = arith.constant 0 : index
    %c0_147 = arith.constant 0 : index
    %248 = vector.load %arg14[%c0_146, %c0_147] : memref<1x16xf32, #tpu.memory_space<vmem>>, vector<1x16xf32>
    %249 = vector.broadcast %248 : vector<1x16xf32> to vector<64x16xf32>
    %250 = arith.addf %247, %249 : vector<64x16xf32>
    %cst_148 = arith.constant 0.000000e+00 : f32
    %251 = vector.broadcast %cst_148 : f32 to vector<64x16xf32>
    %252 = arith.maximumf %250, %251 : vector<64x16xf32>
    %c0_149 = arith.constant 0 : index
    %c0_150 = arith.constant 0 : index
    %253 = vector.load %arg15[%c0_149, %c0_150] : memref<16x6xf32, #tpu.memory_space<vmem>>, vector<16x6xf32>
    %cst_151 = arith.constant dense<0.000000e+00> : vector<64x6xf32>
    %254 = tpu.matmul %252, %253, %cst_151 {dimension_numbers = #tpu.dot_dimension_numbers<[1], [0], [0], [1], [0, 0, 1, 1], [], []>} : vector<64x16xf32>, vector<16x6xf32>, vector<64x6xf32> -> vector<64x6xf32>
    %c0_152 = arith.constant 0 : index
    %c0_153 = arith.constant 0 : index
    %255 = vector.load %arg16[%c0_152, %c0_153] : memref<24x6xf32, #tpu.memory_space<vmem>>, vector<24x6xf32>
    %cst_154 = arith.constant dense<0.000000e+00> : vector<64x6xf32>
    %256 = tpu.matmul %226, %255, %cst_154 {dimension_numbers = #tpu.dot_dimension_numbers<[1], [0], [0], [1], [0, 0, 1, 1], [], []>} : vector<64x24xf32>, vector<24x6xf32>, vector<64x6xf32> -> vector<64x6xf32>
    %257 = arith.addf %254, %256 : vector<64x6xf32>
    %c0_155 = arith.constant 0 : index
    %c0_156 = arith.constant 0 : index
    %258 = vector.load %arg17[%c0_155, %c0_156] : memref<1x6xf32, #tpu.memory_space<vmem>>, vector<1x6xf32>
    %259 = vector.broadcast %258 : vector<1x6xf32> to vector<64x6xf32>
    %260 = arith.addf %257, %259 : vector<64x6xf32>
    %261 = vector.extract_strided_slice %260 {offsets = [0, 0], sizes = [1, 6], strides = [1, 1]} : vector<64x6xf32> to vector<1x6xf32>
    %c0_157 = arith.constant 0 : index
    %c0_158 = arith.constant 0 : index
    %262 = vector.load %arg18[%c0_157, %c0_158] : memref<16x6xf32, #tpu.memory_space<vmem>>, vector<1x6xf32>
    tpu.vector_store %arg18[%c0_157, %c0_158], %261 {strides = array<i32>} : memref<16x6xf32, #tpu.memory_space<vmem>>, vector<1x6xf32>,
    %263 = vector.extract_strided_slice %260 {offsets = [8, 0], sizes = [1, 6], strides = [1, 1]} : vector<64x6xf32> to vector<1x6xf32>
    %c1_159 = arith.constant 1 : index
    %c0_160 = arith.constant 0 : index
    %264 = vector.load %arg18[%c1_159, %c0_160] : memref<16x6xf32, #tpu.memory_space<vmem>>, vector<1x6xf32>
    tpu.vector_store %arg18[%c1_159, %c0_160], %263 {strides = array<i32>} : memref<16x6xf32, #tpu.memory_space<vmem>>, vector<1x6xf32>,
    %265 = vector.extract_strided_slice %260 {offsets = [16, 0], sizes = [1, 6], strides = [1, 1]} : vector<64x6xf32> to vector<1x6xf32>
    %c2_161 = arith.constant 2 : index
    %c0_162 = arith.constant 0 : index
    %266 = vector.load %arg18[%c2_161, %c0_162] : memref<16x6xf32, #tpu.memory_space<vmem>>, vector<1x6xf32>
    tpu.vector_store %arg18[%c2_161, %c0_162], %265 {strides = array<i32>} : memref<16x6xf32, #tpu.memory_space<vmem>>, vector<1x6xf32>,
    %267 = vector.extract_strided_slice %260 {offsets = [24, 0], sizes = [1, 6], strides = [1, 1]} : vector<64x6xf32> to vector<1x6xf32>
    %c3_163 = arith.constant 3 : index
    %c0_164 = arith.constant 0 : index
    %268 = vector.load %arg18[%c3_163, %c0_164] : memref<16x6xf32, #tpu.memory_space<vmem>>, vector<1x6xf32>
    tpu.vector_store %arg18[%c3_163, %c0_164], %267 {strides = array<i32>} : memref<16x6xf32, #tpu.memory_space<vmem>>, vector<1x6xf32>,
    %269 = vector.extract_strided_slice %260 {offsets = [32, 0], sizes = [1, 6], strides = [1, 1]} : vector<64x6xf32> to vector<1x6xf32>
    %c4_165 = arith.constant 4 : index
    %c0_166 = arith.constant 0 : index
    %270 = vector.load %arg18[%c4_165, %c0_166] : memref<16x6xf32, #tpu.memory_space<vmem>>, vector<1x6xf32>
    tpu.vector_store %arg18[%c4_165, %c0_166], %269 {strides = array<i32>} : memref<16x6xf32, #tpu.memory_space<vmem>>, vector<1x6xf32>,
    %271 = vector.extract_strided_slice %260 {offsets = [40, 0], sizes = [1, 6], strides = [1, 1]} : vector<64x6xf32> to vector<1x6xf32>
    %c5_167 = arith.constant 5 : index
    %c0_168 = arith.constant 0 : index
    %272 = vector.load %arg18[%c5_167, %c0_168] : memref<16x6xf32, #tpu.memory_space<vmem>>, vector<1x6xf32>
    tpu.vector_store %arg18[%c5_167, %c0_168], %271 {strides = array<i32>} : memref<16x6xf32, #tpu.memory_space<vmem>>, vector<1x6xf32>,
    %273 = vector.extract_strided_slice %260 {offsets = [48, 0], sizes = [1, 6], strides = [1, 1]} : vector<64x6xf32> to vector<1x6xf32>
    %c6_169 = arith.constant 6 : index
    %c0_170 = arith.constant 0 : index
    %274 = vector.load %arg18[%c6_169, %c0_170] : memref<16x6xf32, #tpu.memory_space<vmem>>, vector<1x6xf32>
    tpu.vector_store %arg18[%c6_169, %c0_170], %273 {strides = array<i32>} : memref<16x6xf32, #tpu.memory_space<vmem>>, vector<1x6xf32>,
    %275 = vector.extract_strided_slice %260 {offsets = [56, 0], sizes = [1, 6], strides = [1, 1]} : vector<64x6xf32> to vector<1x6xf32>
    %c7_171 = arith.constant 7 : index
    %c0_172 = arith.constant 0 : index
    %276 = vector.load %arg18[%c7_171, %c0_172] : memref<16x6xf32, #tpu.memory_space<vmem>>, vector<1x6xf32>
    tpu.vector_store %arg18[%c7_171, %c0_172], %275 {strides = array<i32>} : memref<16x6xf32, #tpu.memory_space<vmem>>, vector<1x6xf32>,
    %277 = vector.extract_strided_slice %260 {offsets = [1, 0], sizes = [1, 6], strides = [1, 1]} : vector<64x6xf32> to vector<1x6xf32>
    %c8_173 = arith.constant 8 : index
    %c0_174 = arith.constant 0 : index
    %278 = vector.load %arg18[%c8_173, %c0_174] : memref<16x6xf32, #tpu.memory_space<vmem>>, vector<1x6xf32>
    tpu.vector_store %arg18[%c8_173, %c0_174], %277 {strides = array<i32>} : memref<16x6xf32, #tpu.memory_space<vmem>>, vector<1x6xf32>,
    %279 = vector.extract_strided_slice %260 {offsets = [9, 0], sizes = [1, 6], strides = [1, 1]} : vector<64x6xf32> to vector<1x6xf32>
    %c9_175 = arith.constant 9 : index
    %c0_176 = arith.constant 0 : index
    %280 = vector.load %arg18[%c9_175, %c0_176] : memref<16x6xf32, #tpu.memory_space<vmem>>, vector<1x6xf32>
    tpu.vector_store %arg18[%c9_175, %c0_176], %279 {strides = array<i32>} : memref<16x6xf32, #tpu.memory_space<vmem>>, vector<1x6xf32>,
    %281 = vector.extract_strided_slice %260 {offsets = [17, 0], sizes = [1, 6], strides = [1, 1]} : vector<64x6xf32> to vector<1x6xf32>
    %c10_177 = arith.constant 10 : index
    %c0_178 = arith.constant 0 : index
    %282 = vector.load %arg18[%c10_177, %c0_178] : memref<16x6xf32, #tpu.memory_space<vmem>>, vector<1x6xf32>
    tpu.vector_store %arg18[%c10_177, %c0_178], %281 {strides = array<i32>} : memref<16x6xf32, #tpu.memory_space<vmem>>, vector<1x6xf32>,
    %283 = vector.extract_strided_slice %260 {offsets = [25, 0], sizes = [1, 6], strides = [1, 1]} : vector<64x6xf32> to vector<1x6xf32>
    %c11_179 = arith.constant 11 : index
    %c0_180 = arith.constant 0 : index
    %284 = vector.load %arg18[%c11_179, %c0_180] : memref<16x6xf32, #tpu.memory_space<vmem>>, vector<1x6xf32>
    tpu.vector_store %arg18[%c11_179, %c0_180], %283 {strides = array<i32>} : memref<16x6xf32, #tpu.memory_space<vmem>>, vector<1x6xf32>,
    %285 = vector.extract_strided_slice %260 {offsets = [33, 0], sizes = [1, 6], strides = [1, 1]} : vector<64x6xf32> to vector<1x6xf32>
    %c12_181 = arith.constant 12 : index
    %c0_182 = arith.constant 0 : index
    %286 = vector.load %arg18[%c12_181, %c0_182] : memref<16x6xf32, #tpu.memory_space<vmem>>, vector<1x6xf32>
    tpu.vector_store %arg18[%c12_181, %c0_182], %285 {strides = array<i32>} : memref<16x6xf32, #tpu.memory_space<vmem>>, vector<1x6xf32>,
    %287 = vector.extract_strided_slice %260 {offsets = [41, 0], sizes = [1, 6], strides = [1, 1]} : vector<64x6xf32> to vector<1x6xf32>
    %c13_183 = arith.constant 13 : index
    %c0_184 = arith.constant 0 : index
    %288 = vector.load %arg18[%c13_183, %c0_184] : memref<16x6xf32, #tpu.memory_space<vmem>>, vector<1x6xf32>
    tpu.vector_store %arg18[%c13_183, %c0_184], %287 {strides = array<i32>} : memref<16x6xf32, #tpu.memory_space<vmem>>, vector<1x6xf32>,
    %289 = vector.extract_strided_slice %260 {offsets = [49, 0], sizes = [1, 6], strides = [1, 1]} : vector<64x6xf32> to vector<1x6xf32>
    %c14_185 = arith.constant 14 : index
    %c0_186 = arith.constant 0 : index
    %290 = vector.load %arg18[%c14_185, %c0_186] : memref<16x6xf32, #tpu.memory_space<vmem>>, vector<1x6xf32>
    tpu.vector_store %arg18[%c14_185, %c0_186], %289 {strides = array<i32>} : memref<16x6xf32, #tpu.memory_space<vmem>>, vector<1x6xf32>,
    %291 = vector.extract_strided_slice %260 {offsets = [57, 0], sizes = [1, 6], strides = [1, 1]} : vector<64x6xf32> to vector<1x6xf32>
    %c15_187 = arith.constant 15 : index
    %c0_188 = arith.constant 0 : index
    %292 = vector.load %arg18[%c15_187, %c0_188] : memref<16x6xf32, #tpu.memory_space<vmem>>, vector<1x6xf32>
    tpu.vector_store %arg18[%c15_187, %c0_188], %291 {strides = array<i32>} : memref<16x6xf32, #tpu.memory_space<vmem>>, vector<1x6xf32>,
    return
  }
}

</mosaic_0001>

<llo_original>
// kernel: drive_nn_forward.1
$region0: #{drive_nn_forward.1}
  #allocation0 [shape = 'u32[]', space=smem, size = 0x4, offset = 0x4, fixed_abs, tag = 'smem constant byte address 0x4 - core index']
  #allocation1 [shape = 'u32[144,128]{1,0:T(1,128)}', space=vmem, size = 0x12000, scoped, tag = 'internal scratch']
  #allocation2 [shape = 'f32[64,33]{1,0:T(8,128)}', space=vmem, size = 0x8000, scoped, tag = 'scratch operand']
  #allocation3 [shape = 'f32[64,24]{1,0:T(8,128)}', space=vmem, size = 0x8000, scoped, tag = 'scratch operand']
  #allocation4 [shape = 'f32[64,512]{1,0:T(8,128)}', space=vmem, size = 0x20000, scoped, tag = 'scratch operand']
  #allocation5 [shape = 'f32[64,128]{1,0:T(8,128)}', space=vmem, size = 0x8000, scoped, tag = 'scratch operand']
  %s0 = inlined_call_operand.vmem [shape: f32[16,33], index: 0, kind: input, shape index: {}]
  %s1 = inlined_call_operand.vmem [shape: f32[33,64], index: 1, kind: input, shape index: {}]
  %s2 = inlined_call_operand.vmem [shape: f32[1,64], index: 2, kind: input, shape index: {}]
  %s3 = inlined_call_operand.vmem [shape: f32[64,24], index: 3, kind: input, shape index: {}]
  %s4 = inlined_call_operand.vmem [shape: f32[1,24], index: 4, kind: input, shape index: {}]
  %s5 = inlined_call_operand.vmem [shape: f32[1,512], index: 5, kind: input, shape index: {}]
  %s6 = inlined_call_operand.vmem [shape: f32[24,512], index: 6, kind: input, shape index: {}]
  %s7 = inlined_call_operand.hbm [shape: f32[128,512], index: 7, kind: input, shape index: {}]
  %s8 = inlined_call_operand.vmem [shape: f32[1,512], index: 8, kind: input, shape index: {}]
  %s9 = inlined_call_operand.vmem [shape: f32[1,32], index: 9, kind: input, shape index: {}]
  %s10 = inlined_call_operand.vmem [shape: f32[24,32], index: 10, kind: input, shape index: {}]
  %s11 = inlined_call_operand.vmem [shape: f32[1,32], index: 11, kind: input, shape index: {}]
  %s12 = inlined_call_operand.vmem [shape: f32[128,16], index: 12, kind: input, shape index: {}]
  %s13 = inlined_call_operand.vmem [shape: f32[32,16], index: 13, kind: input, shape index: {}]
  %s14 = inlined_call_operand.vmem [shape: f32[1,16], index: 14, kind: input, shape index: {}]
  %s15 = inlined_call_operand.vmem [shape: f32[16,6], index: 15, kind: input, shape index: {}]
  %s16 = inlined_call_operand.vmem [shape: f32[24,6], index: 16, kind: input, shape index: {}]
  %s17 = inlined_call_operand.vmem [shape: f32[1,6], index: 17, kind: input, shape index: {}]
  %s18 = inlined_call_operand.vmem [shape: f32[16,6], index: 18, kind: output, shape index: {}]
  %s19 = sld [smem:[#allocation0]]
  $region86: #{drive_nn_forward.1} parent=0
    _
  %s21 = ssub.s32 1, %s19
  %s22 = scalar_select 0, %s21, %s19
  $region1: #{drive_nn_forward.1} parent=0
    #allocation6 [shape = 'u8[262144]{0}', space=vmem, size = 0x40000, scoped, tag = 'input window, operand 7, single buffered']
    #allocation7 [shape = 's32[1]{0}', space=sflag, size = 0x4, scoped, tag = 'scoped memory for drive_nn_forward.1']
    %23 = vsyncpa [#allocation7], 0
    // Predicated region
    $region2: #{drive_nn_forward.1} parent=1 // pred_check
      _
    $region3: #{drive_nn_forward.1} parent=1 // pred_check_branch
      %25 = sbr.rel (0) target = $region5
    $region4: #{drive_nn_forward.1} parent=1 // pred_region
      _
    $region5: #{drive_nn_forward.1} parent=1 // pred_fallthru
      _
    // Predicated region
    $region6: #{drive_nn_forward.1} parent=1 // pred_check
      _
    $region7: #{drive_nn_forward.1} parent=1 // pred_check_branch
      %27 = sbr.rel (0) target = $region9
    $region8: #{drive_nn_forward.1} parent=1 // pred_region
      _
    $region9: #{drive_nn_forward.1} parent=1 // pred_fallthru
      _
    // Predicated region
    $region10: #{drive_nn_forward.1} parent=1 // pred_check
      _
    $region11: #{drive_nn_forward.1} parent=1 // pred_check_branch
      %29 = sbr.rel (0) target = $region13
    $region12: #{drive_nn_forward.1} parent=1 // pred_region
      _
    $region13: #{drive_nn_forward.1} parent=1 // pred_fallthru
      _
    // Predicated region
    $region14: #{drive_nn_forward.1} parent=1 // pred_check
      _
    $region15: #{drive_nn_forward.1} parent=1 // pred_check_branch
      %31 = sbr.rel (0) target = $region17
    $region16: #{drive_nn_forward.1} parent=1 // pred_region
      _
    $region17: #{drive_nn_forward.1} parent=1 // pred_fallthru
      _
    // Predicated region
    $region18: #{drive_nn_forward.1} parent=1 // pred_check
      _
    $region19: #{drive_nn_forward.1} parent=1 // pred_check_branch
      %33 = sbr.rel (0) target = $region21
    $region20: #{drive_nn_forward.1} parent=1 // pred_region
      _
    $region21: #{drive_nn_forward.1} parent=1 // pred_fallthru
      _
    // Predicated region
    $region22: #{drive_nn_forward.1} parent=1 // pred_check
      _
    $region23: #{drive_nn_forward.1} parent=1 // pred_check_branch
      %35 = sbr.rel (0) target = $region25
    $region24: #{drive_nn_forward.1} parent=1 // pred_region
      _
    $region25: #{drive_nn_forward.1} parent=1 // pred_fallthru
      _
    // Predicated region
    $region26: #{drive_nn_forward.1} parent=1 // pred_check
      _
    $region27: #{drive_nn_forward.1} parent=1 // pred_check_branch
      %37 = sbr.rel (0) target = $region29
    $region28: #{drive_nn_forward.1} parent=1 // pred_region
      _
    $region29: #{drive_nn_forward.1} parent=1 // pred_fallthru
      _
    // Predicated region
    $region30: #{drive_nn_forward.1} parent=1 // pred_check
      _
    $region31: #{drive_nn_forward.1} parent=1 // pred_check_branch
      %39 = sbr.rel (0) target = $region33
    $region32: #{drive_nn_forward.1} parent=1 // pred_region
      %s41 = ssub.s32 8192, 8192
      %42 = vsyncadd [#allocation7], %s41
      %s43 = sshll.u32 [#allocation6], 4
      %s44 = int_to_ptr.vmem [resolvable:$true] %s43
      %49 = dma.hbm_to_vmem [thread:$0]  %s7, 8192, %s44, [#allocation7], 512, 512, 32
    $region33: #{drive_nn_forward.1} parent=1 // pred_fallthru
      _
    // Predicated region
    $region34: #{drive_nn_forward.1} parent=1 // pred_check
      _
    $region35: #{drive_nn_forward.1} parent=1 // pred_check_branch
      %51 = sbr.rel (0) target = $region37
    $region36: #{drive_nn_forward.1} parent=1 // pred_region
      _
    $region37: #{drive_nn_forward.1} parent=1 // pred_fallthru
      _
    // Predicated region
    $region38: #{drive_nn_forward.1} parent=1 // pred_check
      _
    $region39: #{drive_nn_forward.1} parent=1 // pred_check_branch
      %53 = sbr.rel (0) target = $region41
    $region40: #{drive_nn_forward.1} parent=1 // pred_region
      _
    $region41: #{drive_nn_forward.1} parent=1 // pred_fallthru
      _
    // Predicated region
    $region42: #{drive_nn_forward.1} parent=1 // pred_check
      _
    $region43: #{drive_nn_forward.1} parent=1 // pred_check_branch
      %55 = sbr.rel (0) target = $region45
    $region44: #{drive_nn_forward.1} parent=1 // pred_region
      _
    $region45: #{drive_nn_forward.1} parent=1 // pred_fallthru
      _
    // Predicated region
    $region46: #{drive_nn_forward.1} parent=1 // pred_check
      _
    $region47: #{drive_nn_forward.1} parent=1 // pred_check_branch
      %57 = sbr.rel (0) target = $region49
    $region48: #{drive_nn_forward.1} parent=1 // pred_region
      _
    $region49: #{drive_nn_forward.1} parent=1 // pred_fallthru
      _
    // Predicated region
    $region50: #{drive_nn_forward.1} parent=1 // pred_check
      _
    $region51: #{drive_nn_forward.1} parent=1 // pred_check_branch
      %59 = sbr.rel (0) target = $region53
    $region52: #{drive_nn_forward.1} parent=1 // pred_region
      _
    $region53: #{drive_nn_forward.1} parent=1 // pred_fallthru
      _
    // Predicated region
    $region54: #{drive_nn_forward.1} parent=1 // pred_check
      _
    $region55: #{drive_nn_forward.1} parent=1 // pred_check_branch
      %61 = sbr.rel (0) target = $region57
    $region56: #{drive_nn_forward.1} parent=1 // pred_region
      _
    $region57: #{drive_nn_forward.1} parent=1 // pred_fallthru
      _
    // Predicated region
    $region58: #{drive_nn_forward.1} parent=1 // pred_check
      _
    $region59: #{drive_nn_forward.1} parent=1 // pred_check_branch
      %63 = sbr.rel (0) target = $region61
    $region60: #{drive_nn_forward.1} parent=1 // pred_region
      _
    $region61: #{drive_nn_forward.1} parent=1 // pred_fallthru
      _
    // Predicated region
    $region62: #{drive_nn_forward.1} parent=1 // pred_check
      _
    $region63: #{drive_nn_forward.1} parent=1 // pred_check_branch
      %65 = sbr.rel (0) target = $region65
    $region64: #{drive_nn_forward.1} parent=1 // pred_region
      _
    $region65: #{drive_nn_forward.1} parent=1 // pred_fallthru
      _
    // Predicated region
    $region66: #{drive_nn_forward.1} parent=1 // pred_check
      _
    $region67: #{drive_nn_forward.1} parent=1 // pred_check_branch
      %67 = sbr.rel (0) target = $region69
    $region68: #{drive_nn_forward.1} parent=1 // pred_region
      _
    $region69: #{drive_nn_forward.1} parent=1 // pred_fallthru
      _
    // Predicated region
    $region70: #{drive_nn_forward.1} parent=1 // pred_check
      _
    $region71: #{drive_nn_forward.1} parent=1 // pred_check_branch
      %69 = sbr.rel (0) target = $region73
    $region72: #{drive_nn_forward.1} parent=1 // pred_region
      _
    $region73: #{drive_nn_forward.1} parent=1 // pred_fallthru
      _
    // Predicated region
    $region74: #{drive_nn_forward.1} parent=1 // pred_check
      _
    $region75: #{drive_nn_forward.1} parent=1 // pred_check_branch
      %71 = sbr.rel (0) target = $region77
    $region76: #{drive_nn_forward.1} parent=1 // pred_region
      %72 = dma.done [#allocation7], 8192
    $region77: #{drive_nn_forward.1} parent=1 // pred_fallthru
      _
    %vm73 = vcmask 269312
    %74 = vst.msk [vmem:[#allocation2] sm:$0xff] %vm73, 0.0
    %75 = vst.msk [vmem:[#allocation2 + $0x8] sm:$0xff] %vm73, 0.0
    %76 = vst.msk [vmem:[#allocation2 + $0x10] sm:$0xff] %vm73, 0.0
    %77 = vst.msk [vmem:[#allocation2 + $0x18] sm:$0xff] %vm73, 0.0
    %78 = vst.msk [vmem:[#allocation2 + $0x20] sm:$0xff] %vm73, 0.0
    %79 = vst.msk [vmem:[#allocation2 + $0x28] sm:$0xff] %vm73, 0.0
    %80 = vst.msk [vmem:[#allocation2 + $0x30] sm:$0xff] %vm73, 0.0
    %81 = vst.msk [vmem:[#allocation2 + $0x38] sm:$0xff] %vm73, 0.0
    %v82 = vld [vmem:[%s0] sm:$0x1]
    %vm83 = vcmask 262144
    %84 = vst.msk [vmem:[#allocation2] sm:$0x1] %vm83, %v82
    %v85 = vld [vmem:[%s0 + $0x1] sm:$0x1]
    %86 = vst.msk [vmem:[#allocation2 + $0x8] sm:$0x1] %vm83, %v85
    %v87 = vld [vmem:[%s0 + $0x2] sm:$0x1]
    %88 = vst.msk [vmem:[#allocation2 + $0x10] sm:$0x1] %vm83, %v87
    %v89 = vld [vmem:[%s0 + $0x3] sm:$0x1]
    %90 = vst.msk [vmem:[#allocation2 + $0x18] sm:$0x1] %vm83, %v89
    %v91 = vld [vmem:[%s0 + $0x4] sm:$0x1]
    %92 = vst.msk [vmem:[#allocation2 + $0x20] sm:$0x1] %vm83, %v91
    %v93 = vld [vmem:[%s0 + $0x5] sm:$0x1]
    %94 = vst.msk [vmem:[#allocation2 + $0x28] sm:$0x1] %vm83, %v93
    %v95 = vld [vmem:[%s0 + $0x6] sm:$0x1]
    %96 = vst.msk [vmem:[#allocation2 + $0x30] sm:$0x1] %vm83, %v95
    %v97 = vld [vmem:[%s0 + $0x7] sm:$0x1]
    %98 = vst.msk [vmem:[#allocation2 + $0x38] sm:$0x1] %vm83, %v97
    %v99 = vld [vmem:[%s0 + $0x8] sm:$0x1]
    %100 = vst.msk [vmem:[#allocation2 + $0x1] sm:$0x1] %vm83, %v99
    %v101 = vld [vmem:[%s0 + $0x9] sm:$0x1]
    %102 = vst.msk [vmem:[#allocation2 + $0x9] sm:$0x1] %vm83, %v101
    %v103 = vld [vmem:[%s0 + $0xa] sm:$0x1]
    %104 = vst.msk [vmem:[#allocation2 + $0x11] sm:$0x1] %vm83, %v103
    %v105 = vld [vmem:[%s0 + $0xb] sm:$0x1]
    %106 = vst.msk [vmem:[#allocation2 + $0x19] sm:$0x1] %vm83, %v105
    %v107 = vld [vmem:[%s0 + $0xc] sm:$0x1]
    %108 = vst.msk [vmem:[#allocation2 + $0x21] sm:$0x1] %vm83, %v107
    %v109 = vld [vmem:[%s0 + $0xd] sm:$0x1]
    %110 = vst.msk [vmem:[#allocation2 + $0x29] sm:$0x1] %vm83, %v109
    %v111 = vld [vmem:[%s0 + $0xe] sm:$0x1]
    %112 = vst.msk [vmem:[#allocation2 + $0x31] sm:$0x1] %vm83, %v111
    %v113 = vld [vmem:[%s0 + $0xf] sm:$0x1]
    %114 = vst.msk [vmem:[#allocation2 + $0x39] sm:$0x1] %vm83, %v113
    %v115 = vld [vmem:[#allocation2] sm:$0xff]
    %v116 = vld [vmem:[#allocation2 + $0x8] sm:$0xff]
    %v117 = vld [vmem:[#allocation2 + $0x10] sm:$0xff]
    %v118 = vld [vmem:[#allocation2 + $0x18] sm:$0xff]
    %v119 = vld [vmem:[#allocation2 + $0x20] sm:$0xff]
    %v120 = vld [vmem:[#allocation2 + $0x28] sm:$0xff]
    %v121 = vld [vmem:[#allocation2 + $0x30] sm:$0xff]
    %v122 = vld [vmem:[#allocation2 + $0x38] sm:$0xff]
    %v123 = vmul.f32 %v115, 0.1
    %v124 = vmul.f32 %v116, 0.1
    %v125 = vmul.f32 %v117, 0.1
    %v126 = vmul.f32 %v118, 0.1
    %v127 = vmul.f32 %v119, 0.1
    %v128 = vmul.f32 %v120, 0.1
    %v129 = vmul.f32 %v121, 0.1
    %v130 = vmul.f32 %v122, 0.1
    %v131 = vld [vmem:[%s1] sm:$0xff]
    %v132 = vld [vmem:[%s1 + $0x8] sm:$0xff]
    %v133 = vld [vmem:[%s1 + $0x10] sm:$0xff]
    %v134 = vld [vmem:[%s1 + $0x18] sm:$0xff]
    %v135 = vld [vmem:[%s1 + $0x20] sm:$0x1]
    %v136 = vld [vmem:[%s2] sm:$0x1]
    %v138 = vlaneseq
    %v139 = vshrl.u32 %v138, 7
    %v140 = vsub.s32 0, %v139
    %v141 = vrot.slane %v136, %v140
    %v144 = vsel %vm73, %v115, 0
    %v147 = vsel %vm73, %v116, 0
    %v150 = vsel %vm73, %v117, 0
    %v153 = vsel %vm73, %v118, 0
    %v156 = vsel %vm73, %v119, 0
    %v159 = vsel %vm73, %v120, 0
    %v162 = vsel %vm73, %v121, 0
    %v165 = vsel %vm73, %v122, 0
    %vm167 = vcmask 1040384
    %v169 = vsel %vm167, %v135, 0
    %171 = vmatprep.subr.mxu0 0.0
    %172 = vmatpush1.msra.mxu0 %v131
    %173 = vmatprep.subr.mxu0 0.0
    %174 = vmatpush1.msra.mxu0 %v132
    %175 = vmatprep.subr.mxu0 0.0
    %176 = vmatpush1.msra.mxu0 %v133
    %177 = vmatprep.subr.mxu0 0.0
    %178 = vmatpush1.msra.mxu0 %v134
    %179 = vmatprep.subr.mxu0 0.0
    %180 = vmatpush1.msra.mxu0 %v169
    %181 = vmatprep.subr.mxu0 0.0
    %182 = vmatpush1.msra.mxu0 0.0
    %183 = vmatprep.subr.mxu0 0.0
    %184 = vmatpush1.msra.mxu0 0.0
    %185 = vmatprep.subr.mxu0 0.0
    %186 = vmatpush1.msra.mxu0 0.0
    %187 = vmatprep.subr.mxu0 0.0
    %188 = vmatpush1.msra.mxu0 0.0
    %189 = vmatprep.subr.mxu0 0.0
    %190 = vmatpush1.msra.mxu0 0.0
    %191 = vmatprep.subr.mxu0 0.0
    %192 = vmatpush1.msra.mxu0 0.0
    %193 = vmatprep.subr.mxu0 0.0
    %194 = vmatpush1.msra.mxu0 0.0
    %195 = vmatprep.subr.mxu0 0.0
    %196 = vmatpush1.msra.mxu0 0.0
    %197 = vmatprep.subr.mxu0 0.0
    %198 = vmatpush1.msra.mxu0 0.0
    %199 = vmatprep.subr.mxu0 0.0
    %200 = vmatpush1.msra.mxu0 0.0
    %201 = vmatprep.subr.mxu0 0.0
    %202 = vmatpush1.msra.mxu0 0.0
    %203 = vmatprep.subr.mxu0 0.0
    %204 = vmatpush1.msra.mxu0 0.0
    %205 = vmatprep.subr.mxu0 0.0
    %206 = vmatpush1.msra.mxu0 0.0
    %207 = vmatprep.subr.mxu0 0.0
    %208 = vmatpush1.msra.mxu0 0.0
    %209 = vmatprep.subr.mxu0 0.0
    %210 = vmatpush1.msra.mxu0 0.0
    %211 = vmatprep.subr.mxu0 0.0
    %212 = vmatpush1.msra.mxu0 0.0
    %213 = vmatprep.subr.mxu0 0.0
    %214 = vmatpush1.msra.mxu0 0.0
    %215 = vmatprep.subr.mxu0 0.0
    %216 = vmatpush1.msra.mxu0 0.0
    %217 = vmatprep.subr.mxu0 0.0
    %218 = vmatpush1.msra.mxu0 0.0
    %219 = vmatprep.subr.mxu0 0.0
    %220 = vmatpush1.msra.mxu0 0.0
    %221 = vmatprep.subr.mxu0 0.0
    %222 = vmatpush1.msra.mxu0 0.0
    %223 = vmatprep.subr.mxu0 0.0
    %224 = vmatpush1.msra.mxu0 0.0
    %225 = vmatprep.subr.mxu0 0.0
    %226 = vmatpush1.msra.mxu0 0.0
    %227 = vmatprep.subr.mxu0 0.0
    %228 = vmatpush1.msra.mxu0 0.0
    %229 = vmatprep.subr.mxu0 0.0
    %230 = vmatpush1.msra.mxu0 0.0
    %231 = vmatprep.subr.mxu0 0.0
    %232 = vmatpush1.msra.mxu0 0.0
    %233 = vmatprep.subr.mxu0 0.0
    %234 = vmatpush1.msra.mxu0 0.0
    %235 = vmatprep.mubr.f32.mxu0 0.0
    %236 = vmatmul.mubr.f32.gmra.mrb[0].mxu0 %v144
    %v237 = vpop.f32.mrb[0].mxu0
    %v238 = vadd.f32 %v141, %v237
    %v239 = vpop.f32.mrb[0].mxu0
    %240 = vmatprep.mubr.f32.mxu0 0.0
    %241 = vmatmul.mubr.f32.gmra.mrb[0].mxu0 %v147
    %v242 = vpop.f32.mrb[0].mxu0
    %v243 = vadd.f32 %v141, %v242
    %v244 = vpop.f32.mrb[0].mxu0
    %245 = vmatprep.mubr.f32.mxu0 0.0
    %246 = vmatmul.mubr.f32.gmra.mrb[0].mxu0 %v150
    %v247 = vpop.f32.mrb[0].mxu0
    %v248 = vadd.f32 %v141, %v247
    %v249 = vpop.f32.mrb[0].mxu0
    %250 = vmatprep.mubr.f32.mxu0 0.0
    %251 = vmatmul.mubr.f32.gmra.mrb[0].mxu0 %v153
    %v252 = vpop.f32.mrb[0].mxu0
    %v253 = vadd.f32 %v141, %v252
    %v254 = vpop.f32.mrb[0].mxu0
    %255 = vmatprep.mubr.f32.mxu0 0.0
    %256 = vmatmul.mubr.f32.gmra.mrb[0].mxu0 %v156
    %v257 = vpop.f32.mrb[0].mxu0
    %v258 = vadd.f32 %v141, %v257
    %v259 = vpop.f32.mrb[0].mxu0
    %260 = vmatprep.mubr.f32.mxu0 0.0
    %261 = vmatmul.mubr.f32.gmra.mrb[0].mxu0 %v159
    %v262 = vpop.f32.mrb[0].mxu0
    %v263 = vadd.f32 %v141, %v262
    %v264 = vpop.f32.mrb[0].mxu0
    %265 = vmatprep.mubr.f32.mxu0 0.0
    %266 = vmatmul.mubr.f32.gmra.mrb[0].mxu0 %v162
    %v267 = vpop.f32.mrb[0].mxu0
    %v268 = vadd.f32 %v141, %v267
    %v269 = vpop.f32.mrb[0].mxu0
    %270 = vmatprep.mubr.f32.mxu0 0.0
    %271 = vmatmul.mubr.f32.gmra.mrb[0].mxu0 %v165
    %v272 = vpop.f32.mrb[0].mxu0
    %v273 = vadd.f32 %v141, %v272
    %v274 = vpop.f32.mrb[0].mxu0
    %275 = vdwg.mxu0
    %v276 = vmax.f32 %v238, 0.0
    %v277 = vmax.f32 %v243, 0.0
    %v278 = vmax.f32 %v248, 0.0
    %v279 = vmax.f32 %v253, 0.0
    %v280 = vmax.f32 %v258, 0.0
    %v281 = vmax.f32 %v263, 0.0
    %v282 = vmax.f32 %v268, 0.0
    %v283 = vmax.f32 %v273, 0.0
    %v284 = vld [vmem:[%s3] sm:$0xff]
    %v285 = vld [vmem:[%s3 + $0x8] sm:$0xff]
    %v286 = vld [vmem:[%s3 + $0x10] sm:$0xff]
    %v287 = vld [vmem:[%s3 + $0x18] sm:$0xff]
    %v288 = vld [vmem:[%s3 + $0x20] sm:$0xff]
    %v289 = vld [vmem:[%s3 + $0x28] sm:$0xff]
    %v290 = vld [vmem:[%s3 + $0x30] sm:$0xff]
    %v291 = vld [vmem:[%s3 + $0x38] sm:$0xff]
    %v292 = vld [vmem:[%s4] sm:$0x1]
    %v294 = vlaneseq
    %v295 = vshrl.u32 %v294, 7
    %v296 = vsub.s32 0, %v295
    %v297 = vrot.slane %v292, %v296
    %vm299 = vcmask 523264
    %v301 = vsel %vm299, %v276, 0
    %v304 = vsel %vm299, %v277, 0
    %v307 = vsel %vm299, %v278, 0
    %v310 = vsel %vm299, %v279, 0
    %v313 = vsel %vm299, %v280, 0
    %v316 = vsel %vm299, %v281, 0
    %v319 = vsel %vm299, %v282, 0
    %v322 = vsel %vm299, %v283, 0
    %324 = vmatprep.subr.mxu0 0.0
    %325 = vmatpush1.msra.mxu0 %v284
    %326 = vmatprep.subr.mxu0 0.0
    %327 = vmatpush1.msra.mxu0 %v285
    %328 = vmatprep.subr.mxu0 0.0
    %329 = vmatpush1.msra.mxu0 %v286
    %330 = vmatprep.subr.mxu0 0.0
    %331 = vmatpush1.msra.mxu0 %v287
    %332 = vmatprep.subr.mxu0 0.0
    %333 = vmatpush1.msra.mxu0 %v288
    %334 = vmatprep.subr.mxu0 0.0
    %335 = vmatpush1.msra.mxu0 %v289
    %336 = vmatprep.subr.mxu0 0.0
    %337 = vmatpush1.msra.mxu0 %v290
    %338 = vmatprep.subr.mxu0 0.0
    %339 = vmatpush1.msra.mxu0 %v291
    %340 = vmatprep.subr.mxu0 0.0
    %341 = vmatpush1.msra.mxu0 0.0
    %342 = vmatprep.subr.mxu0 0.0
    %343 = vmatpush1.msra.mxu0 0.0
    %344 = vmatprep.subr.mxu0 0.0
    %345 = vmatpush1.msra.mxu0 0.0
    %346 = vmatprep.subr.mxu0 0.0
    %347 = vmatpush1.msra.mxu0 0.0
    %348 = vmatprep.subr.mxu0 0.0
    %349 = vmatpush1.msra.mxu0 0.0
    %350 = vmatprep.subr.mxu0 0.0
    %351 = vmatpush1.msra.mxu0 0.0
    %352 = vmatprep.subr.mxu0 0.0
    %353 = vmatpush1.msra.mxu0 0.0
    %354 = vmatprep.subr.mxu0 0.0
    %355 = vmatpush1.msra.mxu0 0.0
    %356 = vmatprep.subr.mxu0 0.0
    %357 = vmatpush1.msra.mxu0 0.0
    %358 = vmatprep.subr.mxu0 0.0
    %359 = vmatpush1.msra.mxu0 0.0
    %360 = vmatprep.subr.mxu0 0.0
    %361 = vmatpush1.msra.mxu0 0.0
    %362 = vmatprep.subr.mxu0 0.0
    %363 = vmatpush1.msra.mxu0 0.0
    %364 = vmatprep.subr.mxu0 0.0
    %365 = vmatpush1.msra.mxu0 0.0
    %366 = vmatprep.subr.mxu0 0.0
    %367 = vmatpush1.msra.mxu0 0.0
    %368 = vmatprep.subr.mxu0 0.0
    %369 = vmatpush1.msra.mxu0 0.0
    %370 = vmatprep.subr.mxu0 0.0
    %371 = vmatpush1.msra.mxu0 0.0
    %372 = vmatprep.subr.mxu0 0.0
    %373 = vmatpush1.msra.mxu0 0.0
    %374 = vmatprep.subr.mxu0 0.0
    %375 = vmatpush1.msra.mxu0 0.0
    %376 = vmatprep.subr.mxu0 0.0
    %377 = vmatpush1.msra.mxu0 0.0
    %378 = vmatprep.subr.mxu0 0.0
    %379 = vmatpush1.msra.mxu0 0.0
    %380 = vmatprep.subr.mxu0 0.0
    %381 = vmatpush1.msra.mxu0 0.0
    %382 = vmatprep.subr.mxu0 0.0
    %383 = vmatpush1.msra.mxu0 0.0
    %384 = vmatprep.subr.mxu0 0.0
    %385 = vmatpush1.msra.mxu0 0.0
    %386 = vmatprep.subr.mxu0 0.0
    %387 = vmatpush1.msra.mxu0 0.0
    %388 = vmatprep.mubr.f32.mxu0 0.0
    %389 = vmatmul.mubr.f32.gmra.mrb[0].mxu0 %v301
    %v390 = vpop.f32.mrb[0].mxu0
    %v391 = vadd.f32 %v297, %v390
    %v392 = vpop.f32.mrb[0].mxu0
    %393 = vmatprep.mubr.f32.mxu0 0.0
    %394 = vmatmul.mubr.f32.gmra.mrb[0].mxu0 %v304
    %v395 = vpop.f32.mrb[0].mxu0
    %v396 = vadd.f32 %v297, %v395
    %v397 = vpop.f32.mrb[0].mxu0
    %398 = vmatprep.mubr.f32.mxu0 0.0
    %399 = vmatmul.mubr.f32.gmra.mrb[0].mxu0 %v307
    %v400 = vpop.f32.mrb[0].mxu0
    %v401 = vadd.f32 %v297, %v400
    %v402 = vpop.f32.mrb[0].mxu0
    %403 = vmatprep.mubr.f32.mxu0 0.0
    %404 = vmatmul.mubr.f32.gmra.mrb[0].mxu0 %v310
    %v405 = vpop.f32.mrb[0].mxu0
    %v406 = vadd.f32 %v297, %v405
    %v407 = vpop.f32.mrb[0].mxu0
    %408 = vmatprep.mubr.f32.mxu0 0.0
    %409 = vmatmul.mubr.f32.gmra.mrb[0].mxu0 %v313
    %v410 = vpop.f32.mrb[0].mxu0
    %v411 = vadd.f32 %v297, %v410
    %v412 = vpop.f32.mrb[0].mxu0
    %413 = vmatprep.mubr.f32.mxu0 0.0
    %414 = vmatmul.mubr.f32.gmra.mrb[0].mxu0 %v316
    %v415 = vpop.f32.mrb[0].mxu0
    %v416 = vadd.f32 %v297, %v415
    %v417 = vpop.f32.mrb[0].mxu0
    %418 = vmatprep.mubr.f32.mxu0 0.0
    %419 = vmatmul.mubr.f32.gmra.mrb[0].mxu0 %v319
    %v420 = vpop.f32.mrb[0].mxu0
    %v421 = vadd.f32 %v297, %v420
    %v422 = vpop.f32.mrb[0].mxu0
    %423 = vmatprep.mubr.f32.mxu0 0.0
    %424 = vmatmul.mubr.f32.gmra.mrb[0].mxu0 %v322
    %v425 = vpop.f32.mrb[0].mxu0
    %v426 = vadd.f32 %v297, %v425
    %v427 = vpop.f32.mrb[0].mxu0
    %428 = vdwg.mxu0
    %v429 = vmax.f32 %v391, 0.0
    %v430 = vmax.f32 %v396, 0.0
    %v431 = vmax.f32 %v401, 0.0
    %v432 = vmax.f32 %v406, 0.0
    %v433 = vmax.f32 %v411, 0.0
    %v434 = vmax.f32 %v416, 0.0
    %v435 = vmax.f32 %v421, 0.0
    %v436 = vmax.f32 %v426, 0.0
    %vm437 = vcmask 195584
    %438 = vst.msk [vmem:[#allocation3] sm:$0xff] %vm437, %v429
    %439 = vst.msk [vmem:[#allocation3 + $0x8] sm:$0xff] %vm437, %v430
    %440 = vst.msk [vmem:[#allocation3 + $0x10] sm:$0xff] %vm437, %v431
    %441 = vst.msk [vmem:[#allocation3 + $0x18] sm:$0xff] %vm437, %v432
    %442 = vst.msk [vmem:[#allocation3 + $0x20] sm:$0xff] %vm437, %v433
    %443 = vst.msk [vmem:[#allocation3 + $0x28] sm:$0xff] %vm437, %v434
    %444 = vst.msk [vmem:[#allocation3 + $0x30] sm:$0xff] %vm437, %v435
    %445 = vst.msk [vmem:[#allocation3 + $0x38] sm:$0xff] %vm437, %v436
    %v446 = vld [vmem:[%s6] sm:$0xff]
    %v447 = vld [vmem:[%s6 + $0x8] sm:$0xff]
    %v448 = vld [vmem:[%s6 + $0x10] sm:$0xff]
    %v449 = vld [vmem:[%s6 + $0x18] sm:$0xff]
    %v450 = vld [vmem:[%s6 + $0x20] sm:$0xff]
    %v451 = vld [vmem:[%s6 + $0x28] sm:$0xff]
    %v452 = vld [vmem:[%s6 + $0x30] sm:$0xff]
    %v453 = vld [vmem:[%s6 + $0x38] sm:$0xff]
    %v454 = vld [vmem:[%s6 + $0x40] sm:$0xff]
    %v455 = vld [vmem:[%s6 + $0x48] sm:$0xff]
    %v456 = vld [vmem:[%s6 + $0x50] sm:$0xff]
    %v457 = vld [vmem:[%s6 + $0x58] sm:$0xff]
    %v458 = vld [vmem:[%s5] sm:$0xf]
    %460 = vset.pattern.permute.xlu0 0
    %461 = vperm.xlu0 %460, %v123
    %v462 = vpop.permute.xlu0 %461
    %465 = vset.pattern.permute.xlu0 0
    %466 = vperm.xlu0 %465, %v124
    %v467 = vpop.permute.xlu0 %466
    %470 = vset.pattern.permute.xlu0 0
    %471 = vperm.xlu0 %470, %v125
    %v472 = vpop.permute.xlu0 %471
    %475 = vset.pattern.permute.xlu0 0
    %476 = vperm.xlu0 %475, %v126
    %v477 = vpop.permute.xlu0 %476
    %480 = vset.pattern.permute.xlu0 0
    %481 = vperm.xlu0 %480, %v127
    %v482 = vpop.permute.xlu0 %481
    %485 = vset.pattern.permute.xlu0 0
    %486 = vperm.xlu0 %485, %v128
    %v487 = vpop.permute.xlu0 %486
    %490 = vset.pattern.permute.xlu0 0
    %491 = vperm.xlu0 %490, %v129
    %v492 = vpop.permute.xlu0 %491
    %495 = vset.pattern.permute.xlu0 0
    %496 = vperm.xlu0 %495, %v130
    %v497 = vpop.permute.xlu0 %496
    %v500 = vlaneseq
    %v501 = vshrl.u32 %v500, 7
    %v502 = vsub.s32 0, %v501
    %v503 = vrot.slane %v458, %v502
    %v504 = vlaneseq
    %v505 = vshrl.u32 %v504, 7
    %v506 = vsub.s32 1, %v505
    %v507 = vrot.slane %v458, %v506
    %v508 = vlaneseq
    %v509 = vshrl.u32 %v508, 7
    %v510 = vsub.s32 2, %v509
    %v511 = vrot.slane %v458, %v510
    %v512 = vlaneseq
    %v513 = vshrl.u32 %v512, 7
    %v514 = vsub.s32 3, %v513
    %v515 = vrot.slane %v458, %v514
    %v520 = vmul.f32 %v462, %v503
    %v521 = vmul.f32 %v462, %v507
    %v522 = vmul.f32 %v462, %v511
    %v523 = vmul.f32 %v462, %v515
    %v524 = vmul.f32 %v467, %v503
    %v525 = vmul.f32 %v467, %v507
    %v526 = vmul.f32 %v467, %v511
    %v527 = vmul.f32 %v467, %v515
    %v528 = vmul.f32 %v472, %v503
    %v529 = vmul.f32 %v472, %v507
    %v530 = vmul.f32 %v472, %v511
    %v531 = vmul.f32 %v472, %v515
    %v532 = vmul.f32 %v477, %v503
    %v533 = vmul.f32 %v477, %v507
    %v534 = vmul.f32 %v477, %v511
    %v535 = vmul.f32 %v477, %v515
    %v536 = vmul.f32 %v482, %v503
    %v537 = vmul.f32 %v482, %v507
    %v538 = vmul.f32 %v482, %v511
    %v539 = vmul.f32 %v482, %v515
    %v540 = vmul.f32 %v487, %v503
    %v541 = vmul.f32 %v487, %v507
    %v542 = vmul.f32 %v487, %v511
    %v543 = vmul.f32 %v487, %v515
    %v544 = vmul.f32 %v492, %v503
    %v545 = vmul.f32 %v492, %v507
    %v546 = vmul.f32 %v492, %v511
    %v547 = vmul.f32 %v492, %v515
    %v548 = vmul.f32 %v497, %v503
    %v549 = vmul.f32 %v497, %v507
    %v550 = vmul.f32 %v497, %v511
    %v551 = vmul.f32 %v497, %v515
    %v553 = vsel %vm437, %v429, 0
    %v556 = vsel %vm437, %v430, 0
    %v559 = vsel %vm437, %v431, 0
    %v562 = vsel %vm437, %v432, 0
    %v565 = vsel %vm437, %v433, 0
    %v568 = vsel %vm437, %v434, 0
    %v571 = vsel %vm437, %v435, 0
    %v574 = vsel %vm437, %v436, 0
    %576 = vmatprep.subr.mxu0 %v447
    %577 = vmatpush1.msra.mxu0 %v446
    %578 = vmatprep.subr.mxu0 %v451
    %579 = vmatpush1.msra.mxu0 %v450
    %580 = vmatprep.subr.mxu0 %v455
    %581 = vmatpush1.msra.mxu0 %v454
    %582 = vmatprep.subr.mxu0 0.0
    %583 = vmatpush1.msra.mxu0 0.0
    %584 = vmatprep.subr.mxu0 0.0
    %585 = vmatpush1.msra.mxu0 0.0
    %586 = vmatprep.subr.mxu0 0.0
    %587 = vmatpush1.msra.mxu0 0.0
    %588 = vmatprep.subr.mxu0 0.0
    %589 = vmatpush1.msra.mxu0 0.0
    %590 = vmatprep.subr.mxu0 0.0
    %591 = vmatpush1.msra.mxu0 0.0
    %592 = vmatprep.subr.mxu0 0.0
    %593 = vmatpush1.msra.mxu0 0.0
    %594 = vmatprep.subr.mxu0 0.0
    %595 = vmatpush1.msra.mxu0 0.0
    %596 = vmatprep.subr.mxu0 0.0
    %597 = vmatpush1.msra.mxu0 0.0
    %598 = vmatprep.subr.mxu0 0.0
    %599 = vmatpush1.msra.mxu0 0.0
    %600 = vmatprep.subr.mxu0 0.0
    %601 = vmatpush1.msra.mxu0 0.0
    %602 = vmatprep.subr.mxu0 0.0
    %603 = vmatpush1.msra.mxu0 0.0
    %604 = vmatprep.subr.mxu0 0.0
    %605 = vmatpush1.msra.mxu0 0.0
    %606 = vmatprep.subr.mxu0 0.0
    %607 = vmatpush1.msra.mxu0 0.0
    %608 = vmatprep.subr.mxu0 0.0
    %609 = vmatpush1.msra.mxu0 0.0
    %610 = vmatprep.subr.mxu0 0.0
    %611 = vmatpush1.msra.mxu0 0.0
    %612 = vmatprep.subr.mxu0 0.0
    %613 = vmatpush1.msra.mxu0 0.0
    %614 = vmatprep.subr.mxu0 0.0
    %615 = vmatpush1.msra.mxu0 0.0
    %616 = vmatprep.subr.mxu0 0.0
    %617 = vmatpush1.msra.mxu0 0.0
    %618 = vmatprep.subr.mxu0 0.0
    %619 = vmatpush1.msra.mxu0 0.0
    %620 = vmatprep.subr.mxu0 0.0
    %621 = vmatpush1.msra.mxu0 0.0
    %622 = vmatprep.subr.mxu0 0.0
    %623 = vmatpush1.msra.mxu0 0.0
    %624 = vmatprep.subr.mxu0 0.0
    %625 = vmatpush1.msra.mxu0 0.0
    %626 = vmatprep.subr.mxu0 0.0
    %627 = vmatpush1.msra.mxu0 0.0
    %628 = vmatprep.subr.mxu0 0.0
    %629 = vmatpush1.msra.mxu0 0.0
    %630 = vmatprep.subr.mxu0 0.0
    %631 = vmatpush1.msra.mxu0 0.0
    %632 = vmatprep.subr.mxu0 0.0
    %633 = vmatpush1.msra.mxu0 0.0
    %634 = vmatprep.subr.mxu0 0.0
    %635 = vmatpush1.msra.mxu0 0.0
    %636 = vmatprep.subr.mxu0 0.0
    %637 = vmatpush1.msra.mxu0 0.0
    %638 = vmatprep.subr.mxu0 0.0
    %639 = vmatpush1.msra.mxu0 0.0
    %640 = vmatprep.mubr.f32.mxu0 0.0
    %641 = vmatmul.mubr.f32.gmra.mrb[0].mxu0 %v553
    %v642 = vpop.f32.mrb[0].mxu0
    %v643 = vadd.f32 %v520, %v642
    %v644 = vpop.f32.mrb[0].mxu0
    %v645 = vadd.f32 %v521, %v644
    %646 = vmatprep.mubr.f32.mxu0 0.0
    %647 = vmatmul.mubr.f32.gmra.mrb[0].mxu0 %v556
    %v648 = vpop.f32.mrb[0].mxu0
    %v649 = vadd.f32 %v524, %v648
    %v650 = vpop.f32.mrb[0].mxu0
    %v651 = vadd.f32 %v525, %v650
    %652 = vmatprep.mubr.f32.mxu0 0.0
    %653 = vmatmul.mubr.f32.gmra.mrb[0].mxu0 %v559
    %v654 = vpop.f32.mrb[0].mxu0
    %v655 = vadd.f32 %v528, %v654
    %v656 = vpop.f32.mrb[0].mxu0
    %v657 = vadd.f32 %v529, %v656
    %658 = vmatprep.mubr.f32.mxu0 0.0
    %659 = vmatmul.mubr.f32.gmra.mrb[0].mxu0 %v562
    %v660 = vpop.f32.mrb[0].mxu0
    %v661 = vadd.f32 %v532, %v660
    %v662 = vpop.f32.mrb[0].mxu0
    %v663 = vadd.f32 %v533, %v662
    %664 = vmatprep.mubr.f32.mxu0 0.0
    %665 = vmatmul.mubr.f32.gmra.mrb[0].mxu0 %v565
    %v666 = vpop.f32.mrb[0].mxu0
    %v667 = vadd.f32 %v536, %v666
    %v668 = vpop.f32.mrb[0].mxu0
    %v669 = vadd.f32 %v537, %v668
    %670 = vmatprep.mubr.f32.mxu0 0.0
    %671 = vmatmul.mubr.f32.gmra.mrb[0].mxu0 %v568
    %v672 = vpop.f32.mrb[0].mxu0
    %v673 = vadd.f32 %v540, %v672
    %v674 = vpop.f32.mrb[0].mxu0
    %v675 = vadd.f32 %v541, %v674
    %676 = vmatprep.mubr.f32.mxu0 0.0
    %677 = vmatmul.mubr.f32.gmra.mrb[0].mxu0 %v571
    %v678 = vpop.f32.mrb[0].mxu0
    %v679 = vadd.f32 %v544, %v678
    %v680 = vpop.f32.mrb[0].mxu0
    %v681 = vadd.f32 %v545, %v680
    %682 = vmatprep.mubr.f32.mxu0 0.0
    %683 = vmatmul.mubr.f32.gmra.mrb[0].mxu0 %v574
    %v684 = vpop.f32.mrb[0].mxu0
    %v685 = vadd.f32 %v548, %v684
    %v686 = vpop.f32.mrb[0].mxu0
    %v687 = vadd.f32 %v549, %v686
    %688 = vdwg.mxu0
    %689 = vmatprep.subr.mxu0 %v449
    %690 = vmatpush1.msra.mxu0 %v448
    %691 = vmatprep.subr.mxu0 %v453
    %692 = vmatpush1.msra.mxu0 %v452
    %693 = vmatprep.subr.mxu0 %v457
    %694 = vmatpush1.msra.mxu0 %v456
    %695 = vmatprep.subr.mxu0 0.0
    %696 = vmatpush1.msra.mxu0 0.0
    %697 = vmatprep.subr.mxu0 0.0
    %698 = vmatpush1.msra.mxu0 0.0
    %699 = vmatprep.subr.mxu0 0.0
    %700 = vmatpush1.msra.mxu0 0.0
    %701 = vmatprep.subr.mxu0 0.0
    %702 = vmatpush1.msra.mxu0 0.0
    %703 = vmatprep.subr.mxu0 0.0
    %704 = vmatpush1.msra.mxu0 0.0
    %705 = vmatprep.subr.mxu0 0.0
    %706 = vmatpush1.msra.mxu0 0.0
    %707 = vmatprep.subr.mxu0 0.0
    %708 = vmatpush1.msra.mxu0 0.0
    %709 = vmatprep.subr.mxu0 0.0
    %710 = vmatpush1.msra.mxu0 0.0
    %711 = vmatprep.subr.mxu0 0.0
    %712 = vmatpush1.msra.mxu0 0.0
    %713 = vmatprep.subr.mxu0 0.0
    %714 = vmatpush1.msra.mxu0 0.0
    %715 = vmatprep.subr.mxu0 0.0
    %716 = vmatpush1.msra.mxu0 0.0
    %717 = vmatprep.subr.mxu0 0.0
    %718 = vmatpush1.msra.mxu0 0.0
    %719 = vmatprep.subr.mxu0 0.0
    %720 = vmatpush1.msra.mxu0 0.0
    %721 = vmatprep.subr.mxu0 0.0
    %722 = vmatpush1.msra.mxu0 0.0
    %723 = vmatprep.subr.mxu0 0.0
    %724 = vmatpush1.msra.mxu0 0.0
    %725 = vmatprep.subr.mxu0 0.0
    %726 = vmatpush1.msra.mxu0 0.0
    %727 = vmatprep.subr.mxu0 0.0
    %728 = vmatpush1.msra.mxu0 0.0
    %729 = vmatprep.subr.mxu0 0.0
    %730 = vmatpush1.msra.mxu0 0.0
    %731 = vmatprep.subr.mxu0 0.0
    %732 = vmatpush1.msra.mxu0 0.0
    %733 = vmatprep.subr.mxu0 0.0
    %734 = vmatpush1.msra.mxu0 0.0
    %735 = vmatprep.subr.mxu0 0.0
    %736 = vmatpush1.msra.mxu0 0.0
    %737 = vmatprep.subr.mxu0 0.0
    %738 = vmatpush1.msra.mxu0 0.0
    %739 = vmatprep.subr.mxu0 0.0
    %740 = vmatpush1.msra.mxu0 0.0
    %741 = vmatprep.subr.mxu0 0.0
    %742 = vmatpush1.msra.mxu0 0.0
    %743 = vmatprep.subr.mxu0 0.0
    %744 = vmatpush1.msra.mxu0 0.0
    %745 = vmatprep.subr.mxu0 0.0
    %746 = vmatpush1.msra.mxu0 0.0
    %747 = vmatprep.subr.mxu0 0.0
    %748 = vmatpush1.msra.mxu0 0.0
    %749 = vmatprep.subr.mxu0 0.0
    %750 = vmatpush1.msra.mxu0 0.0
    %751 = vmatprep.subr.mxu0 0.0
    %752 = vmatpush1.msra.mxu0 0.0
    %753 = vmatprep.mubr.f32.mxu0 0.0
    %754 = vmatmul.mubr.f32.gmra.mrb[0].mxu0 %v553
    %v755 = vpop.f32.mrb[0].mxu0
    %v756 = vadd.f32 %v522, %v755
    %v757 = vpop.f32.mrb[0].mxu0
    %v758 = vadd.f32 %v523, %v757
    %759 = vmatprep.mubr.f32.mxu0 0.0
    %760 = vmatmul.mubr.f32.gmra.mrb[0].mxu0 %v556
    %v761 = vpop.f32.mrb[0].mxu0
    %v762 = vadd.f32 %v526, %v761
    %v763 = vpop.f32.mrb[0].mxu0
    %v764 = vadd.f32 %v527, %v763
    %765 = vmatprep.mubr.f32.mxu0 0.0
    %766 = vmatmul.mubr.f32.gmra.mrb[0].mxu0 %v559
    %v767 = vpop.f32.mrb[0].mxu0
    %v768 = vadd.f32 %v530, %v767
    %v769 = vpop.f32.mrb[0].mxu0
    %v770 = vadd.f32 %v531, %v769
    %771 = vmatprep.mubr.f32.mxu0 0.0
    %772 = vmatmul.mubr.f32.gmra.mrb[0].mxu0 %v562
    %v773 = vpop.f32.mrb[0].mxu0
    %v774 = vadd.f32 %v534, %v773
    %v775 = vpop.f32.mrb[0].mxu0
    %v776 = vadd.f32 %v535, %v775
    %777 = vmatprep.mubr.f32.mxu0 0.0
    %778 = vmatmul.mubr.f32.gmra.mrb[0].mxu0 %v565
    %v779 = vpop.f32.mrb[0].mxu0
    %v780 = vadd.f32 %v538, %v779
    %v781 = vpop.f32.mrb[0].mxu0
    %v782 = vadd.f32 %v539, %v781
    %783 = vmatprep.mubr.f32.mxu0 0.0
    %784 = vmatmul.mubr.f32.gmra.mrb[0].mxu0 %v568
    %v785 = vpop.f32.mrb[0].mxu0
    %v786 = vadd.f32 %v542, %v785
    %v787 = vpop.f32.mrb[0].mxu0
    %v788 = vadd.f32 %v543, %v787
    %789 = vmatprep.mubr.f32.mxu0 0.0
    %790 = vmatmul.mubr.f32.gmra.mrb[0].mxu0 %v571
    %v791 = vpop.f32.mrb[0].mxu0
    %v792 = vadd.f32 %v546, %v791
    %v793 = vpop.f32.mrb[0].mxu0
    %v794 = vadd.f32 %v547, %v793
    %795 = vmatprep.mubr.f32.mxu0 0.0
    %796 = vmatmul.mubr.f32.gmra.mrb[0].mxu0 %v574
    %v797 = vpop.f32.mrb[0].mxu0
    %v798 = vadd.f32 %v550, %v797
    %v799 = vpop.f32.mrb[0].mxu0
    %v800 = vadd.f32 %v551, %v799
    %801 = vdwg.mxu0
    %v802 = vld [vmem:[%s8] sm:$0xf]
    %v804 = vlaneseq
    %v805 = vshrl.u32 %v804, 7
    %v806 = vsub.s32 0, %v805
    %v807 = vrot.slane %v802, %v806
    %v808 = vlaneseq
    %v809 = vshrl.u32 %v808, 7
    %v810 = vsub.s32 1, %v809
    %v811 = vrot.slane %v802, %v810
    %v812 = vlaneseq
    %v813 = vshrl.u32 %v812, 7
    %v814 = vsub.s32 2, %v813
    %v815 = vrot.slane %v802, %v814
    %v816 = vlaneseq
    %v817 = vshrl.u32 %v816, 7
    %v818 = vsub.s32 3, %v817
    %v819 = vrot.slane %v802, %v818
    %v824 = vadd.f32 %v643, %v807
    %v825 = vadd.f32 %v645, %v811
    %v826 = vadd.f32 %v756, %v815
    %v827 = vadd.f32 %v758, %v819
    %v828 = vadd.f32 %v649, %v807
    %v829 = vadd.f32 %v651, %v811
    %v830 = vadd.f32 %v762, %v815
    %v831 = vadd.f32 %v764, %v819
    %v832 = vadd.f32 %v655, %v807
    %v833 = vadd.f32 %v657, %v811
    %v834 = vadd.f32 %v768, %v815
    %v835 = vadd.f32 %v770, %v819
    %v836 = vadd.f32 %v661, %v807
    %v837 = vadd.f32 %v663, %v811
    %v838 = vadd.f32 %v774, %v815
    %v839 = vadd.f32 %v776, %v819
    %v840 = vadd.f32 %v667, %v807
    %v841 = vadd.f32 %v669, %v811
    %v842 = vadd.f32 %v780, %v815
    %v843 = vadd.f32 %v782, %v819
    %v844 = vadd.f32 %v673, %v807
    %v845 = vadd.f32 %v675, %v811
    %v846 = vadd.f32 %v786, %v815
    %v847 = vadd.f32 %v788, %v819
    %v848 = vadd.f32 %v679, %v807
    %v849 = vadd.f32 %v681, %v811
    %v850 = vadd.f32 %v792, %v815
    %v851 = vadd.f32 %v794, %v819
    %v852 = vadd.f32 %v685, %v807
    %v853 = vadd.f32 %v687, %v811
    %v854 = vadd.f32 %v798, %v815
    %v855 = vadd.f32 %v800, %v819
    %856 = vst [vmem:[#allocation4] sm:$0xff] %v824
    %857 = vst [vmem:[#allocation4 + $0x8] sm:$0xff] %v825
    %858 = vst [vmem:[#allocation4 + $0x10] sm:$0xff] %v826
    %859 = vst [vmem:[#allocation4 + $0x18] sm:$0xff] %v827
    %860 = vst [vmem:[#allocation4 + $0x20] sm:$0xff] %v828
    %861 = vst [vmem:[#allocation4 + $0x28] sm:$0xff] %v829
    %862 = vst [vmem:[#allocation4 + $0x30] sm:$0xff] %v830
    %863 = vst [vmem:[#allocation4 + $0x38] sm:$0xff] %v831
    %864 = vst [vmem:[#allocation4 + $0x40] sm:$0xff] %v832
    %865 = vst [vmem:[#allocation4 + $0x48] sm:$0xff] %v833
    %866 = vst [vmem:[#allocation4 + $0x50] sm:$0xff] %v834
    %867 = vst [vmem:[#allocation4 + $0x58] sm:$0xff] %v835
    %868 = vst [vmem:[#allocation4 + $0x60] sm:$0xff] %v836
    %869 = vst [vmem:[#allocation4 + $0x68] sm:$0xff] %v837
    %870 = vst [vmem:[#allocation4 + $0x70] sm:$0xff] %v838
    %871 = vst [vmem:[#allocation4 + $0x78] sm:$0xff] %v839
    %872 = vst [vmem:[#allocation4 + $0x80] sm:$0xff] %v840
    %873 = vst [vmem:[#allocation4 + $0x88] sm:$0xff] %v841
    %874 = vst [vmem:[#allocation4 + $0x90] sm:$0xff] %v842
    %875 = vst [vmem:[#allocation4 + $0x98] sm:$0xff] %v843
    %876 = vst [vmem:[#allocation4 + $0xa0] sm:$0xff] %v844
    %877 = vst [vmem:[#allocation4 + $0xa8] sm:$0xff] %v845
    %878 = vst [vmem:[#allocation4 + $0xb0] sm:$0xff] %v846
    %879 = vst [vmem:[#allocation4 + $0xb8] sm:$0xff] %v847
    %880 = vst [vmem:[#allocation4 + $0xc0] sm:$0xff] %v848
    %881 = vst [vmem:[#allocation4 + $0xc8] sm:$0xff] %v849
    %882 = vst [vmem:[#allocation4 + $0xd0] sm:$0xff] %v850
    %883 = vst [vmem:[#allocation4 + $0xd8] sm:$0xff] %v851
    %884 = vst [vmem:[#allocation4 + $0xe0] sm:$0xff] %v852
    %885 = vst [vmem:[#allocation4 + $0xe8] sm:$0xff] %v853
    %886 = vst [vmem:[#allocation4 + $0xf0] sm:$0xff] %v854
    %887 = vst [vmem:[#allocation4 + $0xf8] sm:$0xff] %v855
    %v888 = vld [vmem:[#allocation4] sm:$0xff]
    %v889 = vld [vmem:[#allocation4 + $0x10] sm:$0xff]
    %v890 = vld [vmem:[#allocation4 + $0x18] sm:$0xff]
    %v891 = vxor.u32 %v888, 2147483648
    %v892 = vxor.u32 %v889, 2147483648
    %v893 = vmul.f32 %v891, 1.442695
    %v894 = vpow.pop %v893
    %v895 = vmul.f32 %v892, 1.442695
    %v896 = vpow.pop %v895
    %v897 = vadd.f32 %v894, 1.0
    %v898 = vadd.f32 %v896, 1.0
    %v899 = vrcp.pop %v897
    %v900 = vmul.f32 1.0, %v899
    %v901 = vrcp.pop %v898
    %v902 = vmul.f32 1.0, %v901
    %v903 = vtanh.pop %v890
    %v904 = vmul.f32 %v900, %v903
    %v905 = vtanh.pop %v904
    %v906 = vmul.f32 %v902, %v905
    %907 = vst [vmem:[#allocation5] sm:$0xff] %v906
    %v908 = vld [vmem:[#allocation4 + $0x20] sm:$0xff]
    %v909 = vld [vmem:[#allocation4 + $0x28] sm:$0xff]
    %v910 = vld [vmem:[#allocation4 + $0x30] sm:$0xff]
    %v911 = vld [vmem:[#allocation4 + $0x38] sm:$0xff]
    %v912 = vld [vmem:[#allocation6] sm:$0xff]
    %v913 = vld [vmem:[#allocation6 + $0x8] sm:$0xff]
    %v914 = vld [vmem:[#allocation6 + $0x10] sm:$0xff]
    %v915 = vld [vmem:[#allocation6 + $0x18] sm:$0xff]
    %v916 = vld [vmem:[#allocation6 + $0x20] sm:$0xff]
    %v917 = vld [vmem:[#allocation6 + $0x28] sm:$0xff]
    %v918 = vld [vmem:[#allocation6 + $0x30] sm:$0xff]
    %v919 = vld [vmem:[#allocation6 + $0x38] sm:$0xff]
    %v920 = vld [vmem:[#allocation6 + $0x40] sm:$0xff]
    %v921 = vld [vmem:[#allocation6 + $0x48] sm:$0xff]
    %v922 = vld [vmem:[#allocation6 + $0x50] sm:$0xff]
    %v923 = vld [vmem:[#allocation6 + $0x58] sm:$0xff]
    %v924 = vld [vmem:[#allocation6 + $0x60] sm:$0xff]
    %v925 = vld [vmem:[#allocation6 + $0x68] sm:$0xff]
    %v926 = vld [vmem:[#allocation6 + $0x70] sm:$0xff]
    %v927 = vld [vmem:[#allocation6 + $0x78] sm:$0xff]
    %v928 = vld [vmem:[#allocation6 + $0x80] sm:$0xff]
    %v929 = vld [vmem:[#allocation6 + $0x88] sm:$0xff]
    %v930 = vld [vmem:[#allocation6 + $0x90] sm:$0xff]
    %v931 = vld [vmem:[#allocation6 + $0x98] sm:$0xff]
    %v932 = vld [vmem:[#allocation6 + $0xa0] sm:$0xff]
    %v933 = vld [vmem:[#allocation6 + $0xa8] sm:$0xff]
    %v934 = vld [vmem:[#allocation6 + $0xb0] sm:$0xff]
    %v935 = vld [vmem:[#allocation6 + $0xb8] sm:$0xff]
    %v936 = vld [vmem:[#allocation6 + $0xc0] sm:$0xff]
    %v937 = vld [vmem:[#allocation6 + $0xc8] sm:$0xff]
    %v938 = vld [vmem:[#allocation6 + $0xd0] sm:$0xff]
    %v939 = vld [vmem:[#allocation6 + $0xd8] sm:$0xff]
    %v940 = vld [vmem:[#allocation6 + $0xe0] sm:$0xff]
    %v941 = vld [vmem:[#allocation6 + $0xe8] sm:$0xff]
    %v942 = vld [vmem:[#allocation6 + $0xf0] sm:$0xff]
    %v943 = vld [vmem:[#allocation6 + $0xf8] sm:$0xff]
    %v944 = vld [vmem:[#allocation6 + $0x100] sm:$0xff]
    %v945 = vld [vmem:[#allocation6 + $0x108] sm:$0xff]
    %v946 = vld [vmem:[#allocation6 + $0x110] sm:$0xff]
    %v947 = vld [vmem:[#allocation6 + $0x118] sm:$0xff]
    %v948 = vld [vmem:[#allocation6 + $0x120] sm:$0xff]
    %v949 = vld [vmem:[#allocation6 + $0x128] sm:$0xff]
    %v950 = vld [vmem:[#allocation6 + $0x130] sm:$0xff]
    %v951 = vld [vmem:[#allocation6 + $0x138] sm:$0xff]
    %v952 = vld [vmem:[#allocation6 + $0x140] sm:$0xff]
    %v953 = vld [vmem:[#allocation6 + $0x148] sm:$0xff]
    %v954 = vld [vmem:[#allocation6 + $0x150] sm:$0xff]
    %v955 = vld [vmem:[#allocation6 + $0x158] sm:$0xff]
    %v956 = vld [vmem:[#allocation6 + $0x160] sm:$0xff]
    %v957 = vld [vmem:[#allocation6 + $0x168] sm:$0xff]
    %v958 = vld [vmem:[#allocation6 + $0x170] sm:$0xff]
    %v959 = vld [vmem:[#allocation6 + $0x178] sm:$0xff]
    %v960 = vld [vmem:[#allocation6 + $0x180] sm:$0xff]
    %v961 = vld [vmem:[#allocation6 + $0x188] sm:$0xff]
    %v962 = vld [vmem:[#allocation6 + $0x190] sm:$0xff]
    %v963 = vld [vmem:[#allocation6 + $0x198] sm:$0xff]
    %v964 = vld [vmem:[#allocation6 + $0x1a0] sm:$0xff]
    %v965 = vld [vmem:[#allocation6 + $0x1a8] sm:$0xff]
    %v966 = vld [vmem:[#allocation6 + $0x1b0] sm:$0xff]
    %v967 = vld [vmem:[#allocation6 + $0x1b8] sm:$0xff]
    %v968 = vld [vmem:[#allocation6 + $0x1c0] sm:$0xff]
    %v969 = vld [vmem:[#allocation6 + $0x1c8] sm:$0xff]
    %v970 = vld [vmem:[#allocation6 + $0x1d0] sm:$0xff]
    %v971 = vld [vmem:[#allocation6 + $0x1d8] sm:$0xff]
    %v972 = vld [vmem:[#allocation6 + $0x1e0] sm:$0xff]
    %v973 = vld [vmem:[#allocation6 + $0x1e8] sm:$0xff]
    %v974 = vld [vmem:[#allocation6 + $0x1f0] sm:$0xff]
    %v975 = vld [vmem:[#allocation6 + $0x1f8] sm:$0xff]
    %976 = vmatprep.subr.mxu0 %v913
    %977 = vmatpush1.msra.mxu0 %v912
    %978 = vmatprep.subr.mxu0 %v917
    %979 = vmatpush1.msra.mxu0 %v916
    %980 = vmatprep.subr.mxu0 %v921
    %981 = vmatpush1.msra.mxu0 %v920
    %982 = vmatprep.subr.mxu0 %v925
    %983 = vmatpush1.msra.mxu0 %v924
    %984 = vmatprep.subr.mxu0 %v929
    %985 = vmatpush1.msra.mxu0 %v928
    %986 = vmatprep.subr.mxu0 %v933
    %987 = vmatpush1.msra.mxu0 %v932
    %988 = vmatprep.subr.mxu0 %v937
    %989 = vmatpush1.msra.mxu0 %v936
    %990 = vmatprep.subr.mxu0 %v941
    %991 = vmatpush1.msra.mxu0 %v940
    %992 = vmatprep.subr.mxu0 %v945
    %993 = vmatpush1.msra.mxu0 %v944
    %994 = vmatprep.subr.mxu0 %v949
    %995 = vmatpush1.msra.mxu0 %v948
    %996 = vmatprep.subr.mxu0 %v953
    %997 = vmatpush1.msra.mxu0 %v952
    %998 = vmatprep.subr.mxu0 %v957
    %999 = vmatpush1.msra.mxu0 %v956
    %1000 = vmatprep.subr.mxu0 %v961
    %1001 = vmatpush1.msra.mxu0 %v960
    %1002 = vmatprep.subr.mxu0 %v965
    %1003 = vmatpush1.msra.mxu0 %v964
    %1004 = vmatprep.subr.mxu0 %v969
    %1005 = vmatpush1.msra.mxu0 %v968
    %1006 = vmatprep.subr.mxu0 %v973
    %1007 = vmatpush1.msra.mxu0 %v972
    %1008 = vmatprep.subr.mxu0 0.0
    %1009 = vmatpush1.msra.mxu0 0.0
    %1010 = vmatprep.subr.mxu0 0.0
    %1011 = vmatpush1.msra.mxu0 0.0
    %1012 = vmatprep.subr.mxu0 0.0
    %1013 = vmatpush1.msra.mxu0 0.0
    %1014 = vmatprep.subr.mxu0 0.0
    %1015 = vmatpush1.msra.mxu0 0.0
    %1016 = vmatprep.subr.mxu0 0.0
    %1017 = vmatpush1.msra.mxu0 0.0
    %1018 = vmatprep.subr.mxu0 0.0
    %1019 = vmatpush1.msra.mxu0 0.0
    %1020 = vmatprep.subr.mxu0 0.0
    %1021 = vmatpush1.msra.mxu0 0.0
    %1022 = vmatprep.subr.mxu0 0.0
    %1023 = vmatpush1.msra.mxu0 0.0
    %1024 = vmatprep.subr.mxu0 0.0
    %1025 = vmatpush1.msra.mxu0 0.0
    %1026 = vmatprep.subr.mxu0 0.0
    %1027 = vmatpush1.msra.mxu0 0.0
    %1028 = vmatprep.subr.mxu0 0.0
    %1029 = vmatpush1.msra.mxu0 0.0
    %1030 = vmatprep.subr.mxu0 0.0
    %1031 = vmatpush1.msra.mxu0 0.0
    %1032 = vmatprep.subr.mxu0 0.0
    %1033 = vmatpush1.msra.mxu0 0.0
    %1034 = vmatprep.subr.mxu0 0.0
    %1035 = vmatpush1.msra.mxu0 0.0
    %1036 = vmatprep.subr.mxu0 0.0
    %1037 = vmatpush1.msra.mxu0 0.0
    %1038 = vmatprep.subr.mxu0 0.0
    %1039 = vmatpush1.msra.mxu0 0.0
    %1040 = vmatprep.mubr.f32.mxu0 0.0
    %1041 = vmatmul.mubr.f32.gmra.mrb[0].mxu0 %v906
    %v1042 = vpop.f32.mrb[0].mxu0
    %v1043 = vadd.f32 0.0, %v1042
    %v1044 = vpop.f32.mrb[0].mxu0
    %v1045 = vadd.f32 0.0, %v1044
    %1046 = vdwg.mxu0
    %1047 = vmatprep.subr.mxu0 %v915
    %1048 = vmatpush1.msra.mxu0 %v914
    %1049 = vmatprep.subr.mxu0 %v919
    %1050 = vmatpush1.msra.mxu0 %v918
    %1051 = vmatprep.subr.mxu0 %v923
    %1052 = vmatpush1.msra.mxu0 %v922
    %1053 = vmatprep.subr.mxu0 %v927
    %1054 = vmatpush1.msra.mxu0 %v926
    %1055 = vmatprep.subr.mxu0 %v931
    %1056 = vmatpush1.msra.mxu0 %v930
    %1057 = vmatprep.subr.mxu0 %v935
    %1058 = vmatpush1.msra.mxu0 %v934
    %1059 = vmatprep.subr.mxu0 %v939
    %1060 = vmatpush1.msra.mxu0 %v938
    %1061 = vmatprep.subr.mxu0 %v943
    %1062 = vmatpush1.msra.mxu0 %v942
    %1063 = vmatprep.subr.mxu0 %v947
    %1064 = vmatpush1.msra.mxu0 %v946
    %1065 = vmatprep.subr.mxu0 %v951
    %1066 = vmatpush1.msra.mxu0 %v950
    %1067 = vmatprep.subr.mxu0 %v955
    %1068 = vmatpush1.msra.mxu0 %v954
    %1069 = vmatprep.subr.mxu0 %v959
    %1070 = vmatpush1.msra.mxu0 %v958
    %1071 = vmatprep.subr.mxu0 %v963
    %1072 = vmatpush1.msra.mxu0 %v962
    %1073 = vmatprep.subr.mxu0 %v967
    %1074 = vmatpush1.msra.mxu0 %v966
    %1075 = vmatprep.subr.mxu0 %v971
    %1076 = vmatpush1.msra.mxu0 %v970
    %1077 = vmatprep.subr.mxu0 %v975
    %1078 = vmatpush1.msra.mxu0 %v974
    %1079 = vmatprep.subr.mxu0 0.0
    %1080 = vmatpush1.msra.mxu0 0.0
    %1081 = vmatprep.subr.mxu0 0.0
    %1082 = vmatpush1.msra.mxu0 0.0
    %1083 = vmatprep.subr.mxu0 0.0
    %1084 = vmatpush1.msra.mxu0 0.0
    %1085 = vmatprep.subr.mxu0 0.0
    %1086 = vmatpush1.msra.mxu0 0.0
    %1087 = vmatprep.subr.mxu0 0.0
    %1088 = vmatpush1.msra.mxu0 0.0
    %1089 = vmatprep.subr.mxu0 0.0
    %1090 = vmatpush1.msra.mxu0 0.0
    %1091 = vmatprep.subr.mxu0 0.0
    %1092 = vmatpush1.msra.mxu0 0.0
    %1093 = vmatprep.subr.mxu0 0.0
    %1094 = vmatpush1.msra.mxu0 0.0
    %1095 = vmatprep.subr.mxu0 0.0
    %1096 = vmatpush1.msra.mxu0 0.0
    %1097 = vmatprep.subr.mxu0 0.0
    %1098 = vmatpush1.msra.mxu0 0.0
    %1099 = vmatprep.subr.mxu0 0.0
    %1100 = vmatpush1.msra.mxu0 0.0
    %1101 = vmatprep.subr.mxu0 0.0
    %1102 = vmatpush1.msra.mxu0 0.0
    %1103 = vmatprep.subr.mxu0 0.0
    %1104 = vmatpush1.msra.mxu0 0.0
    %1105 = vmatprep.subr.mxu0 0.0
    %1106 = vmatpush1.msra.mxu0 0.0
    %1107 = vmatprep.subr.mxu0 0.0
    %1108 = vmatpush1.msra.mxu0 0.0
    %1109 = vmatprep.subr.mxu0 0.0
    %1110 = vmatpush1.msra.mxu0 0.0
    %1111 = vmatprep.mubr.f32.mxu0 0.0
    %1112 = vmatmul.mubr.f32.gmra.mrb[0].mxu0 %v906
    %v1113 = vpop.f32.mrb[0].mxu0
    %v1114 = vadd.f32 0.0, %v1113
    %v1115 = vpop.f32.mrb[0].mxu0
    %v1116 = vadd.f32 0.0, %v1115
    %1117 = vdwg.mxu0
    %v1118 = vadd.f32 %v908, %v1043
    %v1119 = vadd.f32 %v909, %v1045
    %v1120 = vadd.f32 %v910, %v1114
    %v1121 = vadd.f32 %v911, %v1116
    %v1122 = vxor.u32 %v1118, 2147483648
    %v1123 = vxor.u32 %v1119, 2147483648
    %v1124 = vxor.u32 %v1120, 2147483648
    %v1125 = vmul.f32 %v1122, 1.442695
    %v1126 = vpow.pop %v1125
    %v1127 = vmul.f32 %v1123, 1.442695
    %v1128 = vpow.pop %v1127
    %v1129 = vmul.f32 %v1124, 1.442695
    %v1130 = vpow.pop %v1129
    %v1131 = vadd.f32 %v1126, 1.0
    %v1132 = vadd.f32 %v1128, 1.0
    %v1133 = vadd.f32 %v1130, 1.0
    %v1134 = vrcp.pop %v1131
    %v1135 = vmul.f32 1.0, %v1134
    %v1136 = vrcp.pop %v1132
    %v1137 = vmul.f32 1.0, %v1136
    %v1138 = vrcp.pop %v1133
    %v1139 = vmul.f32 1.0, %v1138
    %v1140 = vtanh.pop %v1121
    %v1141 = vmul.f32 %v1137, %v904
    %v1142 = vmul.f32 %v1135, %v1140
    %v1143 = vadd.f32 %v1141, %v1142
    %v1144 = vtanh.pop %v1143
    %v1145 = vmul.f32 %v1139, %v1144
    %1146 = vst [vmem:[#allocation5 + $0x8] sm:$0xff] %v1145
    %v1147 = vld [vmem:[#allocation4 + $0x40] sm:$0xff]
    %v1148 = vld [vmem:[#allocation4 + $0x48] sm:$0xff]
    %v1149 = vld [vmem:[#allocation4 + $0x50] sm:$0xff]
    %v1150 = vld [vmem:[#allocation4 + $0x58] sm:$0xff]
    %v1151 = vld [vmem:[#allocation6] sm:$0xff]
    %v1152 = vld [vmem:[#allocation6 + $0x8] sm:$0xff]
    %v1153 = vld [vmem:[#allocation6 + $0x10] sm:$0xff]
    %v1154 = vld [vmem:[#allocation6 + $0x18] sm:$0xff]
    %v1155 = vld [vmem:[#allocation6 + $0x20] sm:$0xff]
    %v1156 = vld [vmem:[#allocation6 + $0x28] sm:$0xff]
    %v1157 = vld [vmem:[#allocation6 + $0x30] sm:$0xff]
    %v1158 = vld [vmem:[#allocation6 + $0x38] sm:$0xff]
    %v1159 = vld [vmem:[#allocation6 + $0x40] sm:$0xff]
    %v1160 = vld [vmem:[#allocation6 + $0x48] sm:$0xff]
    %v1161 = vld [vmem:[#allocation6 + $0x50] sm:$0xff]
    %v1162 = vld [vmem:[#allocation6 + $0x58] sm:$0xff]
    %v1163 = vld [vmem:[#allocation6 + $0x60] sm:$0xff]
    %v1164 = vld [vmem:[#allocation6 + $0x68] sm:$0xff]
    %v1165 = vld [vmem:[#allocation6 + $0x70] sm:$0xff]
    %v1166 = vld [vmem:[#allocation6 + $0x78] sm:$0xff]
    %v1167 = vld [vmem:[#allocation6 + $0x80] sm:$0xff]
    %v1168 = vld [vmem:[#allocation6 + $0x88] sm:$0xff]
    %v1169 = vld [vmem:[#allocation6 + $0x90] sm:$0xff]
    %v1170 = vld [vmem:[#allocation6 + $0x98] sm:$0xff]
    %v1171 = vld [vmem:[#allocation6 + $0xa0] sm:$0xff]
    %v1172 = vld [vmem:[#allocation6 + $0xa8] sm:$0xff]
    %v1173 = vld [vmem:[#allocation6 + $0xb0] sm:$0xff]
    %v1174 = vld [vmem:[#allocation6 + $0xb8] sm:$0xff]
    %v1175 = vld [vmem:[#allocation6 + $0xc0] sm:$0xff]
    %v1176 = vld [vmem:[#allocation6 + $0xc8] sm:$0xff]
    %v1177 = vld [vmem:[#allocation6 + $0xd0] sm:$0xff]
    %v1178 = vld [vmem:[#allocation6 + $0xd8] sm:$0xff]
    %v1179 = vld [vmem:[#allocation6 + $0xe0] sm:$0xff]
    %v1180 = vld [vmem:[#allocation6 + $0xe8] sm:$0xff]
    %v1181 = vld [vmem:[#allocation6 + $0xf0] sm:$0xff]
    %v1182 = vld [vmem:[#allocation6 + $0xf8] sm:$0xff]
    %v1183 = vld [vmem:[#allocation6 + $0x100] sm:$0xff]
    %v1184 = vld [vmem:[#allocation6 + $0x108] sm:$0xff]
    %v1185 = vld [vmem:[#allocation6 + $0x110] sm:$0xff]
    %v1186 = vld [vmem:[#allocation6 + $0x118] sm:$0xff]
    %v1187 = vld [vmem:[#allocation6 + $0x120] sm:$0xff]
    %v1188 = vld [vmem:[#allocation6 + $0x128] sm:$0xff]
    %v1189 = vld [vmem:[#allocation6 + $0x130] sm:$0xff]
    %v1190 = vld [vmem:[#allocation6 + $0x138] sm:$0xff]
    %v1191 = vld [vmem:[#allocation6 + $0x140] sm:$0xff]
    %v1192 = vld [vmem:[#allocation6 + $0x148] sm:$0xff]
    %v1193 = vld [vmem:[#allocation6 + $0x150] sm:$0xff]
    %v1194 = vld [vmem:[#allocation6 + $0x158] sm:$0xff]
    %v1195 = vld [vmem:[#allocation6 + $0x160] sm:$0xff]
    %v1196 = vld [vmem:[#allocation6 + $0x168] sm:$0xff]
    %v1197 = vld [vmem:[#allocation6 + $0x170] sm:$0xff]
    %v1198 = vld [vmem:[#allocation6 + $0x178] sm:$0xff]
    %v1199 = vld [vmem:[#allocation6 + $0x180] sm:$0xff]
    %v1200 = vld [vmem:[#allocation6 + $0x188] sm:$0xff]
    %v1201 = vld [vmem:[#allocation6 + $0x190] sm:$0xff]
    %v1202 = vld [vmem:[#allocation6 + $0x198] sm:$0xff]
    %v1203 = vld [vmem:[#allocation6 + $0x1a0] sm:$0xff]
    %v1204 = vld [vmem:[#allocation6 + $0x1a8] sm:$0xff]
    %v1205 = vld [vmem:[#allocation6 + $0x1b0] sm:$0xff]
    %v1206 = vld [vmem:[#allocation6 + $0x1b8] sm:$0xff]
    %v1207 = vld [vmem:[#allocation6 + $0x1c0] sm:$0xff]
    %v1208 = vld [vmem:[#allocation6 + $0x1c8] sm:$0xff]
    %v1209 = vld [vmem:[#allocation6 + $0x1d0] sm:$0xff]
    %v1210 = vld [vmem:[#allocation6 + $0x1d8] sm:$0xff]
    %v1211 = vld [vmem:[#allocation6 + $0x1e0] sm:$0xff]
    %v1212 = vld [vmem:[#allocation6 + $0x1e8] sm:$0xff]
    %v1213 = vld [vmem:[#allocation6 + $0x1f0] sm:$0xff]
    %v1214 = vld [vmem:[#allocation6 + $0x1f8] sm:$0xff]
    %1215 = vmatprep.subr.mxu0 %v1152
    %1216 = vmatpush1.msra.mxu0 %v1151
    %1217 = vmatprep.subr.mxu0 %v1156
    %1218 = vmatpush1.msra.mxu0 %v1155
    %1219 = vmatprep.subr.mxu0 %v1160
    %1220 = vmatpush1.msra.mxu0 %v1159
    %1221 = vmatprep.subr.mxu0 %v1164
    %1222 = vmatpush1.msra.mxu0 %v1163
    %1223 = vmatprep.subr.mxu0 %v1168
    %1224 = vmatpush1.msra.mxu0 %v1167
    %1225 = vmatprep.subr.mxu0 %v1172
    %1226 = vmatpush1.msra.mxu0 %v1171
    %1227 = vmatprep.subr.mxu0 %v1176
    %1228 = vmatpush1.msra.mxu0 %v1175
    %1229 = vmatprep.subr.mxu0 %v1180
    %1230 = vmatpush1.msra.mxu0 %v1179
    %1231 = vmatprep.subr.mxu0 %v1184
    %1232 = vmatpush1.msra.mxu0 %v1183
    %1233 = vmatprep.subr.mxu0 %v1188
    %1234 = vmatpush1.msra.mxu0 %v1187
    %1235 = vmatprep.subr.mxu0 %v1192
    %1236 = vmatpush1.msra.mxu0 %v1191
    %1237 = vmatprep.subr.mxu0 %v1196
    %1238 = vmatpush1.msra.mxu0 %v1195
    %1239 = vmatprep.subr.mxu0 %v1200
    %1240 = vmatpush1.msra.mxu0 %v1199
    %1241 = vmatprep.subr.mxu0 %v1204
    %1242 = vmatpush1.msra.mxu0 %v1203
    %1243 = vmatprep.subr.mxu0 %v1208
    %1244 = vmatpush1.msra.mxu0 %v1207
    %1245 = vmatprep.subr.mxu0 %v1212
    %1246 = vmatpush1.msra.mxu0 %v1211
    %1247 = vmatprep.subr.mxu0 0.0
    %1248 = vmatpush1.msra.mxu0 0.0
    %1249 = vmatprep.subr.mxu0 0.0
    %1250 = vmatpush1.msra.mxu0 0.0
    %1251 = vmatprep.subr.mxu0 0.0
    %1252 = vmatpush1.msra.mxu0 0.0
    %1253 = vmatprep.subr.mxu0 0.0
    %1254 = vmatpush1.msra.mxu0 0.0
    %1255 = vmatprep.subr.mxu0 0.0
    %1256 = vmatpush1.msra.mxu0 0.0
    %1257 = vmatprep.subr.mxu0 0.0
    %1258 = vmatpush1.msra.mxu0 0.0
    %1259 = vmatprep.subr.mxu0 0.0
    %1260 = vmatpush1.msra.mxu0 0.0
    %1261 = vmatprep.subr.mxu0 0.0
    %1262 = vmatpush1.msra.mxu0 0.0
    %1263 = vmatprep.subr.mxu0 0.0
    %1264 = vmatpush1.msra.mxu0 0.0
    %1265 = vmatprep.subr.mxu0 0.0
    %1266 = vmatpush1.msra.mxu0 0.0
    %1267 = vmatprep.subr.mxu0 0.0
    %1268 = vmatpush1.msra.mxu0 0.0
    %1269 = vmatprep.subr.mxu0 0.0
    %1270 = vmatpush1.msra.mxu0 0.0
    %1271 = vmatprep.subr.mxu0 0.0
    %1272 = vmatpush1.msra.mxu0 0.0
    %1273 = vmatprep.subr.mxu0 0.0
    %1274 = vmatpush1.msra.mxu0 0.0
    %1275 = vmatprep.subr.mxu0 0.0
    %1276 = vmatpush1.msra.mxu0 0.0
    %1277 = vmatprep.subr.mxu0 0.0
    %1278 = vmatpush1.msra.mxu0 0.0
    %1279 = vmatprep.mubr.f32.mxu0 0.0
    %1280 = vmatmul.mubr.f32.gmra.mrb[0].mxu0 %v1145
    %v1281 = vpop.f32.mrb[0].mxu0
    %v1282 = vadd.f32 0.0, %v1281
    %v1283 = vpop.f32.mrb[0].mxu0
    %v1284 = vadd.f32 0.0, %v1283
    %1285 = vdwg.mxu0
    %1286 = vmatprep.subr.mxu0 %v1154
    %1287 = vmatpush1.msra.mxu0 %v1153
    %1288 = vmatprep.subr.mxu0 %v1158
    %1289 = vmatpush1.msra.mxu0 %v1157
    %1290 = vmatprep.subr.mxu0 %v1162
    %1291 = vmatpush1.msra.mxu0 %v1161
    %1292 = vmatprep.subr.mxu0 %v1166
    %1293 = vmatpush1.msra.mxu0 %v1165
    %1294 = vmatprep.subr.mxu0 %v1170
    %1295 = vmatpush1.msra.mxu0 %v1169
    %1296 = vmatprep.subr.mxu0 %v1174
    %1297 = vmatpush1.msra.mxu0 %v1173
    %1298 = vmatprep.subr.mxu0 %v1178
    %1299 = vmatpush1.msra.mxu0 %v1177
    %1300 = vmatprep.subr.mxu0 %v1182
    %1301 = vmatpush1.msra.mxu0 %v1181
    %1302 = vmatprep.subr.mxu0 %v1186
    %1303 = vmatpush1.msra.mxu0 %v1185
    %1304 = vmatprep.subr.mxu0 %v1190
    %1305 = vmatpush1.msra.mxu0 %v1189
    %1306 = vmatprep.subr.mxu0 %v1194
    %1307 = vmatpush1.msra.mxu0 %v1193
    %1308 = vmatprep.subr.mxu0 %v1198
    %1309 = vmatpush1.msra.mxu0 %v1197
    %1310 = vmatprep.subr.mxu0 %v1202
    %1311 = vmatpush1.msra.mxu0 %v1201
    %1312 = vmatprep.subr.mxu0 %v1206
    %1313 = vmatpush1.msra.mxu0 %v1205
    %1314 = vmatprep.subr.mxu0 %v1210
    %1315 = vmatpush1.msra.mxu0 %v1209
    %1316 = vmatprep.subr.mxu0 %v1214
    %1317 = vmatpush1.msra.mxu0 %v1213
    %1318 = vmatprep.subr.mxu0 0.0
    %1319 = vmatpush1.msra.mxu0 0.0
    %1320 = vmatprep.subr.mxu0 0.0
    %1321 = vmatpush1.msra.mxu0 0.0
    %1322 = vmatprep.subr.mxu0 0.0
    %1323 = vmatpush1.msra.mxu0 0.0
    %1324 = vmatprep.subr.mxu0 0.0
    %1325 = vmatpush1.msra.mxu0 0.0
    %1326 = vmatprep.subr.mxu0 0.0
    %1327 = vmatpush1.msra.mxu0 0.0
    %1328 = vmatprep.subr.mxu0 0.0
    %1329 = vmatpush1.msra.mxu0 0.0
    %1330 = vmatprep.subr.mxu0 0.0
    %1331 = vmatpush1.msra.mxu0 0.0
    %1332 = vmatprep.subr.mxu0 0.0
    %1333 = vmatpush1.msra.mxu0 0.0
    %1334 = vmatprep.subr.mxu0 0.0
    %1335 = vmatpush1.msra.mxu0 0.0
    %1336 = vmatprep.subr.mxu0 0.0
    %1337 = vmatpush1.msra.mxu0 0.0
    %1338 = vmatprep.subr.mxu0 0.0
    %1339 = vmatpush1.msra.mxu0 0.0
    %1340 = vmatprep.subr.mxu0 0.0
    %1341 = vmatpush1.msra.mxu0 0.0
    %1342 = vmatprep.subr.mxu0 0.0
    %1343 = vmatpush1.msra.mxu0 0.0
    %1344 = vmatprep.subr.mxu0 0.0
    %1345 = vmatpush1.msra.mxu0 0.0
    %1346 = vmatprep.subr.mxu0 0.0
    %1347 = vmatpush1.msra.mxu0 0.0
    %1348 = vmatprep.subr.mxu0 0.0
    %1349 = vmatpush1.msra.mxu0 0.0
    %1350 = vmatprep.mubr.f32.mxu0 0.0
    %1351 = vmatmul.mubr.f32.gmra.mrb[0].mxu0 %v1145
    %v1352 = vpop.f32.mrb[0].mxu0
    %v1353 = vadd.f32 0.0, %v1352
    %v1354 = vpop.f32.mrb[0].mxu0
    %v1355 = vadd.f32 0.0, %v1354
    %1356 = vdwg.mxu0
    %v1357 = vadd.f32 %v1147, %v1282
    %v1358 = vadd.f32 %v1148, %v1284
    %v1359 = vadd.f32 %v1149, %v1353
    %v1360 = vadd.f32 %v1150, %v1355
    %v1361 = vxor.u32 %v1357, 2147483648
    %v1362 = vxor.u32 %v1358, 2147483648
    %v1363 = vxor.u32 %v1359, 2147483648
    %v1364 = vmul.f32 %v1361, 1.442695
    %v1365 = vpow.pop %v1364
    %v1366 = vmul.f32 %v1362, 1.442695
    %v1367 = vpow.pop %v1366
    %v1368 = vmul.f32 %v1363, 1.442695
    %v1369 = vpow.pop %v1368
    %v1370 = vadd.f32 %v1365, 1.0
    %v1371 = vadd.f32 %v1367, 1.0
    %v1372 = vadd.f32 %v1369, 1.0
    %v1373 = vrcp.pop %v1370
    %v1374 = vmul.f32 1.0, %v1373
    %v1375 = vrcp.pop %v1371
    %v1376 = vmul.f32 1.0, %v1375
    %v1377 = vrcp.pop %v1372
    %v1378 = vmul.f32 1.0, %v1377
    %v1379 = vtanh.pop %v1360
    %v1380 = vmul.f32 %v1376, %v1143
    %v1381 = vmul.f32 %v1374, %v1379
    %v1382 = vadd.f32 %v1380, %v1381
    %v1383 = vtanh.pop %v1382
    %v1384 = vmul.f32 %v1378, %v1383
    %1385 = vst [vmem:[#allocation5 + $0x10] sm:$0xff] %v1384
    %v1386 = vld [vmem:[#allocation4 + $0x60] sm:$0xff]
    %v1387 = vld [vmem:[#allocation4 + $0x68] sm:$0xff]
    %v1388 = vld [vmem:[#allocation4 + $0x70] sm:$0xff]
    %v1389 = vld [vmem:[#allocation4 + $0x78] sm:$0xff]
    %v1390 = vld [vmem:[#allocation6] sm:$0xff]
    %v1391 = vld [vmem:[#allocation6 + $0x8] sm:$0xff]
    %v1392 = vld [vmem:[#allocation6 + $0x10] sm:$0xff]
    %v1393 = vld [vmem:[#allocation6 + $0x18] sm:$0xff]
    %v1394 = vld [vmem:[#allocation6 + $0x20] sm:$0xff]
    %v1395 = vld [vmem:[#allocation6 + $0x28] sm:$0xff]
    %v1396 = vld [vmem:[#allocation6 + $0x30] sm:$0xff]
    %v1397 = vld [vmem:[#allocation6 + $0x38] sm:$0xff]
    %v1398 = vld [vmem:[#allocation6 + $0x40] sm:$0xff]
    %v1399 = vld [vmem:[#allocation6 + $0x48] sm:$0xff]
    %v1400 = vld [vmem:[#allocation6 + $0x50] sm:$0xff]
    %v1401 = vld [vmem:[#allocation6 + $0x58] sm:$0xff]
    %v1402 = vld [vmem:[#allocation6 + $0x60] sm:$0xff]
    %v1403 = vld [vmem:[#allocation6 + $0x68] sm:$0xff]
    %v1404 = vld [vmem:[#allocation6 + $0x70] sm:$0xff]
    %v1405 = vld [vmem:[#allocation6 + $0x78] sm:$0xff]
    %v1406 = vld [vmem:[#allocation6 + $0x80] sm:$0xff]
    %v1407 = vld [vmem:[#allocation6 + $0x88] sm:$0xff]
    %v1408 = vld [vmem:[#allocation6 + $0x90] sm:$0xff]
    %v1409 = vld [vmem:[#allocation6 + $0x98] sm:$0xff]
    %v1410 = vld [vmem:[#allocation6 + $0xa0] sm:$0xff]
    %v1411 = vld [vmem:[#allocation6 + $0xa8] sm:$0xff]
    %v1412 = vld [vmem:[#allocation6 + $0xb0] sm:$0xff]
    %v1413 = vld [vmem:[#allocation6 + $0xb8] sm:$0xff]
    %v1414 = vld [vmem:[#allocation6 + $0xc0] sm:$0xff]
    %v1415 = vld [vmem:[#allocation6 + $0xc8] sm:$0xff]
    %v1416 = vld [vmem:[#allocation6 + $0xd0] sm:$0xff]
    %v1417 = vld [vmem:[#allocation6 + $0xd8] sm:$0xff]
    %v1418 = vld [vmem:[#allocation6 + $0xe0] sm:$0xff]
    %v1419 = vld [vmem:[#allocation6 + $0xe8] sm:$0xff]
    %v1420 = vld [vmem:[#allocation6 + $0xf0] sm:$0xff]
    %v1421 = vld [vmem:[#allocation6 + $0xf8] sm:$0xff]
    %v1422 = vld [vmem:[#allocation6 + $0x100] sm:$0xff]
    %v1423 = vld [vmem:[#allocation6 + $0x108] sm:$0xff]
    %v1424 = vld [vmem:[#allocation6 + $0x110] sm:$0xff]
    %v1425 = vld [vmem:[#allocation6 + $0x118] sm:$0xff]
    %v1426 = vld [vmem:[#allocation6 + $0x120] sm:$0xff]
    %v1427 = vld [vmem:[#allocation6 + $0x128] sm:$0xff]
    %v1428 = vld [vmem:[#allocation6 + $0x130] sm:$0xff]
    %v1429 = vld [vmem:[#allocation6 + $0x138] sm:$0xff]
    %v1430 = vld [vmem:[#allocation6 + $0x140] sm:$0xff]
    %v1431 = vld [vmem:[#allocation6 + $0x148] sm:$0xff]
    %v1432 = vld [vmem:[#allocation6 + $0x150] sm:$0xff]
    %v1433 = vld [vmem:[#allocation6 + $0x158] sm:$0xff]
    %v1434 = vld [vmem:[#allocation6 + $0x160] sm:$0xff]
    %v1435 = vld [vmem:[#allocation6 + $0x168] sm:$0xff]
    %v1436 = vld [vmem:[#allocation6 + $0x170] sm:$0xff]
    %v1437 = vld [vmem:[#allocation6 + $0x178] sm:$0xff]
    %v1438 = vld [vmem:[#allocation6 + $0x180] sm:$0xff]
    %v1439 = vld [vmem:[#allocation6 + $0x188] sm:$0xff]
    %v1440 = vld [vmem:[#allocation6 + $0x190] sm:$0xff]
    %v1441 = vld [vmem:[#allocation6 + $0x198] sm:$0xff]
    %v1442 = vld [vmem:[#allocation6 + $0x1a0] sm:$0xff]
    %v1443 = vld [vmem:[#allocation6 + $0x1a8] sm:$0xff]
    %v1444 = vld [vmem:[#allocation6 + $0x1b0] sm:$0xff]
    %v1445 = vld [vmem:[#allocation6 + $0x1b8] sm:$0xff]
    %v1446 = vld [vmem:[#allocation6 + $0x1c0] sm:$0xff]
    %v1447 = vld [vmem:[#allocation6 + $0x1c8] sm:$0xff]
    %v1448 = vld [vmem:[#allocation6 + $0x1d0] sm:$0xff]
    %v1449 = vld [vmem:[#allocation6 + $0x1d8] sm:$0xff]
    %v1450 = vld [vmem:[#allocation6 + $0x1e0] sm:$0xff]
    %v1451 = vld [vmem:[#allocation6 + $0x1e8] sm:$0xff]
    %v1452 = vld [vmem:[#allocation6 + $0x1f0] sm:$0xff]
    %v1453 = vld [vmem:[#allocation6 + $0x1f8] sm:$0xff]
    %1454 = vmatprep.subr.mxu0 %v1391
    %1455 = vmatpush1.msra.mxu0 %v1390
    %1456 = vmatprep.subr.mxu0 %v1395
    %1457 = vmatpush1.msra.mxu0 %v1394
    %1458 = vmatprep.subr.mxu0 %v1399
    %1459 = vmatpush1.msra.mxu0 %v1398
    %1460 = vmatprep.subr.mxu0 %v1403
    %1461 = vmatpush1.msra.mxu0 %v1402
    %1462 = vmatprep.subr.mxu0 %v1407
    %1463 = vmatpush1.msra.mxu0 %v1406
    %1464 = vmatprep.subr.mxu0 %v1411
    %1465 = vmatpush1.msra.mxu0 %v1410
    %1466 = vmatprep.subr.mxu0 %v1415
    %1467 = vmatpush1.msra.mxu0 %v1414
    %1468 = vmatprep.subr.mxu0 %v1419
    %1469 = vmatpush1.msra.mxu0 %v1418
    %1470 = vmatprep.subr.mxu0 %v1423
    %1471 = vmatpush1.msra.mxu0 %v1422
    %1472 = vmatprep.subr.mxu0 %v1427
    %1473 = vmatpush1.msra.mxu0 %v1426
    %1474 = vmatprep.subr.mxu0 %v1431
    %1475 = vmatpush1.msra.mxu0 %v1430
    %1476 = vmatprep.subr.mxu0 %v1435
    %1477 = vmatpush1.msra.mxu0 %v1434
    %1478 = vmatprep.subr.mxu0 %v1439
    %1479 = vmatpush1.msra.mxu0 %v1438
    %1480 = vmatprep.subr.mxu0 %v1443
    %1481 = vmatpush1.msra.mxu0 %v1442
    %1482 = vmatprep.subr.mxu0 %v1447
    %1483 = vmatpush1.msra.mxu0 %v1446
    %1484 = vmatprep.subr.mxu0 %v1451
    %1485 = vmatpush1.msra.mxu0 %v1450
    %1486 = vmatprep.subr.mxu0 0.0
    %1487 = vmatpush1.msra.mxu0 0.0
    %1488 = vmatprep.subr.mxu0 0.0
    %1489 = vmatpush1.msra.mxu0 0.0
    %1490 = vmatprep.subr.mxu0 0.0
    %1491 = vmatpush1.msra.mxu0 0.0
    %1492 = vmatprep.subr.mxu0 0.0
    %1493 = vmatpush1.msra.mxu0 0.0
    %1494 = vmatprep.subr.mxu0 0.0
    %1495 = vmatpush1.msra.mxu0 0.0
    %1496 = vmatprep.subr.mxu0 0.0
    %1497 = vmatpush1.msra.mxu0 0.0
    %1498 = vmatprep.subr.mxu0 0.0
    %1499 = vmatpush1.msra.mxu0 0.0
    %1500 = vmatprep.subr.mxu0 0.0
    %1501 = vmatpush1.msra.mxu0 0.0
    %1502 = vmatprep.subr.mxu0 0.0
    %1503 = vmatpush1.msra.mxu0 0.0
    %1504 = vmatprep.subr.mxu0 0.0
    %1505 = vmatpush1.msra.mxu0 0.0
    %1506 = vmatprep.subr.mxu0 0.0
    %1507 = vmatpush1.msra.mxu0 0.0
    %1508 = vmatprep.subr.mxu0 0.0
    %1509 = vmatpush1.msra.mxu0 0.0
    %1510 = vmatprep.subr.mxu0 0.0
    %1511 = vmatpush1.msra.mxu0 0.0
    %1512 = vmatprep.subr.mxu0 0.0
    %1513 = vmatpush1.msra.mxu0 0.0
    %1514 = vmatprep.subr.mxu0 0.0
    %1515 = vmatpush1.msra.mxu0 0.0
    %1516 = vmatprep.subr.mxu0 0.0
    %1517 = vmatpush1.msra.mxu0 0.0
    %1518 = vmatprep.mubr.f32.mxu0 0.0
    %1519 = vmatmul.mubr.f32.gmra.mrb[0].mxu0 %v1384
    %v1520 = vpop.f32.mrb[0].mxu0
    %v1521 = vadd.f32 0.0, %v1520
    %v1522 = vpop.f32.mrb[0].mxu0
    %v1523 = vadd.f32 0.0, %v1522
    %1524 = vdwg.mxu0
    %1525 = vmatprep.subr.mxu0 %v1393
    %1526 = vmatpush1.msra.mxu0 %v1392
    %1527 = vmatprep.subr.mxu0 %v1397
    %1528 = vmatpush1.msra.mxu0 %v1396
    %1529 = vmatprep.subr.mxu0 %v1401
    %1530 = vmatpush1.msra.mxu0 %v1400
    %1531 = vmatprep.subr.mxu0 %v1405
    %1532 = vmatpush1.msra.mxu0 %v1404
    %1533 = vmatprep.subr.mxu0 %v1409
    %1534 = vmatpush1.msra.mxu0 %v1408
    %1535 = vmatprep.subr.mxu0 %v1413
    %1536 = vmatpush1.msra.mxu0 %v1412
    %1537 = vmatprep.subr.mxu0 %v1417
    %1538 = vmatpush1.msra.mxu0 %v1416
    %1539 = vmatprep.subr.mxu0 %v1421
    %1540 = vmatpush1.msra.mxu0 %v1420
    %1541 = vmatprep.subr.mxu0 %v1425
    %1542 = vmatpush1.msra.mxu0 %v1424
    %1543 = vmatprep.subr.mxu0 %v1429
    %1544 = vmatpush1.msra.mxu0 %v1428
    %1545 = vmatprep.subr.mxu0 %v1433
    %1546 = vmatpush1.msra.mxu0 %v1432
    %1547 = vmatprep.subr.mxu0 %v1437
    %1548 = vmatpush1.msra.mxu0 %v1436
    %1549 = vmatprep.subr.mxu0 %v1441
    %1550 = vmatpush1.msra.mxu0 %v1440
    %1551 = vmatprep.subr.mxu0 %v1445
    %1552 = vmatpush1.msra.mxu0 %v1444
    %1553 = vmatprep.subr.mxu0 %v1449
    %1554 = vmatpush1.msra.mxu0 %v1448
    %1555 = vmatprep.subr.mxu0 %v1453
    %1556 = vmatpush1.msra.mxu0 %v1452
    %1557 = vmatprep.subr.mxu0 0.0
    %1558 = vmatpush1.msra.mxu0 0.0
    %1559 = vmatprep.subr.mxu0 0.0
    %1560 = vmatpush1.msra.mxu0 0.0
    %1561 = vmatprep.subr.mxu0 0.0
    %1562 = vmatpush1.msra.mxu0 0.0
    %1563 = vmatprep.subr.mxu0 0.0
    %1564 = vmatpush1.msra.mxu0 0.0
    %1565 = vmatprep.subr.mxu0 0.0
    %1566 = vmatpush1.msra.mxu0 0.0
    %1567 = vmatprep.subr.mxu0 0.0
    %1568 = vmatpush1.msra.mxu0 0.0
    %1569 = vmatprep.subr.mxu0 0.0
    %1570 = vmatpush1.msra.mxu0 0.0
    %1571 = vmatprep.subr.mxu0 0.0
    %1572 = vmatpush1.msra.mxu0 0.0
    %1573 = vmatprep.subr.mxu0 0.0
    %1574 = vmatpush1.msra.mxu0 0.0
    %1575 = vmatprep.subr.mxu0 0.0
    %1576 = vmatpush1.msra.mxu0 0.0
    %1577 = vmatprep.subr.mxu0 0.0
    %1578 = vmatpush1.msra.mxu0 0.0
    %1579 = vmatprep.subr.mxu0 0.0
    %1580 = vmatpush1.msra.mxu0 0.0
    %1581 = vmatprep.subr.mxu0 0.0
    %1582 = vmatpush1.msra.mxu0 0.0
    %1583 = vmatprep.subr.mxu0 0.0
    %1584 = vmatpush1.msra.mxu0 0.0
    %1585 = vmatprep.subr.mxu0 0.0
    %1586 = vmatpush1.msra.mxu0 0.0
    %1587 = vmatprep.subr.mxu0 0.0
    %1588 = vmatpush1.msra.mxu0 0.0
    %1589 = vmatprep.mubr.f32.mxu0 0.0
    %1590 = vmatmul.mubr.f32.gmra.mrb[0].mxu0 %v1384
    %v1591 = vpop.f32.mrb[0].mxu0
    %v1592 = vadd.f32 0.0, %v1591
    %v1593 = vpop.f32.mrb[0].mxu0
    %v1594 = vadd.f32 0.0, %v1593
    %1595 = vdwg.mxu0
    %v1596 = vadd.f32 %v1386, %v1521
    %v1597 = vadd.f32 %v1387, %v1523
    %v1598 = vadd.f32 %v1388, %v1592
    %v1599 = vadd.f32 %v1389, %v1594
    %v1600 = vxor.u32 %v1596, 2147483648
    %v1601 = vxor.u32 %v1597, 2147483648
    %v1602 = vxor.u32 %v1598, 2147483648
    %v1603 = vmul.f32 %v1600, 1.442695
    %v1604 = vpow.pop %v1603
    %v1605 = vmul.f32 %v1601, 1.442695
    %v1606 = vpow.pop %v1605
    %v1607 = vmul.f32 %v1602, 1.442695
    %v1608 = vpow.pop %v1607
    %v1609 = vadd.f32 %v1604, 1.0
    %v1610 = vadd.f32 %v1606, 1.0
    %v1611 = vadd.f32 %v1608, 1.0
    %v1612 = vrcp.pop %v1609
    %v1613 = vmul.f32 1.0, %v1612
    %v1614 = vrcp.pop %v1610
    %v1615 = vmul.f32 1.0, %v1614
    %v1616 = vrcp.pop %v1611
    %v1617 = vmul.f32 1.0, %v1616
    %v1618 = vtanh.pop %v1599
    %v1619 = vmul.f32 %v1615, %v1382
    %v1620 = vmul.f32 %v1613, %v1618
    %v1621 = vadd.f32 %v1619, %v1620
    %v1622 = vtanh.pop %v1621
    %v1623 = vmul.f32 %v1617, %v1622
    %1624 = vst [vmem:[#allocation5 + $0x18] sm:$0xff] %v1623
    %v1625 = vld [vmem:[#allocation4 + $0x80] sm:$0xff]
    %v1626 = vld [vmem:[#allocation4 + $0x88] sm:$0xff]
    %v1627 = vld [vmem:[#allocation4 + $0x90] sm:$0xff]
    %v1628 = vld [vmem:[#allocation4 + $0x98] sm:$0xff]
    %v1629 = vld [vmem:[#allocation6] sm:$0xff]
    %v1630 = vld [vmem:[#allocation6 + $0x8] sm:$0xff]
    %v1631 = vld [vmem:[#allocation6 + $0x10] sm:$0xff]
    %v1632 = vld [vmem:[#allocation6 + $0x18] sm:$0xff]
    %v1633 = vld [vmem:[#allocation6 + $0x20] sm:$0xff]
    %v1634 = vld [vmem:[#allocation6 + $0x28] sm:$0xff]
    %v1635 = vld [vmem:[#allocation6 + $0x30] sm:$0xff]
    %v1636 = vld [vmem:[#allocation6 + $0x38] sm:$0xff]
    %v1637 = vld [vmem:[#allocation6 + $0x40] sm:$0xff]
    %v1638 = vld [vmem:[#allocation6 + $0x48] sm:$0xff]
    %v1639 = vld [vmem:[#allocation6 + $0x50] sm:$0xff]
    %v1640 = vld [vmem:[#allocation6 + $0x58] sm:$0xff]
    %v1641 = vld [vmem:[#allocation6 + $0x60] sm:$0xff]
    %v1642 = vld [vmem:[#allocation6 + $0x68] sm:$0xff]
    %v1643 = vld [vmem:[#allocation6 + $0x70] sm:$0xff]
    %v1644 = vld [vmem:[#allocation6 + $0x78] sm:$0xff]
    %v1645 = vld [vmem:[#allocation6 + $0x80] sm:$0xff]
    %v1646 = vld [vmem:[#allocation6 + $0x88] sm:$0xff]
    %v1647 = vld [vmem:[#allocation6 + $0x90] sm:$0xff]
    %v1648 = vld [vmem:[#allocation6 + $0x98] sm:$0xff]
    %v1649 = vld [vmem:[#allocation6 + $0xa0] sm:$0xff]
    %v1650 = vld [vmem:[#allocation6 + $0xa8] sm:$0xff]
    %v1651 = vld [vmem:[#allocation6 + $0xb0] sm:$0xff]
    %v1652 = vld [vmem:[#allocation6 + $0xb8] sm:$0xff]
    %v1653 = vld [vmem:[#allocation6 + $0xc0] sm:$0xff]
    %v1654 = vld [vmem:[#allocation6 + $0xc8] sm:$0xff]
    %v1655 = vld [vmem:[#allocation6 + $0xd0] sm:$0xff]
    %v1656 = vld [vmem:[#allocation6 + $0xd8] sm:$0xff]
    %v1657 = vld [vmem:[#allocation6 + $0xe0] sm:$0xff]
    %v1658 = vld [vmem:[#allocation6 + $0xe8] sm:$0xff]
    %v1659 = vld [vmem:[#allocation6 + $0xf0] sm:$0xff]
    %v1660 = vld [vmem:[#allocation6 + $0xf8] sm:$0xff]
    %v1661 = vld [vmem:[#allocation6 + $0x100] sm:$0xff]
    %v1662 = vld [vmem:[#allocation6 + $0x108] sm:$0xff]
    %v1663 = vld [vmem:[#allocation6 + $0x110] sm:$0xff]
    %v1664 = vld [vmem:[#allocation6 + $0x118] sm:$0xff]
    %v1665 = vld [vmem:[#allocation6 + $0x120] sm:$0xff]
    %v1666 = vld [vmem:[#allocation6 + $0x128] sm:$0xff]
    %v1667 = vld [vmem:[#allocation6 + $0x130] sm:$0xff]
    %v1668 = vld [vmem:[#allocation6 + $0x138] sm:$0xff]
    %v1669 = vld [vmem:[#allocation6 + $0x140] sm:$0xff]
    %v1670 = vld [vmem:[#allocation6 + $0x148] sm:$0xff]
    %v1671 = vld [vmem:[#allocation6 + $0x150] sm:$0xff]
    %v1672 = vld [vmem:[#allocation6 + $0x158] sm:$0xff]
    %v1673 = vld [vmem:[#allocation6 + $0x160] sm:$0xff]
    %v1674 = vld [vmem:[#allocation6 + $0x168] sm:$0xff]
    %v1675 = vld [vmem:[#allocation6 + $0x170] sm:$0xff]
    %v1676 = vld [vmem:[#allocation6 + $0x178] sm:$0xff]
    %v1677 = vld [vmem:[#allocation6 + $0x180] sm:$0xff]
    %v1678 = vld [vmem:[#allocation6 + $0x188] sm:$0xff]
    %v1679 = vld [vmem:[#allocation6 + $0x190] sm:$0xff]
    %v1680 = vld [vmem:[#allocation6 + $0x198] sm:$0xff]
    %v1681 = vld [vmem:[#allocation6 + $0x1a0] sm:$0xff]
    %v1682 = vld [vmem:[#allocation6 + $0x1a8] sm:$0xff]
    %v1683 = vld [vmem:[#allocation6 + $0x1b0] sm:$0xff]
    %v1684 = vld [vmem:[#allocation6 + $0x1b8] sm:$0xff]
    %v1685 = vld [vmem:[#allocation6 + $0x1c0] sm:$0xff]
    %v1686 = vld [vmem:[#allocation6 + $0x1c8] sm:$0xff]
    %v1687 = vld [vmem:[#allocation6 + $0x1d0] sm:$0xff]
    %v1688 = vld [vmem:[#allocation6 + $0x1d8] sm:$0xff]
    %v1689 = vld [vmem:[#allocation6 + $0x1e0] sm:$0xff]
    %v1690 = vld [vmem:[#allocation6 + $0x1e8] sm:$0xff]
    %v1691 = vld [vmem:[#allocation6 + $0x1f0] sm:$0xff]
    %v1692 = vld [vmem:[#allocation6 + $0x1f8] sm:$0xff]
    %1693 = vmatprep.subr.mxu0 %v1630
    %1694 = vmatpush1.msra.mxu0 %v1629
    %1695 = vmatprep.subr.mxu0 %v1634
    %1696 = vmatpush1.msra.mxu0 %v1633
    %1697 = vmatprep.subr.mxu0 %v1638
    %1698 = vmatpush1.msra.mxu0 %v1637
    %1699 = vmatprep.subr.mxu0 %v1642
    %1700 = vmatpush1.msra.mxu0 %v1641
    %1701 = vmatprep.subr.mxu0 %v1646
    %1702 = vmatpush1.msra.mxu0 %v1645
    %1703 = vmatprep.subr.mxu0 %v1650
    %1704 = vmatpush1.msra.mxu0 %v1649
    %1705 = vmatprep.subr.mxu0 %v1654
    %1706 = vmatpush1.msra.mxu0 %v1653
    %1707 = vmatprep.subr.mxu0 %v1658
    %1708 = vmatpush1.msra.mxu0 %v1657
    %1709 = vmatprep.subr.mxu0 %v1662
    %1710 = vmatpush1.msra.mxu0 %v1661
    %1711 = vmatprep.subr.mxu0 %v1666
    %1712 = vmatpush1.msra.mxu0 %v1665
    %1713 = vmatprep.subr.mxu0 %v1670
    %1714 = vmatpush1.msra.mxu0 %v1669
    %1715 = vmatprep.subr.mxu0 %v1674
    %1716 = vmatpush1.msra.mxu0 %v1673
    %1717 = vmatprep.subr.mxu0 %v1678
    %1718 = vmatpush1.msra.mxu0 %v1677
    %1719 = vmatprep.subr.mxu0 %v1682
    %1720 = vmatpush1.msra.mxu0 %v1681
    %1721 = vmatprep.subr.mxu0 %v1686
    %1722 = vmatpush1.msra.mxu0 %v1685
    %1723 = vmatprep.subr.mxu0 %v1690
    %1724 = vmatpush1.msra.mxu0 %v1689
    %1725 = vmatprep.subr.mxu0 0.0
    %1726 = vmatpush1.msra.mxu0 0.0
    %1727 = vmatprep.subr.mxu0 0.0
    %1728 = vmatpush1.msra.mxu0 0.0
    %1729 = vmatprep.subr.mxu0 0.0
    %1730 = vmatpush1.msra.mxu0 0.0
    %1731 = vmatprep.subr.mxu0 0.0
    %1732 = vmatpush1.msra.mxu0 0.0
    %1733 = vmatprep.subr.mxu0 0.0
    %1734 = vmatpush1.msra.mxu0 0.0
    %1735 = vmatprep.subr.mxu0 0.0
    %1736 = vmatpush1.msra.mxu0 0.0
    %1737 = vmatprep.subr.mxu0 0.0
    %1738 = vmatpush1.msra.mxu0 0.0
    %1739 = vmatprep.subr.mxu0 0.0
    %1740 = vmatpush1.msra.mxu0 0.0
    %1741 = vmatprep.subr.mxu0 0.0
    %1742 = vmatpush1.msra.mxu0 0.0
    %1743 = vmatprep.subr.mxu0 0.0
    %1744 = vmatpush1.msra.mxu0 0.0
    %1745 = vmatprep.subr.mxu0 0.0
    %1746 = vmatpush1.msra.mxu0 0.0
    %1747 = vmatprep.subr.mxu0 0.0
    %1748 = vmatpush1.msra.mxu0 0.0
    %1749 = vmatprep.subr.mxu0 0.0
    %1750 = vmatpush1.msra.mxu0 0.0
    %1751 = vmatprep.subr.mxu0 0.0
    %1752 = vmatpush1.msra.mxu0 0.0
    %1753 = vmatprep.subr.mxu0 0.0
    %1754 = vmatpush1.msra.mxu0 0.0
    %1755 = vmatprep.subr.mxu0 0.0
    %1756 = vmatpush1.msra.mxu0 0.0
    %1757 = vmatprep.mubr.f32.mxu0 0.0
    %1758 = vmatmul.mubr.f32.gmra.mrb[0].mxu0 %v1623
    %v1759 = vpop.f32.mrb[0].mxu0
    %v1760 = vadd.f32 0.0, %v1759
    %v1761 = vpop.f32.mrb[0].mxu0
    %v1762 = vadd.f32 0.0, %v1761
    %1763 = vdwg.mxu0
    %1764 = vmatprep.subr.mxu0 %v1632
    %1765 = vmatpush1.msra.mxu0 %v1631
    %1766 = vmatprep.subr.mxu0 %v1636
    %1767 = vmatpush1.msra.mxu0 %v1635
    %1768 = vmatprep.subr.mxu0 %v1640
    %1769 = vmatpush1.msra.mxu0 %v1639
    %1770 = vmatprep.subr.mxu0 %v1644
    %1771 = vmatpush1.msra.mxu0 %v1643
    %1772 = vmatprep.subr.mxu0 %v1648
    %1773 = vmatpush1.msra.mxu0 %v1647
    %1774 = vmatprep.subr.mxu0 %v1652
    %1775 = vmatpush1.msra.mxu0 %v1651
    %1776 = vmatprep.subr.mxu0 %v1656
    %1777 = vmatpush1.msra.mxu0 %v1655
    %1778 = vmatprep.subr.mxu0 %v1660
    %1779 = vmatpush1.msra.mxu0 %v1659
    %1780 = vmatprep.subr.mxu0 %v1664
    %1781 = vmatpush1.msra.mxu0 %v1663
    %1782 = vmatprep.subr.mxu0 %v1668
    %1783 = vmatpush1.msra.mxu0 %v1667
    %1784 = vmatprep.subr.mxu0 %v1672
    %1785 = vmatpush1.msra.mxu0 %v1671
    %1786 = vmatprep.subr.mxu0 %v1676
    %1787 = vmatpush1.msra.mxu0 %v1675
    %1788 = vmatprep.subr.mxu0 %v1680
    %1789 = vmatpush1.msra.mxu0 %v1679
    %1790 = vmatprep.subr.mxu0 %v1684
    %1791 = vmatpush1.msra.mxu0 %v1683
    %1792 = vmatprep.subr.mxu0 %v1688
    %1793 = vmatpush1.msra.mxu0 %v1687
    %1794 = vmatprep.subr.mxu0 %v1692
    %1795 = vmatpush1.msra.mxu0 %v1691
    %1796 = vmatprep.subr.mxu0 0.0
    %1797 = vmatpush1.msra.mxu0 0.0
    %1798 = vmatprep.subr.mxu0 0.0
    %1799 = vmatpush1.msra.mxu0 0.0
    %1800 = vmatprep.subr.mxu0 0.0
    %1801 = vmatpush1.msra.mxu0 0.0
    %1802 = vmatprep.subr.mxu0 0.0
    %1803 = vmatpush1.msra.mxu0 0.0
    %1804 = vmatprep.subr.mxu0 0.0
    %1805 = vmatpush1.msra.mxu0 0.0
    %1806 = vmatprep.subr.mxu0 0.0
    %1807 = vmatpush1.msra.mxu0 0.0
    %1808 = vmatprep.subr.mxu0 0.0
    %1809 = vmatpush1.msra.mxu0 0.0
    %1810 = vmatprep.subr.mxu0 0.0
    %1811 = vmatpush1.msra.mxu0 0.0
    %1812 = vmatprep.subr.mxu0 0.0
    %1813 = vmatpush1.msra.mxu0 0.0
    %1814 = vmatprep.subr.mxu0 0.0
    %1815 = vmatpush1.msra.mxu0 0.0
    %1816 = vmatprep.subr.mxu0 0.0
    %1817 = vmatpush1.msra.mxu0 0.0
    %1818 = vmatprep.subr.mxu0 0.0
    %1819 = vmatpush1.msra.mxu0 0.0
    %1820 = vmatprep.subr.mxu0 0.0
    %1821 = vmatpush1.msra.mxu0 0.0
    %1822 = vmatprep.subr.mxu0 0.0
    %1823 = vmatpush1.msra.mxu0 0.0
    %1824 = vmatprep.subr.mxu0 0.0
    %1825 = vmatpush1.msra.mxu0 0.0
    %1826 = vmatprep.subr.mxu0 0.0
    %1827 = vmatpush1.msra.mxu0 0.0
    %1828 = vmatprep.mubr.f32.mxu0 0.0
    %1829 = vmatmul.mubr.f32.gmra.mrb[0].mxu0 %v1623
    %v1830 = vpop.f32.mrb[0].mxu0
    %v1831 = vadd.f32 0.0, %v1830
    %v1832 = vpop.f32.mrb[0].mxu0
    %v1833 = vadd.f32 0.0, %v1832
    %1834 = vdwg.mxu0
    %v1835 = vadd.f32 %v1625, %v1760
    %v1836 = vadd.f32 %v1626, %v1762
    %v1837 = vadd.f32 %v1627, %v1831
    %v1838 = vadd.f32 %v1628, %v1833
    %v1839 = vxor.u32 %v1835, 2147483648
    %v1840 = vxor.u32 %v1836, 2147483648
    %v1841 = vxor.u32 %v1837, 2147483648
    %v1842 = vmul.f32 %v1839, 1.442695
    %v1843 = vpow.pop %v1842
    %v1844 = vmul.f32 %v1840, 1.442695
    %v1845 = vpow.pop %v1844
    %v1846 = vmul.f32 %v1841, 1.442695
    %v1847 = vpow.pop %v1846
    %v1848 = vadd.f32 %v1843, 1.0
    %v1849 = vadd.f32 %v1845, 1.0
    %v1850 = vadd.f32 %v1847, 1.0
    %v1851 = vrcp.pop %v1848
    %v1852 = vmul.f32 1.0, %v1851
    %v1853 = vrcp.pop %v1849
    %v1854 = vmul.f32 1.0, %v1853
    %v1855 = vrcp.pop %v1850
    %v1856 = vmul.f32 1.0, %v1855
    %v1857 = vtanh.pop %v1838
    %v1858 = vmul.f32 %v1854, %v1621
    %v1859 = vmul.f32 %v1852, %v1857
    %v1860 = vadd.f32 %v1858, %v1859
    %v1861 = vtanh.pop %v1860
    %v1862 = vmul.f32 %v1856, %v1861
    %1863 = vst [vmem:[#allocation5 + $0x20] sm:$0xff] %v1862
    %v1864 = vld [vmem:[#allocation4 + $0xa0] sm:$0xff]
    %v1865 = vld [vmem:[#allocation4 + $0xa8] sm:$0xff]
    %v1866 = vld [vmem:[#allocation4 + $0xb0] sm:$0xff]
    %v1867 = vld [vmem:[#allocation4 + $0xb8] sm:$0xff]
    %v1868 = vld [vmem:[#allocation6] sm:$0xff]
    %v1869 = vld [vmem:[#allocation6 + $0x8] sm:$0xff]
    %v1870 = vld [vmem:[#allocation6 + $0x10] sm:$0xff]
    %v1871 = vld [vmem:[#allocation6 + $0x18] sm:$0xff]
    %v1872 = vld [vmem:[#allocation6 + $0x20] sm:$0xff]
    %v1873 = vld [vmem:[#allocation6 + $0x28] sm:$0xff]
    %v1874 = vld [vmem:[#allocation6 + $0x30] sm:$0xff]
    %v1875 = vld [vmem:[#allocation6 + $0x38] sm:$0xff]
    %v1876 = vld [vmem:[#allocation6 + $0x40] sm:$0xff]
    %v1877 = vld [vmem:[#allocation6 + $0x48] sm:$0xff]
    %v1878 = vld [vmem:[#allocation6 + $0x50] sm:$0xff]
    %v1879 = vld [vmem:[#allocation6 + $0x58] sm:$0xff]
    %v1880 = vld [vmem:[#allocation6 + $0x60] sm:$0xff]
    %v1881 = vld [vmem:[#allocation6 + $0x68] sm:$0xff]
    %v1882 = vld [vmem:[#allocation6 + $0x70] sm:$0xff]
    %v1883 = vld [vmem:[#allocation6 + $0x78] sm:$0xff]
    %v1884 = vld [vmem:[#allocation6 + $0x80] sm:$0xff]
    %v1885 = vld [vmem:[#allocation6 + $0x88] sm:$0xff]
    %v1886 = vld [vmem:[#allocation6 + $0x90] sm:$0xff]
    %v1887 = vld [vmem:[#allocation6 + $0x98] sm:$0xff]
    %v1888 = vld [vmem:[#allocation6 + $0xa0] sm:$0xff]
    %v1889 = vld [vmem:[#allocation6 + $0xa8] sm:$0xff]
    %v1890 = vld [vmem:[#allocation6 + $0xb0] sm:$0xff]
    %v1891 = vld [vmem:[#allocation6 + $0xb8] sm:$0xff]
    %v1892 = vld [vmem:[#allocation6 + $0xc0] sm:$0xff]
    %v1893 = vld [vmem:[#allocation6 + $0xc8] sm:$0xff]
    %v1894 = vld [vmem:[#allocation6 + $0xd0] sm:$0xff]
    %v1895 = vld [vmem:[#allocation6 + $0xd8] sm:$0xff]
    %v1896 = vld [vmem:[#allocation6 + $0xe0] sm:$0xff]
    %v1897 = vld [vmem:[#allocation6 + $0xe8] sm:$0xff]
    %v1898 = vld [vmem:[#allocation6 + $0xf0] sm:$0xff]
    %v1899 = vld [vmem:[#allocation6 + $0xf8] sm:$0xff]
    %v1900 = vld [vmem:[#allocation6 + $0x100] sm:$0xff]
    %v1901 = vld [vmem:[#allocation6 + $0x108] sm:$0xff]
    %v1902 = vld [vmem:[#allocation6 + $0x110] sm:$0xff]
    %v1903 = vld [vmem:[#allocation6 + $0x118] sm:$0xff]
    %v1904 = vld [vmem:[#allocation6 + $0x120] sm:$0xff]
    %v1905 = vld [vmem:[#allocation6 + $0x128] sm:$0xff]
    %v1906 = vld [vmem:[#allocation6 + $0x130] sm:$0xff]
    %v1907 = vld [vmem:[#allocation6 + $0x138] sm:$0xff]
    %v1908 = vld [vmem:[#allocation6 + $0x140] sm:$0xff]
    %v1909 = vld [vmem:[#allocation6 + $0x148] sm:$0xff]
    %v1910 = vld [vmem:[#allocation6 + $0x150] sm:$0xff]
    %v1911 = vld [vmem:[#allocation6 + $0x158] sm:$0xff]
    %v1912 = vld [vmem:[#allocation6 + $0x160] sm:$0xff]
    %v1913 = vld [vmem:[#allocation6 + $0x168] sm:$0xff]
    %v1914 = vld [vmem:[#allocation6 + $0x170] sm:$0xff]
    %v1915 = vld [vmem:[#allocation6 + $0x178] sm:$0xff]
    %v1916 = vld [vmem:[#allocation6 + $0x180] sm:$0xff]
    %v1917 = vld [vmem:[#allocation6 + $0x188] sm:$0xff]
    %v1918 = vld [vmem:[#allocation6 + $0x190] sm:$0xff]
    %v1919 = vld [vmem:[#allocation6 + $0x198] sm:$0xff]
    %v1920 = vld [vmem:[#allocation6 + $0x1a0] sm:$0xff]
    %v1921 = vld [vmem:[#allocation6 + $0x1a8] sm:$0xff]
    %v1922 = vld [vmem:[#allocation6 + $0x1b0] sm:$0xff]
    %v1923 = vld [vmem:[#allocation6 + $0x1b8] sm:$0xff]
    %v1924 = vld [vmem:[#allocation6 + $0x1c0] sm:$0xff]
    %v1925 = vld [vmem:[#allocation6 + $0x1c8] sm:$0xff]
    %v1926 = vld [vmem:[#allocation6 + $0x1d0] sm:$0xff]
    %v1927 = vld [vmem:[#allocation6 + $0x1d8] sm:$0xff]
    %v1928 = vld [vmem:[#allocation6 + $0x1e0] sm:$0xff]
    %v1929 = vld [vmem:[#allocation6 + $0x1e8] sm:$0xff]
    %v1930 = vld [vmem:[#allocation6 + $0x1f0] sm:$0xff]
    %v1931 = vld [vmem:[#allocation6 + $0x1f8] sm:$0xff]
    %1932 = vmatprep.subr.mxu0 %v1869
    %1933 = vmatpush1.msra.mxu0 %v1868
    %1934 = vmatprep.subr.mxu0 %v1873
    %1935 = vmatpush1.msra.mxu0 %v1872
    %1936 = vmatprep.subr.mxu0 %v1877
    %1937 = vmatpush1.msra.mxu0 %v1876
    %1938 = vmatprep.subr.mxu0 %v1881
    %1939 = vmatpush1.msra.mxu0 %v1880
    %1940 = vmatprep.subr.mxu0 %v1885
    %1941 = vmatpush1.msra.mxu0 %v1884
    %1942 = vmatprep.subr.mxu0 %v1889
    %1943 = vmatpush1.msra.mxu0 %v1888
    %1944 = vmatprep.subr.mxu0 %v1893
    %1945 = vmatpush1.msra.mxu0 %v1892
    %1946 = vmatprep.subr.mxu0 %v1897
    %1947 = vmatpush1.msra.mxu0 %v1896
    %1948 = vmatprep.subr.mxu0 %v1901
    %1949 = vmatpush1.msra.mxu0 %v1900
    %1950 = vmatprep.subr.mxu0 %v1905
    %1951 = vmatpush1.msra.mxu0 %v1904
    %1952 = vmatprep.subr.mxu0 %v1909
    %1953 = vmatpush1.msra.mxu0 %v1908
    %1954 = vmatprep.subr.mxu0 %v1913
    %1955 = vmatpush1.msra.mxu0 %v1912
    %1956 = vmatprep.subr.mxu0 %v1917
    %1957 = vmatpush1.msra.mxu0 %v1916
    %1958 = vmatprep.subr.mxu0 %v1921
    %1959 = vmatpush1.msra.mxu0 %v1920
    %1960 = vmatprep.subr.mxu0 %v1925
    %1961 = vmatpush1.msra.mxu0 %v1924
    %1962 = vmatprep.subr.mxu0 %v1929
    %1963 = vmatpush1.msra.mxu0 %v1928
    %1964 = vmatprep.subr.mxu0 0.0
    %1965 = vmatpush1.msra.mxu0 0.0
    %1966 = vmatprep.subr.mxu0 0.0
    %1967 = vmatpush1.msra.mxu0 0.0
    %1968 = vmatprep.subr.mxu0 0.0
    %1969 = vmatpush1.msra.mxu0 0.0
    %1970 = vmatprep.subr.mxu0 0.0
    %1971 = vmatpush1.msra.mxu0 0.0
    %1972 = vmatprep.subr.mxu0 0.0
    %1973 = vmatpush1.msra.mxu0 0.0
    %1974 = vmatprep.subr.mxu0 0.0
    %1975 = vmatpush1.msra.mxu0 0.0
    %1976 = vmatprep.subr.mxu0 0.0
    %1977 = vmatpush1.msra.mxu0 0.0
    %1978 = vmatprep.subr.mxu0 0.0
    %1979 = vmatpush1.msra.mxu0 0.0
    %1980 = vmatprep.subr.mxu0 0.0
    %1981 = vmatpush1.msra.mxu0 0.0
    %1982 = vmatprep.subr.mxu0 0.0
    %1983 = vmatpush1.msra.mxu0 0.0
    %1984 = vmatprep.subr.mxu0 0.0
    %1985 = vmatpush1.msra.mxu0 0.0
    %1986 = vmatprep.subr.mxu0 0.0
    %1987 = vmatpush1.msra.mxu0 0.0
    %1988 = vmatprep.subr.mxu0 0.0
    %1989 = vmatpush1.msra.mxu0 0.0
    %1990 = vmatprep.subr.mxu0 0.0
    %1991 = vmatpush1.msra.mxu0 0.0
    %1992 = vmatprep.subr.mxu0 0.0
    %1993 = vmatpush1.msra.mxu0 0.0
    %1994 = vmatprep.subr.mxu0 0.0
    %1995 = vmatpush1.msra.mxu0 0.0
    %1996 = vmatprep.mubr.f32.mxu0 0.0
    %1997 = vmatmul.mubr.f32.gmra.mrb[0].mxu0 %v1862
    %v1998 = vpop.f32.mrb[0].mxu0
    %v1999 = vadd.f32 0.0, %v1998
    %v2000 = vpop.f32.mrb[0].mxu0
    %v2001 = vadd.f32 0.0, %v2000
    %2002 = vdwg.mxu0
    %2003 = vmatprep.subr.mxu0 %v1871
    %2004 = vmatpush1.msra.mxu0 %v1870
    %2005 = vmatprep.subr.mxu0 %v1875
    %2006 = vmatpush1.msra.mxu0 %v1874
    %2007 = vmatprep.subr.mxu0 %v1879
    %2008 = vmatpush1.msra.mxu0 %v1878
    %2009 = vmatprep.subr.mxu0 %v1883
    %2010 = vmatpush1.msra.mxu0 %v1882
    %2011 = vmatprep.subr.mxu0 %v1887
    %2012 = vmatpush1.msra.mxu0 %v1886
    %2013 = vmatprep.subr.mxu0 %v1891
    %2014 = vmatpush1.msra.mxu0 %v1890
    %2015 = vmatprep.subr.mxu0 %v1895
    %2016 = vmatpush1.msra.mxu0 %v1894
    %2017 = vmatprep.subr.mxu0 %v1899
    %2018 = vmatpush1.msra.mxu0 %v1898
    %2019 = vmatprep.subr.mxu0 %v1903
    %2020 = vmatpush1.msra.mxu0 %v1902
    %2021 = vmatprep.subr.mxu0 %v1907
    %2022 = vmatpush1.msra.mxu0 %v1906
    %2023 = vmatprep.subr.mxu0 %v1911
    %2024 = vmatpush1.msra.mxu0 %v1910
    %2025 = vmatprep.subr.mxu0 %v1915
    %2026 = vmatpush1.msra.mxu0 %v1914
    %2027 = vmatprep.subr.mxu0 %v1919
    %2028 = vmatpush1.msra.mxu0 %v1918
    %2029 = vmatprep.subr.mxu0 %v1923
    %2030 = vmatpush1.msra.mxu0 %v1922
    %2031 = vmatprep.subr.mxu0 %v1927
    %2032 = vmatpush1.msra.mxu0 %v1926
    %2033 = vmatprep.subr.mxu0 %v1931
    %2034 = vmatpush1.msra.mxu0 %v1930
    %2035 = vmatprep.subr.mxu0 0.0
    %2036 = vmatpush1.msra.mxu0 0.0
    %2037 = vmatprep.subr.mxu0 0.0
    %2038 = vmatpush1.msra.mxu0 0.0
    %2039 = vmatprep.subr.mxu0 0.0
    %2040 = vmatpush1.msra.mxu0 0.0
    %2041 = vmatprep.subr.mxu0 0.0
    %2042 = vmatpush1.msra.mxu0 0.0
    %2043 = vmatprep.subr.mxu0 0.0
    %2044 = vmatpush1.msra.mxu0 0.0
    %2045 = vmatprep.subr.mxu0 0.0
    %2046 = vmatpush1.msra.mxu0 0.0
    %2047 = vmatprep.subr.mxu0 0.0
    %2048 = vmatpush1.msra.mxu0 0.0
    %2049 = vmatprep.subr.mxu0 0.0
    %2050 = vmatpush1.msra.mxu0 0.0
    %2051 = vmatprep.subr.mxu0 0.0
    %2052 = vmatpush1.msra.mxu0 0.0
    %2053 = vmatprep.subr.mxu0 0.0
    %2054 = vmatpush1.msra.mxu0 0.0
    %2055 = vmatprep.subr.mxu0 0.0
    %2056 = vmatpush1.msra.mxu0 0.0
    %2057 = vmatprep.subr.mxu0 0.0
    %2058 = vmatpush1.msra.mxu0 0.0
    %2059 = vmatprep.subr.mxu0 0.0
    %2060 = vmatpush1.msra.mxu0 0.0
    %2061 = vmatprep.subr.mxu0 0.0
    %2062 = vmatpush1.msra.mxu0 0.0
    %2063 = vmatprep.subr.mxu0 0.0
    %2064 = vmatpush1.msra.mxu0 0.0
    %2065 = vmatprep.subr.mxu0 0.0
    %2066 = vmatpush1.msra.mxu0 0.0
    %2067 = vmatprep.mubr.f32.mxu0 0.0
    %2068 = vmatmul.mubr.f32.gmra.mrb[0].mxu0 %v1862
    %v2069 = vpop.f32.mrb[0].mxu0
    %v2070 = vadd.f32 0.0, %v2069
    %v2071 = vpop.f32.mrb[0].mxu0
    %v2072 = vadd.f32 0.0, %v2071
    %2073 = vdwg.mxu0
    %v2074 = vadd.f32 %v1864, %v1999
    %v2075 = vadd.f32 %v1865, %v2001
    %v2076 = vadd.f32 %v1866, %v2070
    %v2077 = vadd.f32 %v1867, %v2072
    %v2078 = vxor.u32 %v2074, 2147483648
    %v2079 = vxor.u32 %v2075, 2147483648
    %v2080 = vxor.u32 %v2076, 2147483648
    %v2081 = vmul.f32 %v2078, 1.442695
    %v2082 = vpow.pop %v2081
    %v2083 = vmul.f32 %v2079, 1.442695
    %v2084 = vpow.pop %v2083
    %v2085 = vmul.f32 %v2080, 1.442695
    %v2086 = vpow.pop %v2085
    %v2087 = vadd.f32 %v2082, 1.0
    %v2088 = vadd.f32 %v2084, 1.0
    %v2089 = vadd.f32 %v2086, 1.0
    %v2090 = vrcp.pop %v2087
    %v2091 = vmul.f32 1.0, %v2090
    %v2092 = vrcp.pop %v2088
    %v2093 = vmul.f32 1.0, %v2092
    %v2094 = vrcp.pop %v2089
    %v2095 = vmul.f32 1.0, %v2094
    %v2096 = vtanh.pop %v2077
    %v2097 = vmul.f32 %v2093, %v1860
    %v2098 = vmul.f32 %v2091, %v2096
    %v2099 = vadd.f32 %v2097, %v2098
    %v2100 = vtanh.pop %v2099
    %v2101 = vmul.f32 %v2095, %v2100
    %2102 = vst [vmem:[#allocation5 + $0x28] sm:$0xff] %v2101
    %v2103 = vld [vmem:[#allocation4 + $0xc0] sm:$0xff]
    %v2104 = vld [vmem:[#allocation4 + $0xc8] sm:$0xff]
    %v2105 = vld [vmem:[#allocation4 + $0xd0] sm:$0xff]
    %v2106 = vld [vmem:[#allocation4 + $0xd8] sm:$0xff]
    %v2107 = vld [vmem:[#allocation6] sm:$0xff]
    %v2108 = vld [vmem:[#allocation6 + $0x8] sm:$0xff]
    %v2109 = vld [vmem:[#allocation6 + $0x10] sm:$0xff]
    %v2110 = vld [vmem:[#allocation6 + $0x18] sm:$0xff]
    %v2111 = vld [vmem:[#allocation6 + $0x20] sm:$0xff]
    %v2112 = vld [vmem:[#allocation6 + $0x28] sm:$0xff]
    %v2113 = vld [vmem:[#allocation6 + $0x30] sm:$0xff]
    %v2114 = vld [vmem:[#allocation6 + $0x38] sm:$0xff]
    %v2115 = vld [vmem:[#allocation6 + $0x40] sm:$0xff]
    %v2116 = vld [vmem:[#allocation6 + $0x48] sm:$0xff]
    %v2117 = vld [vmem:[#allocation6 + $0x50] sm:$0xff]
    %v2118 = vld [vmem:[#allocation6 + $0x58] sm:$0xff]
    %v2119 = vld [vmem:[#allocation6 + $0x60] sm:$0xff]
    %v2120 = vld [vmem:[#allocation6 + $0x68] sm:$0xff]
    %v2121 = vld [vmem:[#allocation6 + $0x70] sm:$0xff]
    %v2122 = vld [vmem:[#allocation6 + $0x78] sm:$0xff]
    %v2123 = vld [vmem:[#allocation6 + $0x80] sm:$0xff]
    %v2124 = vld [vmem:[#allocation6 + $0x88] sm:$0xff]
    %v2125 = vld [vmem:[#allocation6 + $0x90] sm:$0xff]
    %v2126 = vld [vmem:[#allocation6 + $0x98] sm:$0xff]
    %v2127 = vld [vmem:[#allocation6 + $0xa0] sm:$0xff]
    %v2128 = vld [vmem:[#allocation6 + $0xa8] sm:$0xff]
    %v2129 = vld [vmem:[#allocation6 + $0xb0] sm:$0xff]
    %v2130 = vld [vmem:[#allocation6 + $0xb8] sm:$0xff]
    %v2131 = vld [vmem:[#allocation6 + $0xc0] sm:$0xff]
    %v2132 = vld [vmem:[#allocation6 + $0xc8] sm:$0xff]
    %v2133 = vld [vmem:[#allocation6 + $0xd0] sm:$0xff]
    %v2134 = vld [vmem:[#allocation6 + $0xd8] sm:$0xff]
    %v2135 = vld [vmem:[#allocation6 + $0xe0] sm:$0xff]
    %v2136 = vld [vmem:[#allocation6 + $0xe8] sm:$0xff]
    %v2137 = vld [vmem:[#allocation6 + $0xf0] sm:$0xff]
    %v2138 = vld [vmem:[#allocation6 + $0xf8] sm:$0xff]
    %v2139 = vld [vmem:[#allocation6 + $0x100] sm:$0xff]
    %v2140 = vld [vmem:[#allocation6 + $0x108] sm:$0xff]
    %v2141 = vld [vmem:[#allocation6 + $0x110] sm:$0xff]
    %v2142 = vld [vmem:[#allocation6 + $0x118] sm:$0xff]
    %v2143 = vld [vmem:[#allocation6 + $0x120] sm:$0xff]
    %v2144 = vld [vmem:[#allocation6 + $0x128] sm:$0xff]
    %v2145 = vld [vmem:[#allocation6 + $0x130] sm:$0xff]
    %v2146 = vld [vmem:[#allocation6 + $0x138] sm:$0xff]
    %v2147 = vld [vmem:[#allocation6 + $0x140] sm:$0xff]
    %v2148 = vld [vmem:[#allocation6 + $0x148] sm:$0xff]
    %v2149 = vld [vmem:[#allocation6 + $0x150] sm:$0xff]
    %v2150 = vld [vmem:[#allocation6 + $0x158] sm:$0xff]
    %v2151 = vld [vmem:[#allocation6 + $0x160] sm:$0xff]
    %v2152 = vld [vmem:[#allocation6 + $0x168] sm:$0xff]
    %v2153 = vld [vmem:[#allocation6 + $0x170] sm:$0xff]
    %v2154 = vld [vmem:[#allocation6 + $0x178] sm:$0xff]
    %v2155 = vld [vmem:[#allocation6 + $0x180] sm:$0xff]
    %v2156 = vld [vmem:[#allocation6 + $0x188] sm:$0xff]
    %v2157 = vld [vmem:[#allocation6 + $0x190] sm:$0xff]
    %v2158 = vld [vmem:[#allocation6 + $0x198] sm:$0xff]
    %v2159 = vld [vmem:[#allocation6 + $0x1a0] sm:$0xff]
    %v2160 = vld [vmem:[#allocation6 + $0x1a8] sm:$0xff]
    %v2161 = vld [vmem:[#allocation6 + $0x1b0] sm:$0xff]
    %v2162 = vld [vmem:[#allocation6 + $0x1b8] sm:$0xff]
    %v2163 = vld [vmem:[#allocation6 + $0x1c0] sm:$0xff]
    %v2164 = vld [vmem:[#allocation6 + $0x1c8] sm:$0xff]
    %v2165 = vld [vmem:[#allocation6 + $0x1d0] sm:$0xff]
    %v2166 = vld [vmem:[#allocation6 + $0x1d8] sm:$0xff]
    %v2167 = vld [vmem:[#allocation6 + $0x1e0] sm:$0xff]
    %v2168 = vld [vmem:[#allocation6 + $0x1e8] sm:$0xff]
    %v2169 = vld [vmem:[#allocation6 + $0x1f0] sm:$0xff]
    %v2170 = vld [vmem:[#allocation6 + $0x1f8] sm:$0xff]
    %2171 = vmatprep.subr.mxu0 %v2108
    %2172 = vmatpush1.msra.mxu0 %v2107
    %2173 = vmatprep.subr.mxu0 %v2112
    %2174 = vmatpush1.msra.mxu0 %v2111
    %2175 = vmatprep.subr.mxu0 %v2116
    %2176 = vmatpush1.msra.mxu0 %v2115
    %2177 = vmatprep.subr.mxu0 %v2120
    %2178 = vmatpush1.msra.mxu0 %v2119
    %2179 = vmatprep.subr.mxu0 %v2124
    %2180 = vmatpush1.msra.mxu0 %v2123
    %2181 = vmatprep.subr.mxu0 %v2128
    %2182 = vmatpush1.msra.mxu0 %v2127
    %2183 = vmatprep.subr.mxu0 %v2132
    %2184 = vmatpush1.msra.mxu0 %v2131
    %2185 = vmatprep.subr.mxu0 %v2136
    %2186 = vmatpush1.msra.mxu0 %v2135
    %2187 = vmatprep.subr.mxu0 %v2140
    %2188 = vmatpush1.msra.mxu0 %v2139
    %2189 = vmatprep.subr.mxu0 %v2144
    %2190 = vmatpush1.msra.mxu0 %v2143
    %2191 = vmatprep.subr.mxu0 %v2148
    %2192 = vmatpush1.msra.mxu0 %v2147
    %2193 = vmatprep.subr.mxu0 %v2152
    %2194 = vmatpush1.msra.mxu0 %v2151
    %2195 = vmatprep.subr.mxu0 %v2156
    %2196 = vmatpush1.msra.mxu0 %v2155
    %2197 = vmatprep.subr.mxu0 %v2160
    %2198 = vmatpush1.msra.mxu0 %v2159
    %2199 = vmatprep.subr.mxu0 %v2164
    %2200 = vmatpush1.msra.mxu0 %v2163
    %2201 = vmatprep.subr.mxu0 %v2168
    %2202 = vmatpush1.msra.mxu0 %v2167
    %2203 = vmatprep.subr.mxu0 0.0
    %2204 = vmatpush1.msra.mxu0 0.0
    %2205 = vmatprep.subr.mxu0 0.0
    %2206 = vmatpush1.msra.mxu0 0.0
    %2207 = vmatprep.subr.mxu0 0.0
    %2208 = vmatpush1.msra.mxu0 0.0
    %2209 = vmatprep.subr.mxu0 0.0
    %2210 = vmatpush1.msra.mxu0 0.0
    %2211 = vmatprep.subr.mxu0 0.0
    %2212 = vmatpush1.msra.mxu0 0.0
    %2213 = vmatprep.subr.mxu0 0.0
    %2214 = vmatpush1.msra.mxu0 0.0
    %2215 = vmatprep.subr.mxu0 0.0
    %2216 = vmatpush1.msra.mxu0 0.0
    %2217 = vmatprep.subr.mxu0 0.0
    %2218 = vmatpush1.msra.mxu0 0.0
    %2219 = vmatprep.subr.mxu0 0.0
    %2220 = vmatpush1.msra.mxu0 0.0
    %2221 = vmatprep.subr.mxu0 0.0
    %2222 = vmatpush1.msra.mxu0 0.0
    %2223 = vmatprep.subr.mxu0 0.0
    %2224 = vmatpush1.msra.mxu0 0.0
    %2225 = vmatprep.subr.mxu0 0.0
    %2226 = vmatpush1.msra.mxu0 0.0
    %2227 = vmatprep.subr.mxu0 0.0
    %2228 = vmatpush1.msra.mxu0 0.0
    %2229 = vmatprep.subr.mxu0 0.0
    %2230 = vmatpush1.msra.mxu0 0.0
    %2231 = vmatprep.subr.mxu0 0.0
    %2232 = vmatpush1.msra.mxu0 0.0
    %2233 = vmatprep.subr.mxu0 0.0
    %2234 = vmatpush1.msra.mxu0 0.0
    %2235 = vmatprep.mubr.f32.mxu0 0.0
    %2236 = vmatmul.mubr.f32.gmra.mrb[0].mxu0 %v2101
    %v2237 = vpop.f32.mrb[0].mxu0
    %v2238 = vadd.f32 0.0, %v2237
    %v2239 = vpop.f32.mrb[0].mxu0
    %v2240 = vadd.f32 0.0, %v2239
    %2241 = vdwg.mxu0
    %2242 = vmatprep.subr.mxu0 %v2110
    %2243 = vmatpush1.msra.mxu0 %v2109
    %2244 = vmatprep.subr.mxu0 %v2114
    %2245 = vmatpush1.msra.mxu0 %v2113
    %2246 = vmatprep.subr.mxu0 %v2118
    %2247 = vmatpush1.msra.mxu0 %v2117
    %2248 = vmatprep.subr.mxu0 %v2122
    %2249 = vmatpush1.msra.mxu0 %v2121
    %2250 = vmatprep.subr.mxu0 %v2126
    %2251 = vmatpush1.msra.mxu0 %v2125
    %2252 = vmatprep.subr.mxu0 %v2130
    %2253 = vmatpush1.msra.mxu0 %v2129
    %2254 = vmatprep.subr.mxu0 %v2134
    %2255 = vmatpush1.msra.mxu0 %v2133
    %2256 = vmatprep.subr.mxu0 %v2138
    %2257 = vmatpush1.msra.mxu0 %v2137
    %2258 = vmatprep.subr.mxu0 %v2142
    %2259 = vmatpush1.msra.mxu0 %v2141
    %2260 = vmatprep.subr.mxu0 %v2146
    %2261 = vmatpush1.msra.mxu0 %v2145
    %2262 = vmatprep.subr.mxu0 %v2150
    %2263 = vmatpush1.msra.mxu0 %v2149
    %2264 = vmatprep.subr.mxu0 %v2154
    %2265 = vmatpush1.msra.mxu0 %v2153
    %2266 = vmatprep.subr.mxu0 %v2158
    %2267 = vmatpush1.msra.mxu0 %v2157
    %2268 = vmatprep.subr.mxu0 %v2162
    %2269 = vmatpush1.msra.mxu0 %v2161
    %2270 = vmatprep.subr.mxu0 %v2166
    %2271 = vmatpush1.msra.mxu0 %v2165
    %2272 = vmatprep.subr.mxu0 %v2170
    %2273 = vmatpush1.msra.mxu0 %v2169
    %2274 = vmatprep.subr.mxu0 0.0
    %2275 = vmatpush1.msra.mxu0 0.0
    %2276 = vmatprep.subr.mxu0 0.0
    %2277 = vmatpush1.msra.mxu0 0.0
    %2278 = vmatprep.subr.mxu0 0.0
    %2279 = vmatpush1.msra.mxu0 0.0
    %2280 = vmatprep.subr.mxu0 0.0
    %2281 = vmatpush1.msra.mxu0 0.0
    %2282 = vmatprep.subr.mxu0 0.0
    %2283 = vmatpush1.msra.mxu0 0.0
    %2284 = vmatprep.subr.mxu0 0.0
    %2285 = vmatpush1.msra.mxu0 0.0
    %2286 = vmatprep.subr.mxu0 0.0
    %2287 = vmatpush1.msra.mxu0 0.0
    %2288 = vmatprep.subr.mxu0 0.0
    %2289 = vmatpush1.msra.mxu0 0.0
    %2290 = vmatprep.subr.mxu0 0.0
    %2291 = vmatpush1.msra.mxu0 0.0
    %2292 = vmatprep.subr.mxu0 0.0
    %2293 = vmatpush1.msra.mxu0 0.0
    %2294 = vmatprep.subr.mxu0 0.0
    %2295 = vmatpush1.msra.mxu0 0.0
    %2296 = vmatprep.subr.mxu0 0.0
    %2297 = vmatpush1.msra.mxu0 0.0
    %2298 = vmatprep.subr.mxu0 0.0
    %2299 = vmatpush1.msra.mxu0 0.0
    %2300 = vmatprep.subr.mxu0 0.0
    %2301 = vmatpush1.msra.mxu0 0.0
    %2302 = vmatprep.subr.mxu0 0.0
    %2303 = vmatpush1.msra.mxu0 0.0
    %2304 = vmatprep.subr.mxu0 0.0
    %2305 = vmatpush1.msra.mxu0 0.0
    %2306 = vmatprep.mubr.f32.mxu0 0.0
    %2307 = vmatmul.mubr.f32.gmra.mrb[0].mxu0 %v2101
    %v2308 = vpop.f32.mrb[0].mxu0
    %v2309 = vadd.f32 0.0, %v2308
    %v2310 = vpop.f32.mrb[0].mxu0
    %v2311 = vadd.f32 0.0, %v2310
    %2312 = vdwg.mxu0
    %v2313 = vadd.f32 %v2103, %v2238
    %v2314 = vadd.f32 %v2104, %v2240
    %v2315 = vadd.f32 %v2105, %v2309
    %v2316 = vadd.f32 %v2106, %v2311
    %v2317 = vxor.u32 %v2313, 2147483648
    %v2318 = vxor.u32 %v2314, 2147483648
    %v2319 = vxor.u32 %v2315, 2147483648
    %v2320 = vmul.f32 %v2317, 1.442695
    %v2321 = vpow.pop %v2320
    %v2322 = vmul.f32 %v2318, 1.442695
    %v2323 = vpow.pop %v2322
    %v2324 = vmul.f32 %v2319, 1.442695
    %v2325 = vpow.pop %v2324
    %v2326 = vadd.f32 %v2321, 1.0
    %v2327 = vadd.f32 %v2323, 1.0
    %v2328 = vadd.f32 %v2325, 1.0
    %v2329 = vrcp.pop %v2326
    %v2330 = vmul.f32 1.0, %v2329
    %v2331 = vrcp.pop %v2327
    %v2332 = vmul.f32 1.0, %v2331
    %v2333 = vrcp.pop %v2328
    %v2334 = vmul.f32 1.0, %v2333
    %v2335 = vtanh.pop %v2316
    %v2336 = vmul.f32 %v2332, %v2099
    %v2337 = vmul.f32 %v2330, %v2335
    %v2338 = vadd.f32 %v2336, %v2337
    %v2339 = vtanh.pop %v2338
    %v2340 = vmul.f32 %v2334, %v2339
    %2341 = vst [vmem:[#allocation5 + $0x30] sm:$0xff] %v2340
    %v2342 = vld [vmem:[#allocation4 + $0xe0] sm:$0xff]
    %v2343 = vld [vmem:[#allocation4 + $0xe8] sm:$0xff]
    %v2344 = vld [vmem:[#allocation4 + $0xf0] sm:$0xff]
    %v2345 = vld [vmem:[#allocation4 + $0xf8] sm:$0xff]
    %v2346 = vld [vmem:[#allocation6] sm:$0xff]
    %v2347 = vld [vmem:[#allocation6 + $0x8] sm:$0xff]
    %v2348 = vld [vmem:[#allocation6 + $0x10] sm:$0xff]
    %v2349 = vld [vmem:[#allocation6 + $0x18] sm:$0xff]
    %v2350 = vld [vmem:[#allocation6 + $0x20] sm:$0xff]
    %v2351 = vld [vmem:[#allocation6 + $0x28] sm:$0xff]
    %v2352 = vld [vmem:[#allocation6 + $0x30] sm:$0xff]
    %v2353 = vld [vmem:[#allocation6 + $0x38] sm:$0xff]
    %v2354 = vld [vmem:[#allocation6 + $0x40] sm:$0xff]
    %v2355 = vld [vmem:[#allocation6 + $0x48] sm:$0xff]
    %v2356 = vld [vmem:[#allocation6 + $0x50] sm:$0xff]
    %v2357 = vld [vmem:[#allocation6 + $0x58] sm:$0xff]
    %v2358 = vld [vmem:[#allocation6 + $0x60] sm:$0xff]
    %v2359 = vld [vmem:[#allocation6 + $0x68] sm:$0xff]
    %v2360 = vld [vmem:[#allocation6 + $0x70] sm:$0xff]
    %v2361 = vld [vmem:[#allocation6 + $0x78] sm:$0xff]
    %v2362 = vld [vmem:[#allocation6 + $0x80] sm:$0xff]
    %v2363 = vld [vmem:[#allocation6 + $0x88] sm:$0xff]
    %v2364 = vld [vmem:[#allocation6 + $0x90] sm:$0xff]
    %v2365 = vld [vmem:[#allocation6 + $0x98] sm:$0xff]
    %v2366 = vld [vmem:[#allocation6 + $0xa0] sm:$0xff]
    %v2367 = vld [vmem:[#allocation6 + $0xa8] sm:$0xff]
    %v2368 = vld [vmem:[#allocation6 + $0xb0] sm:$0xff]
    %v2369 = vld [vmem:[#allocation6 + $0xb8] sm:$0xff]
    %v2370 = vld [vmem:[#allocation6 + $0xc0] sm:$0xff]
    %v2371 = vld [vmem:[#allocation6 + $0xc8] sm:$0xff]
    %v2372 = vld [vmem:[#allocation6 + $0xd0] sm:$0xff]
    %v2373 = vld [vmem:[#allocation6 + $0xd8] sm:$0xff]
    %v2374 = vld [vmem:[#allocation6 + $0xe0] sm:$0xff]
    %v2375 = vld [vmem:[#allocation6 + $0xe8] sm:$0xff]
    %v2376 = vld [vmem:[#allocation6 + $0xf0] sm:$0xff]
    %v2377 = vld [vmem:[#allocation6 + $0xf8] sm:$0xff]
    %v2378 = vld [vmem:[#allocation6 + $0x100] sm:$0xff]
    %v2379 = vld [vmem:[#allocation6 + $0x108] sm:$0xff]
    %v2380 = vld [vmem:[#allocation6 + $0x110] sm:$0xff]
    %v2381 = vld [vmem:[#allocation6 + $0x118] sm:$0xff]
    %v2382 = vld [vmem:[#allocation6 + $0x120] sm:$0xff]
    %v2383 = vld [vmem:[#allocation6 + $0x128] sm:$0xff]
    %v2384 = vld [vmem:[#allocation6 + $0x130] sm:$0xff]
    %v2385 = vld [vmem:[#allocation6 + $0x138] sm:$0xff]
    %v2386 = vld [vmem:[#allocation6 + $0x140] sm:$0xff]
    %v2387 = vld [vmem:[#allocation6 + $0x148] sm:$0xff]
    %v2388 = vld [vmem:[#allocation6 + $0x150] sm:$0xff]
    %v2389 = vld [vmem:[#allocation6 + $0x158] sm:$0xff]
    %v2390 = vld [vmem:[#allocation6 + $0x160] sm:$0xff]
    %v2391 = vld [vmem:[#allocation6 + $0x168] sm:$0xff]
    %v2392 = vld [vmem:[#allocation6 + $0x170] sm:$0xff]
    %v2393 = vld [vmem:[#allocation6 + $0x178] sm:$0xff]
    %v2394 = vld [vmem:[#allocation6 + $0x180] sm:$0xff]
    %v2395 = vld [vmem:[#allocation6 + $0x188] sm:$0xff]
    %v2396 = vld [vmem:[#allocation6 + $0x190] sm:$0xff]
    %v2397 = vld [vmem:[#allocation6 + $0x198] sm:$0xff]
    %v2398 = vld [vmem:[#allocation6 + $0x1a0] sm:$0xff]
    %v2399 = vld [vmem:[#allocation6 + $0x1a8] sm:$0xff]
    %v2400 = vld [vmem:[#allocation6 + $0x1b0] sm:$0xff]
    %v2401 = vld [vmem:[#allocation6 + $0x1b8] sm:$0xff]
    %v2402 = vld [vmem:[#allocation6 + $0x1c0] sm:$0xff]
    %v2403 = vld [vmem:[#allocation6 + $0x1c8] sm:$0xff]
    %v2404 = vld [vmem:[#allocation6 + $0x1d0] sm:$0xff]
    %v2405 = vld [vmem:[#allocation6 + $0x1d8] sm:$0xff]
    %v2406 = vld [vmem:[#allocation6 + $0x1e0] sm:$0xff]
    %v2407 = vld [vmem:[#allocation6 + $0x1e8] sm:$0xff]
    %v2408 = vld [vmem:[#allocation6 + $0x1f0] sm:$0xff]
    %v2409 = vld [vmem:[#allocation6 + $0x1f8] sm:$0xff]
    %2410 = vmatprep.subr.mxu0 %v2347
    %2411 = vmatpush1.msra.mxu0 %v2346
    %2412 = vmatprep.subr.mxu0 %v2351
    %2413 = vmatpush1.msra.mxu0 %v2350
    %2414 = vmatprep.subr.mxu0 %v2355
    %2415 = vmatpush1.msra.mxu0 %v2354
    %2416 = vmatprep.subr.mxu0 %v2359
    %2417 = vmatpush1.msra.mxu0 %v2358
    %2418 = vmatprep.subr.mxu0 %v2363
    %2419 = vmatpush1.msra.mxu0 %v2362
    %2420 = vmatprep.subr.mxu0 %v2367
    %2421 = vmatpush1.msra.mxu0 %v2366
    %2422 = vmatprep.subr.mxu0 %v2371
    %2423 = vmatpush1.msra.mxu0 %v2370
    %2424 = vmatprep.subr.mxu0 %v2375
    %2425 = vmatpush1.msra.mxu0 %v2374
    %2426 = vmatprep.subr.mxu0 %v2379
    %2427 = vmatpush1.msra.mxu0 %v2378
    %2428 = vmatprep.subr.mxu0 %v2383
    %2429 = vmatpush1.msra.mxu0 %v2382
    %2430 = vmatprep.subr.mxu0 %v2387
    %2431 = vmatpush1.msra.mxu0 %v2386
    %2432 = vmatprep.subr.mxu0 %v2391
    %2433 = vmatpush1.msra.mxu0 %v2390
    %2434 = vmatprep.subr.mxu0 %v2395
    %2435 = vmatpush1.msra.mxu0 %v2394
    %2436 = vmatprep.subr.mxu0 %v2399
    %2437 = vmatpush1.msra.mxu0 %v2398
    %2438 = vmatprep.subr.mxu0 %v2403
    %2439 = vmatpush1.msra.mxu0 %v2402
    %2440 = vmatprep.subr.mxu0 %v2407
    %2441 = vmatpush1.msra.mxu0 %v2406
    %2442 = vmatprep.subr.mxu0 0.0
    %2443 = vmatpush1.msra.mxu0 0.0
    %2444 = vmatprep.subr.mxu0 0.0
    %2445 = vmatpush1.msra.mxu0 0.0
    %2446 = vmatprep.subr.mxu0 0.0
    %2447 = vmatpush1.msra.mxu0 0.0
    %2448 = vmatprep.subr.mxu0 0.0
    %2449 = vmatpush1.msra.mxu0 0.0
    %2450 = vmatprep.subr.mxu0 0.0
    %2451 = vmatpush1.msra.mxu0 0.0
    %2452 = vmatprep.subr.mxu0 0.0
    %2453 = vmatpush1.msra.mxu0 0.0
    %2454 = vmatprep.subr.mxu0 0.0
    %2455 = vmatpush1.msra.mxu0 0.0
    %2456 = vmatprep.subr.mxu0 0.0
    %2457 = vmatpush1.msra.mxu0 0.0
    %2458 = vmatprep.subr.mxu0 0.0
    %2459 = vmatpush1.msra.mxu0 0.0
    %2460 = vmatprep.subr.mxu0 0.0
    %2461 = vmatpush1.msra.mxu0 0.0
    %2462 = vmatprep.subr.mxu0 0.0
    %2463 = vmatpush1.msra.mxu0 0.0
    %2464 = vmatprep.subr.mxu0 0.0
    %2465 = vmatpush1.msra.mxu0 0.0
    %2466 = vmatprep.subr.mxu0 0.0
    %2467 = vmatpush1.msra.mxu0 0.0
    %2468 = vmatprep.subr.mxu0 0.0
    %2469 = vmatpush1.msra.mxu0 0.0
    %2470 = vmatprep.subr.mxu0 0.0
    %2471 = vmatpush1.msra.mxu0 0.0
    %2472 = vmatprep.subr.mxu0 0.0
    %2473 = vmatpush1.msra.mxu0 0.0
    %2474 = vmatprep.mubr.f32.mxu0 0.0
    %2475 = vmatmul.mubr.f32.gmra.mrb[0].mxu0 %v2340
    %v2476 = vpop.f32.mrb[0].mxu0
    %v2477 = vadd.f32 0.0, %v2476
    %v2478 = vpop.f32.mrb[0].mxu0
    %v2479 = vadd.f32 0.0, %v2478
    %2480 = vdwg.mxu0
    %2481 = vmatprep.subr.mxu0 %v2349
    %2482 = vmatpush1.msra.mxu0 %v2348
    %2483 = vmatprep.subr.mxu0 %v2353
    %2484 = vmatpush1.msra.mxu0 %v2352
    %2485 = vmatprep.subr.mxu0 %v2357
    %2486 = vmatpush1.msra.mxu0 %v2356
    %2487 = vmatprep.subr.mxu0 %v2361
    %2488 = vmatpush1.msra.mxu0 %v2360
    %2489 = vmatprep.subr.mxu0 %v2365
    %2490 = vmatpush1.msra.mxu0 %v2364
    %2491 = vmatprep.subr.mxu0 %v2369
    %2492 = vmatpush1.msra.mxu0 %v2368
    %2493 = vmatprep.subr.mxu0 %v2373
    %2494 = vmatpush1.msra.mxu0 %v2372
    %2495 = vmatprep.subr.mxu0 %v2377
    %2496 = vmatpush1.msra.mxu0 %v2376
    %2497 = vmatprep.subr.mxu0 %v2381
    %2498 = vmatpush1.msra.mxu0 %v2380
    %2499 = vmatprep.subr.mxu0 %v2385
    %2500 = vmatpush1.msra.mxu0 %v2384
    %2501 = vmatprep.subr.mxu0 %v2389
    %2502 = vmatpush1.msra.mxu0 %v2388
    %2503 = vmatprep.subr.mxu0 %v2393
    %2504 = vmatpush1.msra.mxu0 %v2392
    %2505 = vmatprep.subr.mxu0 %v2397
    %2506 = vmatpush1.msra.mxu0 %v2396
    %2507 = vmatprep.subr.mxu0 %v2401
    %2508 = vmatpush1.msra.mxu0 %v2400
    %2509 = vmatprep.subr.mxu0 %v2405
    %2510 = vmatpush1.msra.mxu0 %v2404
    %2511 = vmatprep.subr.mxu0 %v2409
    %2512 = vmatpush1.msra.mxu0 %v2408
    %2513 = vmatprep.subr.mxu0 0.0
    %2514 = vmatpush1.msra.mxu0 0.0
    %2515 = vmatprep.subr.mxu0 0.0
    %2516 = vmatpush1.msra.mxu0 0.0
    %2517 = vmatprep.subr.mxu0 0.0
    %2518 = vmatpush1.msra.mxu0 0.0
    %2519 = vmatprep.subr.mxu0 0.0
    %2520 = vmatpush1.msra.mxu0 0.0
    %2521 = vmatprep.subr.mxu0 0.0
    %2522 = vmatpush1.msra.mxu0 0.0
    %2523 = vmatprep.subr.mxu0 0.0
    %2524 = vmatpush1.msra.mxu0 0.0
    %2525 = vmatprep.subr.mxu0 0.0
    %2526 = vmatpush1.msra.mxu0 0.0
    %2527 = vmatprep.subr.mxu0 0.0
    %2528 = vmatpush1.msra.mxu0 0.0
    %2529 = vmatprep.subr.mxu0 0.0
    %2530 = vmatpush1.msra.mxu0 0.0
    %2531 = vmatprep.subr.mxu0 0.0
    %2532 = vmatpush1.msra.mxu0 0.0
    %2533 = vmatprep.subr.mxu0 0.0
    %2534 = vmatpush1.msra.mxu0 0.0
    %2535 = vmatprep.subr.mxu0 0.0
    %2536 = vmatpush1.msra.mxu0 0.0
    %2537 = vmatprep.subr.mxu0 0.0
    %2538 = vmatpush1.msra.mxu0 0.0
    %2539 = vmatprep.subr.mxu0 0.0
    %2540 = vmatpush1.msra.mxu0 0.0
    %2541 = vmatprep.subr.mxu0 0.0
    %2542 = vmatpush1.msra.mxu0 0.0
    %2543 = vmatprep.subr.mxu0 0.0
    %2544 = vmatpush1.msra.mxu0 0.0
    %2545 = vmatprep.mubr.f32.mxu0 0.0
    %2546 = vmatmul.mubr.f32.gmra.mrb[0].mxu0 %v2340
    %v2547 = vpop.f32.mrb[0].mxu0
    %v2548 = vadd.f32 0.0, %v2547
    %v2549 = vpop.f32.mrb[0].mxu0
    %v2550 = vadd.f32 0.0, %v2549
    %2551 = vdwg.mxu0
    %v2552 = vadd.f32 %v2342, %v2477
    %v2553 = vadd.f32 %v2343, %v2479
    %v2554 = vadd.f32 %v2344, %v2548
    %v2555 = vadd.f32 %v2345, %v2550
    %v2556 = vxor.u32 %v2552, 2147483648
    %v2557 = vxor.u32 %v2553, 2147483648
    %v2558 = vxor.u32 %v2554, 2147483648
    %v2559 = vmul.f32 %v2556, 1.442695
    %v2560 = vpow.pop %v2559
    %v2561 = vmul.f32 %v2557, 1.442695
    %v2562 = vpow.pop %v2561
    %v2563 = vmul.f32 %v2558, 1.442695
    %v2564 = vpow.pop %v2563
    %v2565 = vadd.f32 %v2560, 1.0
    %v2566 = vadd.f32 %v2562, 1.0
    %v2567 = vadd.f32 %v2564, 1.0
    %v2568 = vrcp.pop %v2565
    %v2569 = vmul.f32 1.0, %v2568
    %v2570 = vrcp.pop %v2566
    %v2571 = vmul.f32 1.0, %v2570
    %v2572 = vrcp.pop %v2567
    %v2573 = vmul.f32 1.0, %v2572
    %v2574 = vtanh.pop %v2555
    %v2575 = vmul.f32 %v2571, %v2338
    %v2576 = vmul.f32 %v2569, %v2574
    %v2577 = vadd.f32 %v2575, %v2576
    %v2578 = vtanh.pop %v2577
    %v2579 = vmul.f32 %v2573, %v2578
    %2580 = vst [vmem:[#allocation5 + $0x38] sm:$0xff] %v2579
    %v2581 = vld [vmem:[#allocation3] sm:$0xff]
    %v2582 = vld [vmem:[#allocation3 + $0x8] sm:$0xff]
    %v2583 = vld [vmem:[#allocation3 + $0x10] sm:$0xff]
    %v2584 = vld [vmem:[#allocation3 + $0x18] sm:$0xff]
    %v2585 = vld [vmem:[#allocation3 + $0x20] sm:$0xff]
    %v2586 = vld [vmem:[#allocation3 + $0x28] sm:$0xff]
    %v2587 = vld [vmem:[#allocation3 + $0x30] sm:$0xff]
    %v2588 = vld [vmem:[#allocation3 + $0x38] sm:$0xff]
    %v2589 = vld [vmem:[#allocation2] sm:$0xff]
    %v2590 = vld [vmem:[#allocation2 + $0x8] sm:$0xff]
    %v2591 = vld [vmem:[#allocation2 + $0x10] sm:$0xff]
    %v2592 = vld [vmem:[#allocation2 + $0x18] sm:$0xff]
    %v2593 = vld [vmem:[#allocation2 + $0x20] sm:$0xff]
    %v2594 = vld [vmem:[#allocation2 + $0x28] sm:$0xff]
    %v2595 = vld [vmem:[#allocation2 + $0x30] sm:$0xff]
    %v2596 = vld [vmem:[#allocation2 + $0x38] sm:$0xff]
    %v2597 = vmul.f32 %v2589, 0.1
    %v2598 = vmul.f32 %v2590, 0.1
    %v2599 = vmul.f32 %v2591, 0.1
    %v2600 = vmul.f32 %v2592, 0.1
    %v2601 = vmul.f32 %v2593, 0.1
    %v2602 = vmul.f32 %v2594, 0.1
    %v2603 = vmul.f32 %v2595, 0.1
    %v2604 = vmul.f32 %v2596, 0.1
    %v2605 = vld [vmem:[%s10] sm:$0xff]
    %v2606 = vld [vmem:[%s10 + $0x8] sm:$0xff]
    %v2607 = vld [vmem:[%s10 + $0x10] sm:$0xff]
    %v2608 = vld [vmem:[%s9] sm:$0x1]
    %2610 = vset.pattern.permute.xlu0 0
    %2611 = vperm.xlu0 %2610, %v2597
    %v2612 = vpop.permute.xlu0 %2611
    %2615 = vset.pattern.permute.xlu0 0
    %2616 = vperm.xlu0 %2615, %v2598
    %v2617 = vpop.permute.xlu0 %2616
    %2620 = vset.pattern.permute.xlu0 0
    %2621 = vperm.xlu0 %2620, %v2599
    %v2622 = vpop.permute.xlu0 %2621
    %2625 = vset.pattern.permute.xlu0 0
    %2626 = vperm.xlu0 %2625, %v2600
    %v2627 = vpop.permute.xlu0 %2626
    %2630 = vset.pattern.permute.xlu0 0
    %2631 = vperm.xlu0 %2630, %v2601
    %v2632 = vpop.permute.xlu0 %2631
    %2635 = vset.pattern.permute.xlu0 0
    %2636 = vperm.xlu0 %2635, %v2602
    %v2637 = vpop.permute.xlu0 %2636
    %2640 = vset.pattern.permute.xlu0 0
    %2641 = vperm.xlu0 %2640, %v2603
    %v2642 = vpop.permute.xlu0 %2641
    %2645 = vset.pattern.permute.xlu0 0
    %2646 = vperm.xlu0 %2645, %v2604
    %v2647 = vpop.permute.xlu0 %2646
    %v2650 = vlaneseq
    %v2651 = vshrl.u32 %v2650, 7
    %v2652 = vsub.s32 0, %v2651
    %v2653 = vrot.slane %v2608, %v2652
    %v2655 = vmul.f32 %v2612, %v2653
    %v2656 = vmul.f32 %v2617, %v2653
    %v2657 = vmul.f32 %v2622, %v2653
    %v2658 = vmul.f32 %v2627, %v2653
    %v2659 = vmul.f32 %v2632, %v2653
    %v2660 = vmul.f32 %v2637, %v2653
    %v2661 = vmul.f32 %v2642, %v2653
    %v2662 = vmul.f32 %v2647, %v2653
    %v2664 = vsel %vm437, %v2581, 0
    %v2667 = vsel %vm437, %v2582, 0
    %v2670 = vsel %vm437, %v2583, 0
    %v2673 = vsel %vm437, %v2584, 0
    %v2676 = vsel %vm437, %v2585, 0
    %v2679 = vsel %vm437, %v2586, 0
    %v2682 = vsel %vm437, %v2587, 0
    %v2685 = vsel %vm437, %v2588, 0
    %2687 = vmatprep.subr.mxu0 0.0
    %2688 = vmatpush1.msra.mxu0 %v2605
    %2689 = vmatprep.subr.mxu0 0.0
    %2690 = vmatpush1.msra.mxu0 %v2606
    %2691 = vmatprep.subr.mxu0 0.0
    %2692 = vmatpush1.msra.mxu0 %v2607
    %2693 = vmatprep.subr.mxu0 0.0
    %2694 = vmatpush1.msra.mxu0 0.0
    %2695 = vmatprep.subr.mxu0 0.0
    %2696 = vmatpush1.msra.mxu0 0.0
    %2697 = vmatprep.subr.mxu0 0.0
    %2698 = vmatpush1.msra.mxu0 0.0
    %2699 = vmatprep.subr.mxu0 0.0
    %2700 = vmatpush1.msra.mxu0 0.0
    %2701 = vmatprep.subr.mxu0 0.0
    %2702 = vmatpush1.msra.mxu0 0.0
    %2703 = vmatprep.subr.mxu0 0.0
    %2704 = vmatpush1.msra.mxu0 0.0
    %2705 = vmatprep.subr.mxu0 0.0
    %2706 = vmatpush1.msra.mxu0 0.0
    %2707 = vmatprep.subr.mxu0 0.0
    %2708 = vmatpush1.msra.mxu0 0.0
    %2709 = vmatprep.subr.mxu0 0.0
    %2710 = vmatpush1.msra.mxu0 0.0
    %2711 = vmatprep.subr.mxu0 0.0
    %2712 = vmatpush1.msra.mxu0 0.0
    %2713 = vmatprep.subr.mxu0 0.0
    %2714 = vmatpush1.msra.mxu0 0.0
    %2715 = vmatprep.subr.mxu0 0.0
    %2716 = vmatpush1.msra.mxu0 0.0
    %2717 = vmatprep.subr.mxu0 0.0
    %2718 = vmatpush1.msra.mxu0 0.0
    %2719 = vmatprep.subr.mxu0 0.0
    %2720 = vmatpush1.msra.mxu0 0.0
    %2721 = vmatprep.subr.mxu0 0.0
    %2722 = vmatpush1.msra.mxu0 0.0
    %2723 = vmatprep.subr.mxu0 0.0
    %2724 = vmatpush1.msra.mxu0 0.0
    %2725 = vmatprep.subr.mxu0 0.0
    %2726 = vmatpush1.msra.mxu0 0.0
    %2727 = vmatprep.subr.mxu0 0.0
    %2728 = vmatpush1.msra.mxu0 0.0
    %2729 = vmatprep.subr.mxu0 0.0
    %2730 = vmatpush1.msra.mxu0 0.0
    %2731 = vmatprep.subr.mxu0 0.0
    %2732 = vmatpush1.msra.mxu0 0.0
    %2733 = vmatprep.subr.mxu0 0.0
    %2734 = vmatpush1.msra.mxu0 0.0
    %2735 = vmatprep.subr.mxu0 0.0
    %2736 = vmatpush1.msra.mxu0 0.0
    %2737 = vmatprep.subr.mxu0 0.0
    %2738 = vmatpush1.msra.mxu0 0.0
    %2739 = vmatprep.subr.mxu0 0.0
    %2740 = vmatpush1.msra.mxu0 0.0
    %2741 = vmatprep.subr.mxu0 0.0
    %2742 = vmatpush1.msra.mxu0 0.0
    %2743 = vmatprep.subr.mxu0 0.0
    %2744 = vmatpush1.msra.mxu0 0.0
    %2745 = vmatprep.subr.mxu0 0.0
    %2746 = vmatpush1.msra.mxu0 0.0
    %2747 = vmatprep.subr.mxu0 0.0
    %2748 = vmatpush1.msra.mxu0 0.0
    %2749 = vmatprep.subr.mxu0 0.0
    %2750 = vmatpush1.msra.mxu0 0.0
    %2751 = vmatprep.mubr.f32.mxu0 0.0
    %2752 = vmatmul.mubr.f32.gmra.mrb[0].mxu0 %v2664
    %v2753 = vpop.f32.mrb[0].mxu0
    %v2754 = vadd.f32 %v2655, %v2753
    %v2755 = vpop.f32.mrb[0].mxu0
    %2756 = vmatprep.mubr.f32.mxu0 0.0
    %2757 = vmatmul.mubr.f32.gmra.mrb[0].mxu0 %v2667
    %v2758 = vpop.f32.mrb[0].mxu0
    %v2759 = vadd.f32 %v2656, %v2758
    %v2760 = vpop.f32.mrb[0].mxu0
    %2761 = vmatprep.mubr.f32.mxu0 0.0
    %2762 = vmatmul.mubr.f32.gmra.mrb[0].mxu0 %v2670
    %v2763 = vpop.f32.mrb[0].mxu0
    %v2764 = vadd.f32 %v2657, %v2763
    %v2765 = vpop.f32.mrb[0].mxu0
    %2766 = vmatprep.mubr.f32.mxu0 0.0
    %2767 = vmatmul.mubr.f32.gmra.mrb[0].mxu0 %v2673
    %v2768 = vpop.f32.mrb[0].mxu0
    %v2769 = vadd.f32 %v2658, %v2768
    %v2770 = vpop.f32.mrb[0].mxu0
    %2771 = vmatprep.mubr.f32.mxu0 0.0
    %2772 = vmatmul.mubr.f32.gmra.mrb[0].mxu0 %v2676
    %v2773 = vpop.f32.mrb[0].mxu0
    %v2774 = vadd.f32 %v2659, %v2773
    %v2775 = vpop.f32.mrb[0].mxu0
    %2776 = vmatprep.mubr.f32.mxu0 0.0
    %2777 = vmatmul.mubr.f32.gmra.mrb[0].mxu0 %v2679
    %v2778 = vpop.f32.mrb[0].mxu0
    %v2779 = vadd.f32 %v2660, %v2778
    %v2780 = vpop.f32.mrb[0].mxu0
    %2781 = vmatprep.mubr.f32.mxu0 0.0
    %2782 = vmatmul.mubr.f32.gmra.mrb[0].mxu0 %v2682
    %v2783 = vpop.f32.mrb[0].mxu0
    %v2784 = vadd.f32 %v2661, %v2783
    %v2785 = vpop.f32.mrb[0].mxu0
    %2786 = vmatprep.mubr.f32.mxu0 0.0
    %2787 = vmatmul.mubr.f32.gmra.mrb[0].mxu0 %v2685
    %v2788 = vpop.f32.mrb[0].mxu0
    %v2789 = vadd.f32 %v2662, %v2788
    %v2790 = vpop.f32.mrb[0].mxu0
    %2791 = vdwg.mxu0
    %v2792 = vld [vmem:[%s11] sm:$0x1]
    %v2794 = vlaneseq
    %v2795 = vshrl.u32 %v2794, 7
    %v2796 = vsub.s32 0, %v2795
    %v2797 = vrot.slane %v2792, %v2796
    %v2799 = vadd.f32 %v2754, %v2797
    %v2800 = vadd.f32 %v2759, %v2797
    %v2801 = vadd.f32 %v2764, %v2797
    %v2802 = vadd.f32 %v2769, %v2797
    %v2803 = vadd.f32 %v2774, %v2797
    %v2804 = vadd.f32 %v2779, %v2797
    %v2805 = vadd.f32 %v2784, %v2797
    %v2806 = vadd.f32 %v2789, %v2797
    %v2807 = vmax.f32 %v2799, 0.0
    %v2808 = vmax.f32 %v2800, 0.0
    %v2809 = vmax.f32 %v2801, 0.0
    %v2810 = vmax.f32 %v2802, 0.0
    %v2811 = vmax.f32 %v2803, 0.0
    %v2812 = vmax.f32 %v2804, 0.0
    %v2813 = vmax.f32 %v2805, 0.0
    %v2814 = vmax.f32 %v2806, 0.0
    %v2815 = vld [vmem:[#allocation5] sm:$0xff]
    %v2816 = vld [vmem:[#allocation5 + $0x8] sm:$0xff]
    %v2817 = vld [vmem:[#allocation5 + $0x10] sm:$0xff]
    %v2818 = vld [vmem:[#allocation5 + $0x18] sm:$0xff]
    %v2819 = vld [vmem:[#allocation5 + $0x20] sm:$0xff]
    %v2820 = vld [vmem:[#allocation5 + $0x28] sm:$0xff]
    %v2821 = vld [vmem:[#allocation5 + $0x30] sm:$0xff]
    %v2822 = vld [vmem:[#allocation5 + $0x38] sm:$0xff]
    %v2823 = vld [vmem:[%s12] sm:$0xff]
    %v2824 = vld [vmem:[%s12 + $0x8] sm:$0xff]
    %v2825 = vld [vmem:[%s12 + $0x10] sm:$0xff]
    %v2826 = vld [vmem:[%s12 + $0x18] sm:$0xff]
    %v2827 = vld [vmem:[%s12 + $0x20] sm:$0xff]
    %v2828 = vld [vmem:[%s12 + $0x28] sm:$0xff]
    %v2829 = vld [vmem:[%s12 + $0x30] sm:$0xff]
    %v2830 = vld [vmem:[%s12 + $0x38] sm:$0xff]
    %v2831 = vld [vmem:[%s12 + $0x40] sm:$0xff]
    %v2832 = vld [vmem:[%s12 + $0x48] sm:$0xff]
    %v2833 = vld [vmem:[%s12 + $0x50] sm:$0xff]
    %v2834 = vld [vmem:[%s12 + $0x58] sm:$0xff]
    %v2835 = vld [vmem:[%s12 + $0x60] sm:$0xff]
    %v2836 = vld [vmem:[%s12 + $0x68] sm:$0xff]
    %v2837 = vld [vmem:[%s12 + $0x70] sm:$0xff]
    %v2838 = vld [vmem:[%s12 + $0x78] sm:$0xff]
    %v2839 = vld [vmem:[%s13] sm:$0xff]
    %v2840 = vld [vmem:[%s13 + $0x8] sm:$0xff]
    %v2841 = vld [vmem:[%s13 + $0x10] sm:$0xff]
    %v2842 = vld [vmem:[%s13 + $0x18] sm:$0xff]
    %vm2843 = vcmask 261120
    %v2845 = vsel %vm2843, %v2807, 0
    %v2848 = vsel %vm2843, %v2808, 0
    %v2851 = vsel %vm2843, %v2809, 0
    %v2854 = vsel %vm2843, %v2810, 0
    %v2857 = vsel %vm2843, %v2811, 0
    %v2860 = vsel %vm2843, %v2812, 0
    %v2863 = vsel %vm2843, %v2813, 0
    %v2866 = vsel %vm2843, %v2814, 0
    %2868 = vmatprep.subr.mxu0 0.0
    %2869 = vmatpush1.msra.mxu0 %v2839
    %2870 = vmatprep.subr.mxu0 0.0
    %2871 = vmatpush1.msra.mxu0 %v2840
    %2872 = vmatprep.subr.mxu0 0.0
    %2873 = vmatpush1.msra.mxu0 %v2841
    %2874 = vmatprep.subr.mxu0 0.0
    %2875 = vmatpush1.msra.mxu0 %v2842
    %2876 = vmatprep.subr.mxu0 0.0
    %2877 = vmatpush1.msra.mxu0 0.0
    %2878 = vmatprep.subr.mxu0 0.0
    %2879 = vmatpush1.msra.mxu0 0.0
    %2880 = vmatprep.subr.mxu0 0.0
    %2881 = vmatpush1.msra.mxu0 0.0
    %2882 = vmatprep.subr.mxu0 0.0
    %2883 = vmatpush1.msra.mxu0 0.0
    %2884 = vmatprep.subr.mxu0 0.0
    %2885 = vmatpush1.msra.mxu0 0.0
    %2886 = vmatprep.subr.mxu0 0.0
    %2887 = vmatpush1.msra.mxu0 0.0
    %2888 = vmatprep.subr.mxu0 0.0
    %2889 = vmatpush1.msra.mxu0 0.0
    %2890 = vmatprep.subr.mxu0 0.0
    %2891 = vmatpush1.msra.mxu0 0.0
    %2892 = vmatprep.subr.mxu0 0.0
    %2893 = vmatpush1.msra.mxu0 0.0
    %2894 = vmatprep.subr.mxu0 0.0
    %2895 = vmatpush1.msra.mxu0 0.0
    %2896 = vmatprep.subr.mxu0 0.0
    %2897 = vmatpush1.msra.mxu0 0.0
    %2898 = vmatprep.subr.mxu0 0.0
    %2899 = vmatpush1.msra.mxu0 0.0
    %2900 = vmatprep.subr.mxu0 0.0
    %2901 = vmatpush1.msra.mxu0 0.0
    %2902 = vmatprep.subr.mxu0 0.0
    %2903 = vmatpush1.msra.mxu0 0.0
    %2904 = vmatprep.subr.mxu0 0.0
    %2905 = vmatpush1.msra.mxu0 0.0
    %2906 = vmatprep.subr.mxu0 0.0
    %2907 = vmatpush1.msra.mxu0 0.0
    %2908 = vmatprep.subr.mxu0 0.0
    %2909 = vmatpush1.msra.mxu0 0.0
    %2910 = vmatprep.subr.mxu0 0.0
    %2911 = vmatpush1.msra.mxu0 0.0
    %2912 = vmatprep.subr.mxu0 0.0
    %2913 = vmatpush1.msra.mxu0 0.0
    %2914 = vmatprep.subr.mxu0 0.0
    %2915 = vmatpush1.msra.mxu0 0.0
    %2916 = vmatprep.subr.mxu0 0.0
    %2917 = vmatpush1.msra.mxu0 0.0
    %2918 = vmatprep.subr.mxu0 0.0
    %2919 = vmatpush1.msra.mxu0 0.0
    %2920 = vmatprep.subr.mxu0 0.0
    %2921 = vmatpush1.msra.mxu0 0.0
    %2922 = vmatprep.subr.mxu0 0.0
    %2923 = vmatpush1.msra.mxu0 0.0
    %2924 = vmatprep.subr.mxu0 0.0
    %2925 = vmatpush1.msra.mxu0 0.0
    %2926 = vmatprep.subr.mxu0 0.0
    %2927 = vmatpush1.msra.mxu0 0.0
    %2928 = vmatprep.subr.mxu0 0.0
    %2929 = vmatpush1.msra.mxu0 0.0
    %2930 = vmatprep.subr.mxu0 0.0
    %2931 = vmatpush1.msra.mxu0 0.0
    %2932 = vmatprep.mubr.f32.mxu0 0.0
    %2933 = vmatmul.mubr.f32.gmra.mrb[0].mxu0 %v2845
    %v2934 = vpop.f32.mrb[0].mxu0
    %v2935 = vadd.f32 0.0, %v2934
    %v2936 = vpop.f32.mrb[0].mxu0
    %2937 = vmatprep.mubr.f32.mxu0 0.0
    %2938 = vmatmul.mubr.f32.gmra.mrb[0].mxu0 %v2848
    %v2939 = vpop.f32.mrb[0].mxu0
    %v2940 = vadd.f32 0.0, %v2939
    %v2941 = vpop.f32.mrb[0].mxu0
    %2942 = vmatprep.mubr.f32.mxu0 0.0
    %2943 = vmatmul.mubr.f32.gmra.mrb[0].mxu0 %v2851
    %v2944 = vpop.f32.mrb[0].mxu0
    %v2945 = vadd.f32 0.0, %v2944
    %v2946 = vpop.f32.mrb[0].mxu0
    %2947 = vmatprep.mubr.f32.mxu0 0.0
    %2948 = vmatmul.mubr.f32.gmra.mrb[0].mxu0 %v2854
    %v2949 = vpop.f32.mrb[0].mxu0
    %v2950 = vadd.f32 0.0, %v2949
    %v2951 = vpop.f32.mrb[0].mxu0
    %2952 = vmatprep.mubr.f32.mxu0 0.0
    %2953 = vmatmul.mubr.f32.gmra.mrb[0].mxu0 %v2857
    %v2954 = vpop.f32.mrb[0].mxu0
    %v2955 = vadd.f32 0.0, %v2954
    %v2956 = vpop.f32.mrb[0].mxu0
    %2957 = vmatprep.mubr.f32.mxu0 0.0
    %2958 = vmatmul.mubr.f32.gmra.mrb[0].mxu0 %v2860
    %v2959 = vpop.f32.mrb[0].mxu0
    %v2960 = vadd.f32 0.0, %v2959
    %v2961 = vpop.f32.mrb[0].mxu0
    %2962 = vmatprep.mubr.f32.mxu0 0.0
    %2963 = vmatmul.mubr.f32.gmra.mrb[0].mxu0 %v2863
    %v2964 = vpop.f32.mrb[0].mxu0
    %v2965 = vadd.f32 0.0, %v2964
    %v2966 = vpop.f32.mrb[0].mxu0
    %2967 = vmatprep.mubr.f32.mxu0 0.0
    %2968 = vmatmul.mubr.f32.gmra.mrb[0].mxu0 %v2866
    %v2969 = vpop.f32.mrb[0].mxu0
    %v2970 = vadd.f32 0.0, %v2969
    %v2971 = vpop.f32.mrb[0].mxu0
    %2972 = vdwg.mxu0
    %2973 = vmatprep.subr.mxu0 0.0
    %2974 = vmatpush1.msra.mxu0 %v2823
    %2975 = vmatprep.subr.mxu0 0.0
    %2976 = vmatpush1.msra.mxu0 %v2824
    %2977 = vmatprep.subr.mxu0 0.0
    %2978 = vmatpush1.msra.mxu0 %v2825
    %2979 = vmatprep.subr.mxu0 0.0
    %2980 = vmatpush1.msra.mxu0 %v2826
    %2981 = vmatprep.subr.mxu0 0.0
    %2982 = vmatpush1.msra.mxu0 %v2827
    %2983 = vmatprep.subr.mxu0 0.0
    %2984 = vmatpush1.msra.mxu0 %v2828
    %2985 = vmatprep.subr.mxu0 0.0
    %2986 = vmatpush1.msra.mxu0 %v2829
    %2987 = vmatprep.subr.mxu0 0.0
    %2988 = vmatpush1.msra.mxu0 %v2830
    %2989 = vmatprep.subr.mxu0 0.0
    %2990 = vmatpush1.msra.mxu0 %v2831
    %2991 = vmatprep.subr.mxu0 0.0
    %2992 = vmatpush1.msra.mxu0 %v2832
    %2993 = vmatprep.subr.mxu0 0.0
    %2994 = vmatpush1.msra.mxu0 %v2833
    %2995 = vmatprep.subr.mxu0 0.0
    %2996 = vmatpush1.msra.mxu0 %v2834
    %2997 = vmatprep.subr.mxu0 0.0
    %2998 = vmatpush1.msra.mxu0 %v2835
    %2999 = vmatprep.subr.mxu0 0.0
    %3000 = vmatpush1.msra.mxu0 %v2836
    %3001 = vmatprep.subr.mxu0 0.0
    %3002 = vmatpush1.msra.mxu0 %v2837
    %3003 = vmatprep.subr.mxu0 0.0
    %3004 = vmatpush1.msra.mxu0 %v2838
    %3005 = vmatprep.subr.mxu0 0.0
    %3006 = vmatpush1.msra.mxu0 0.0
    %3007 = vmatprep.subr.mxu0 0.0
    %3008 = vmatpush1.msra.mxu0 0.0
    %3009 = vmatprep.subr.mxu0 0.0
    %3010 = vmatpush1.msra.mxu0 0.0
    %3011 = vmatprep.subr.mxu0 0.0
    %3012 = vmatpush1.msra.mxu0 0.0
    %3013 = vmatprep.subr.mxu0 0.0
    %3014 = vmatpush1.msra.mxu0 0.0
    %3015 = vmatprep.subr.mxu0 0.0
    %3016 = vmatpush1.msra.mxu0 0.0
    %3017 = vmatprep.subr.mxu0 0.0
    %3018 = vmatpush1.msra.mxu0 0.0
    %3019 = vmatprep.subr.mxu0 0.0
    %3020 = vmatpush1.msra.mxu0 0.0
    %3021 = vmatprep.subr.mxu0 0.0
    %3022 = vmatpush1.msra.mxu0 0.0
    %3023 = vmatprep.subr.mxu0 0.0
    %3024 = vmatpush1.msra.mxu0 0.0
    %3025 = vmatprep.subr.mxu0 0.0
    %3026 = vmatpush1.msra.mxu0 0.0
    %3027 = vmatprep.subr.mxu0 0.0
    %3028 = vmatpush1.msra.mxu0 0.0
    %3029 = vmatprep.subr.mxu0 0.0
    %3030 = vmatpush1.msra.mxu0 0.0
    %3031 = vmatprep.subr.mxu0 0.0
    %3032 = vmatpush1.msra.mxu0 0.0
    %3033 = vmatprep.subr.mxu0 0.0
    %3034 = vmatpush1.msra.mxu0 0.0
    %3035 = vmatprep.subr.mxu0 0.0
    %3036 = vmatpush1.msra.mxu0 0.0
    %3037 = vmatprep.mubr.f32.mxu0 0.0
    %3038 = vmatmul.mubr.f32.gmra.mrb[0].mxu0 %v2815
    %v3039 = vpop.f32.mrb[0].mxu0
    %v3040 = vadd.f32 %v2935, %v3039
    %v3041 = vpop.f32.mrb[0].mxu0
    %3042 = vmatprep.mubr.f32.mxu0 0.0
    %3043 = vmatmul.mubr.f32.gmra.mrb[0].mxu0 %v2816
    %v3044 = vpop.f32.mrb[0].mxu0
    %v3045 = vadd.f32 %v2940, %v3044
    %v3046 = vpop.f32.mrb[0].mxu0
    %3047 = vmatprep.mubr.f32.mxu0 0.0
    %3048 = vmatmul.mubr.f32.gmra.mrb[0].mxu0 %v2817
    %v3049 = vpop.f32.mrb[0].mxu0
    %v3050 = vadd.f32 %v2945, %v3049
    %v3051 = vpop.f32.mrb[0].mxu0
    %3052 = vmatprep.mubr.f32.mxu0 0.0
    %3053 = vmatmul.mubr.f32.gmra.mrb[0].mxu0 %v2818
    %v3054 = vpop.f32.mrb[0].mxu0
    %v3055 = vadd.f32 %v2950, %v3054
    %v3056 = vpop.f32.mrb[0].mxu0
    %3057 = vmatprep.mubr.f32.mxu0 0.0
    %3058 = vmatmul.mubr.f32.gmra.mrb[0].mxu0 %v2819
    %v3059 = vpop.f32.mrb[0].mxu0
    %v3060 = vadd.f32 %v2955, %v3059
    %v3061 = vpop.f32.mrb[0].mxu0
    %3062 = vmatprep.mubr.f32.mxu0 0.0
    %3063 = vmatmul.mubr.f32.gmra.mrb[0].mxu0 %v2820
    %v3064 = vpop.f32.mrb[0].mxu0
    %v3065 = vadd.f32 %v2960, %v3064
    %v3066 = vpop.f32.mrb[0].mxu0
    %3067 = vmatprep.mubr.f32.mxu0 0.0
    %3068 = vmatmul.mubr.f32.gmra.mrb[0].mxu0 %v2821
    %v3069 = vpop.f32.mrb[0].mxu0
    %v3070 = vadd.f32 %v2965, %v3069
    %v3071 = vpop.f32.mrb[0].mxu0
    %3072 = vmatprep.mubr.f32.mxu0 0.0
    %3073 = vmatmul.mubr.f32.gmra.mrb[0].mxu0 %v2822
    %v3074 = vpop.f32.mrb[0].mxu0
    %v3075 = vadd.f32 %v2970, %v3074
    %v3076 = vpop.f32.mrb[0].mxu0
    %3077 = vdwg.mxu0
    %v3078 = vld [vmem:[%s14] sm:$0x1]
    %v3080 = vlaneseq
    %v3081 = vshrl.u32 %v3080, 7
    %v3082 = vsub.s32 0, %v3081
    %v3083 = vrot.slane %v3078, %v3082
    %v3085 = vadd.f32 %v3040, %v3083
    %v3086 = vadd.f32 %v3045, %v3083
    %v3087 = vadd.f32 %v3050, %v3083
    %v3088 = vadd.f32 %v3055, %v3083
    %v3089 = vadd.f32 %v3060, %v3083
    %v3090 = vadd.f32 %v3065, %v3083
    %v3091 = vadd.f32 %v3070, %v3083
    %v3092 = vadd.f32 %v3075, %v3083
    %v3093 = vmax.f32 %v3085, 0.0
    %v3094 = vmax.f32 %v3086, 0.0
    %v3095 = vmax.f32 %v3087, 0.0
    %v3096 = vmax.f32 %v3088, 0.0
    %v3097 = vmax.f32 %v3089, 0.0
    %v3098 = vmax.f32 %v3090, 0.0
    %v3099 = vmax.f32 %v3091, 0.0
    %v3100 = vmax.f32 %v3092, 0.0
    %v3101 = vld [vmem:[%s15] sm:$0xff]
    %v3102 = vld [vmem:[%s15 + $0x8] sm:$0xff]
    %v3103 = vld [vmem:[%s16] sm:$0xff]
    %v3104 = vld [vmem:[%s16 + $0x8] sm:$0xff]
    %v3105 = vld [vmem:[%s16 + $0x10] sm:$0xff]
    %3106 = vmatprep.subr.mxu0 0.0
    %3107 = vmatpush1.msra.mxu0 %v3103
    %3108 = vmatprep.subr.mxu0 0.0
    %3109 = vmatpush1.msra.mxu0 %v3104
    %3110 = vmatprep.subr.mxu0 0.0
    %3111 = vmatpush1.msra.mxu0 %v3105
    %3112 = vmatprep.subr.mxu0 0.0
    %3113 = vmatpush1.msra.mxu0 0.0
    %3114 = vmatprep.subr.mxu0 0.0
    %3115 = vmatpush1.msra.mxu0 0.0
    %3116 = vmatprep.subr.mxu0 0.0
    %3117 = vmatpush1.msra.mxu0 0.0
    %3118 = vmatprep.subr.mxu0 0.0
    %3119 = vmatpush1.msra.mxu0 0.0
    %3120 = vmatprep.subr.mxu0 0.0
    %3121 = vmatpush1.msra.mxu0 0.0
    %3122 = vmatprep.subr.mxu0 0.0
    %3123 = vmatpush1.msra.mxu0 0.0
    %3124 = vmatprep.subr.mxu0 0.0
    %3125 = vmatpush1.msra.mxu0 0.0
    %3126 = vmatprep.subr.mxu0 0.0
    %3127 = vmatpush1.msra.mxu0 0.0
    %3128 = vmatprep.subr.mxu0 0.0
    %3129 = vmatpush1.msra.mxu0 0.0
    %3130 = vmatprep.subr.mxu0 0.0
    %3131 = vmatpush1.msra.mxu0 0.0
    %3132 = vmatprep.subr.mxu0 0.0
    %3133 = vmatpush1.msra.mxu0 0.0
    %3134 = vmatprep.subr.mxu0 0.0
    %3135 = vmatpush1.msra.mxu0 0.0
    %3136 = vmatprep.subr.mxu0 0.0
    %3137 = vmatpush1.msra.mxu0 0.0
    %3138 = vmatprep.subr.mxu0 0.0
    %3139 = vmatpush1.msra.mxu0 0.0
    %3140 = vmatprep.subr.mxu0 0.0
    %3141 = vmatpush1.msra.mxu0 0.0
    %3142 = vmatprep.subr.mxu0 0.0
    %3143 = vmatpush1.msra.mxu0 0.0
    %3144 = vmatprep.subr.mxu0 0.0
    %3145 = vmatpush1.msra.mxu0 0.0
    %3146 = vmatprep.subr.mxu0 0.0
    %3147 = vmatpush1.msra.mxu0 0.0
    %3148 = vmatprep.subr.mxu0 0.0
    %3149 = vmatpush1.msra.mxu0 0.0
    %3150 = vmatprep.subr.mxu0 0.0
    %3151 = vmatpush1.msra.mxu0 0.0
    %3152 = vmatprep.subr.mxu0 0.0
    %3153 = vmatpush1.msra.mxu0 0.0
    %3154 = vmatprep.subr.mxu0 0.0
    %3155 = vmatpush1.msra.mxu0 0.0
    %3156 = vmatprep.subr.mxu0 0.0
    %3157 = vmatpush1.msra.mxu0 0.0
    %3158 = vmatprep.subr.mxu0 0.0
    %3159 = vmatpush1.msra.mxu0 0.0
    %3160 = vmatprep.subr.mxu0 0.0
    %3161 = vmatpush1.msra.mxu0 0.0
    %3162 = vmatprep.subr.mxu0 0.0
    %3163 = vmatpush1.msra.mxu0 0.0
    %3164 = vmatprep.subr.mxu0 0.0
    %3165 = vmatpush1.msra.mxu0 0.0
    %3166 = vmatprep.subr.mxu0 0.0
    %3167 = vmatpush1.msra.mxu0 0.0
    %3168 = vmatprep.subr.mxu0 0.0
    %3169 = vmatpush1.msra.mxu0 0.0
    %3170 = vmatprep.mubr.f32.mxu0 0.0
    %3171 = vmatmul.mubr.f32.gmra.mrb[0].mxu0 %v2664
    %v3172 = vpop.f32.mrb[0].mxu0
    %v3173 = vadd.f32 0.0, %v3172
    %v3174 = vpop.f32.mrb[0].mxu0
    %3175 = vmatprep.mubr.f32.mxu0 0.0
    %3176 = vmatmul.mubr.f32.gmra.mrb[0].mxu0 %v2667
    %v3177 = vpop.f32.mrb[0].mxu0
    %v3178 = vadd.f32 0.0, %v3177
    %v3179 = vpop.f32.mrb[0].mxu0
    %3180 = vmatprep.mubr.f32.mxu0 0.0
    %3181 = vmatmul.mubr.f32.gmra.mrb[0].mxu0 %v2670
    %v3182 = vpop.f32.mrb[0].mxu0
    %v3183 = vadd.f32 0.0, %v3182
    %v3184 = vpop.f32.mrb[0].mxu0
    %3185 = vmatprep.mubr.f32.mxu0 0.0
    %3186 = vmatmul.mubr.f32.gmra.mrb[0].mxu0 %v2673
    %v3187 = vpop.f32.mrb[0].mxu0
    %v3188 = vadd.f32 0.0, %v3187
    %v3189 = vpop.f32.mrb[0].mxu0
    %3190 = vmatprep.mubr.f32.mxu0 0.0
    %3191 = vmatmul.mubr.f32.gmra.mrb[0].mxu0 %v2676
    %v3192 = vpop.f32.mrb[0].mxu0
    %v3193 = vadd.f32 0.0, %v3192
    %v3194 = vpop.f32.mrb[0].mxu0
    %3195 = vmatprep.mubr.f32.mxu0 0.0
    %3196 = vmatmul.mubr.f32.gmra.mrb[0].mxu0 %v2679
    %v3197 = vpop.f32.mrb[0].mxu0
    %v3198 = vadd.f32 0.0, %v3197
    %v3199 = vpop.f32.mrb[0].mxu0
    %3200 = vmatprep.mubr.f32.mxu0 0.0
    %3201 = vmatmul.mubr.f32.gmra.mrb[0].mxu0 %v2682
    %v3202 = vpop.f32.mrb[0].mxu0
    %v3203 = vadd.f32 0.0, %v3202
    %v3204 = vpop.f32.mrb[0].mxu0
    %3205 = vmatprep.mubr.f32.mxu0 0.0
    %3206 = vmatmul.mubr.f32.gmra.mrb[0].mxu0 %v2685
    %v3207 = vpop.f32.mrb[0].mxu0
    %v3208 = vadd.f32 0.0, %v3207
    %v3209 = vpop.f32.mrb[0].mxu0
    %3210 = vdwg.mxu0
    %vm3211 = vcmask 130048
    %v3213 = vsel %vm3211, %v3093, 0
    %v3216 = vsel %vm3211, %v3094, 0
    %v3219 = vsel %vm3211, %v3095, 0
    %v3222 = vsel %vm3211, %v3096, 0
    %v3225 = vsel %vm3211, %v3097, 0
    %v3228 = vsel %vm3211, %v3098, 0
    %v3231 = vsel %vm3211, %v3099, 0
    %v3234 = vsel %vm3211, %v3100, 0
    %3236 = vmatprep.subr.mxu0 0.0
    %3237 = vmatpush1.msra.mxu0 %v3101
    %3238 = vmatprep.subr.mxu0 0.0
    %3239 = vmatpush1.msra.mxu0 %v3102
    %3240 = vmatprep.subr.mxu0 0.0
    %3241 = vmatpush1.msra.mxu0 0.0
    %3242 = vmatprep.subr.mxu0 0.0
    %3243 = vmatpush1.msra.mxu0 0.0
    %3244 = vmatprep.subr.mxu0 0.0
    %3245 = vmatpush1.msra.mxu0 0.0
    %3246 = vmatprep.subr.mxu0 0.0
    %3247 = vmatpush1.msra.mxu0 0.0
    %3248 = vmatprep.subr.mxu0 0.0
    %3249 = vmatpush1.msra.mxu0 0.0
    %3250 = vmatprep.subr.mxu0 0.0
    %3251 = vmatpush1.msra.mxu0 0.0
    %3252 = vmatprep.subr.mxu0 0.0
    %3253 = vmatpush1.msra.mxu0 0.0
    %3254 = vmatprep.subr.mxu0 0.0
    %3255 = vmatpush1.msra.mxu0 0.0
    %3256 = vmatprep.subr.mxu0 0.0
    %3257 = vmatpush1.msra.mxu0 0.0
    %3258 = vmatprep.subr.mxu0 0.0
    %3259 = vmatpush1.msra.mxu0 0.0
    %3260 = vmatprep.subr.mxu0 0.0
    %3261 = vmatpush1.msra.mxu0 0.0
    %3262 = vmatprep.subr.mxu0 0.0
    %3263 = vmatpush1.msra.mxu0 0.0
    %3264 = vmatprep.subr.mxu0 0.0
    %3265 = vmatpush1.msra.mxu0 0.0
    %3266 = vmatprep.subr.mxu0 0.0
    %3267 = vmatpush1.msra.mxu0 0.0
    %3268 = vmatprep.subr.mxu0 0.0
    %3269 = vmatpush1.msra.mxu0 0.0
    %3270 = vmatprep.subr.mxu0 0.0
    %3271 = vmatpush1.msra.mxu0 0.0
    %3272 = vmatprep.subr.mxu0 0.0
    %3273 = vmatpush1.msra.mxu0 0.0
    %3274 = vmatprep.subr.mxu0 0.0
    %3275 = vmatpush1.msra.mxu0 0.0
    %3276 = vmatprep.subr.mxu0 0.0
    %3277 = vmatpush1.msra.mxu0 0.0
    %3278 = vmatprep.subr.mxu0 0.0
    %3279 = vmatpush1.msra.mxu0 0.0
    %3280 = vmatprep.subr.mxu0 0.0
    %3281 = vmatpush1.msra.mxu0 0.0
    %3282 = vmatprep.subr.mxu0 0.0
    %3283 = vmatpush1.msra.mxu0 0.0
    %3284 = vmatprep.subr.mxu0 0.0
    %3285 = vmatpush1.msra.mxu0 0.0
    %3286 = vmatprep.subr.mxu0 0.0
    %3287 = vmatpush1.msra.mxu0 0.0
    %3288 = vmatprep.subr.mxu0 0.0
    %3289 = vmatpush1.msra.mxu0 0.0
    %3290 = vmatprep.subr.mxu0 0.0
    %3291 = vmatpush1.msra.mxu0 0.0
    %3292 = vmatprep.subr.mxu0 0.0
    %3293 = vmatpush1.msra.mxu0 0.0
    %3294 = vmatprep.subr.mxu0 0.0
    %3295 = vmatpush1.msra.mxu0 0.0
    %3296 = vmatprep.subr.mxu0 0.0
    %3297 = vmatpush1.msra.mxu0 0.0
    %3298 = vmatprep.subr.mxu0 0.0
    %3299 = vmatpush1.msra.mxu0 0.0
    %3300 = vmatprep.mubr.f32.mxu0 0.0
    %3301 = vmatmul.mubr.f32.gmra.mrb[0].mxu0 %v3213
    %v3302 = vpop.f32.mrb[0].mxu0
    %v3303 = vadd.f32 %v3173, %v3302
    %v3304 = vpop.f32.mrb[0].mxu0
    %3305 = vmatprep.mubr.f32.mxu0 0.0
    %3306 = vmatmul.mubr.f32.gmra.mrb[0].mxu0 %v3216
    %v3307 = vpop.f32.mrb[0].mxu0
    %v3308 = vadd.f32 %v3178, %v3307
    %v3309 = vpop.f32.mrb[0].mxu0
    %3310 = vmatprep.mubr.f32.mxu0 0.0
    %3311 = vmatmul.mubr.f32.gmra.mrb[0].mxu0 %v3219
    %v3312 = vpop.f32.mrb[0].mxu0
    %v3313 = vadd.f32 %v3183, %v3312
    %v3314 = vpop.f32.mrb[0].mxu0
    %3315 = vmatprep.mubr.f32.mxu0 0.0
    %3316 = vmatmul.mubr.f32.gmra.mrb[0].mxu0 %v3222
    %v3317 = vpop.f32.mrb[0].mxu0
    %v3318 = vadd.f32 %v3188, %v3317
    %v3319 = vpop.f32.mrb[0].mxu0
    %3320 = vmatprep.mubr.f32.mxu0 0.0
    %3321 = vmatmul.mubr.f32.gmra.mrb[0].mxu0 %v3225
    %v3322 = vpop.f32.mrb[0].mxu0
    %v3323 = vadd.f32 %v3193, %v3322
    %v3324 = vpop.f32.mrb[0].mxu0
    %3325 = vmatprep.mubr.f32.mxu0 0.0
    %3326 = vmatmul.mubr.f32.gmra.mrb[0].mxu0 %v3228
    %v3327 = vpop.f32.mrb[0].mxu0
    %v3328 = vadd.f32 %v3198, %v3327
    %v3329 = vpop.f32.mrb[0].mxu0
    %3330 = vmatprep.mubr.f32.mxu0 0.0
    %3331 = vmatmul.mubr.f32.gmra.mrb[0].mxu0 %v3231
    %v3332 = vpop.f32.mrb[0].mxu0
    %v3333 = vadd.f32 %v3203, %v3332
    %v3334 = vpop.f32.mrb[0].mxu0
    %3335 = vmatprep.mubr.f32.mxu0 0.0
    %3336 = vmatmul.mubr.f32.gmra.mrb[0].mxu0 %v3234
    %v3337 = vpop.f32.mrb[0].mxu0
    %v3338 = vadd.f32 %v3208, %v3337
    %v3339 = vpop.f32.mrb[0].mxu0
    %3340 = vdwg.mxu0
    %v3341 = vld [vmem:[%s17] sm:$0x1]
    %v3343 = vlaneseq
    %v3344 = vshrl.u32 %v3343, 7
    %v3345 = vsub.s32 0, %v3344
    %v3346 = vrot.slane %v3341, %v3345
    %v3348 = vadd.f32 %v3303, %v3346
    %v3349 = vadd.f32 %v3308, %v3346
    %v3350 = vadd.f32 %v3313, %v3346
    %v3351 = vadd.f32 %v3318, %v3346
    %v3352 = vadd.f32 %v3323, %v3346
    %v3353 = vadd.f32 %v3328, %v3346
    %v3354 = vadd.f32 %v3333, %v3346
    %v3355 = vadd.f32 %v3338, %v3346
    %vm3356 = vcmask 40960
    %3357 = vst.msk [vmem:[%s18] sm:$0x1] %vm3356, %v3348
    %3358 = vst.msk [vmem:[%s18 + $0x1] sm:$0x1] %vm3356, %v3349
    %3359 = vst.msk [vmem:[%s18 + $0x2] sm:$0x1] %vm3356, %v3350
    %3360 = vst.msk [vmem:[%s18 + $0x3] sm:$0x1] %vm3356, %v3351
    %3361 = vst.msk [vmem:[%s18 + $0x4] sm:$0x1] %vm3356, %v3352
    %3362 = vst.msk [vmem:[%s18 + $0x5] sm:$0x1] %vm3356, %v3353
    %3363 = vst.msk [vmem:[%s18 + $0x6] sm:$0x1] %vm3356, %v3354
    %3364 = vst.msk [vmem:[%s18 + $0x7] sm:$0x1] %vm3356, %v3355
    %vm3365 = vcmask 41985
    %3366 = vst.msk [vmem:[%s18 + $0x7] sm:$0x2] %vm3365, %v3348
    %3367 = vst.msk [vmem:[%s18 + $0x8] sm:$0x2] %vm3365, %v3349
    %3368 = vst.msk [vmem:[%s18 + $0x9] sm:$0x2] %vm3365, %v3350
    %3369 = vst.msk [vmem:[%s18 + $0xa] sm:$0x2] %vm3365, %v3351
    %3370 = vst.msk [vmem:[%s18 + $0xb] sm:$0x2] %vm3365, %v3352
    %3371 = vst.msk [vmem:[%s18 + $0xc] sm:$0x2] %vm3365, %v3353
    %3372 = vst.msk [vmem:[%s18 + $0xd] sm:$0x2] %vm3365, %v3354
    %3373 = vst.msk [vmem:[%s18 + $0xe] sm:$0x2] %vm3365, %v3355
    // Predicated region
    $region78: #{drive_nn_forward.1} parent=1 // pred_check
      _
    $region79: #{drive_nn_forward.1} parent=1 // pred_check_branch
      %3375 = sbr.rel (0) target = $region81
    $region80: #{drive_nn_forward.1} parent=1 // pred_region
      _
    $region81: #{drive_nn_forward.1} parent=1 // pred_fallthru
      _
    // Predicated region
    $region82: #{drive_nn_forward.1} parent=1 // pred_check
      _
    $region83: #{drive_nn_forward.1} parent=1 // pred_check_branch
      %3377 = sbr.rel (0) target = $region85
    $region84: #{drive_nn_forward.1} parent=1 // pred_region
      _
    $region85: #{drive_nn_forward.1} parent=1 // pred_fallthru
      _
    %3378 = vsyncpa [#allocation7], 1

</llo_original>
